<compile_context>
chip_gen: v7x
topology: tpu7x:2x2x1
jax: 0.10.0
libtpu: 0.0.40
codegen_flags: <defaults>
</compile_context>

<pallas_src>
import math

import jax
import jax.numpy as jnp
from jax.experimental import pallas as pl
from jax.experimental.pallas import tpu as pltpu

BN_EPS = 1e-5


# --------------------------------------------------------------------------------------
# Fused per-block Pallas kernel
# --------------------------------------------------------------------------------------
def _make_fused_block_kernel(T, reduced, layers_meta, has_proj, n_params):
    """One kernel = leading 1x1 transition + all dense layers of a block
    (+ final BN/Linear projection if `has_proj`).  layers_meta is a static tuple of
    (n_in, n_out, kmax, dilation, has_downsample)."""

    def kernel(*refs):
        x_ref = refs[0]
        params = refs[1:1 + n_params]
        o_ref = refs[1 + n_params]
        slab_ref, pad_ref, col_ref = refs[2 + n_params:5 + n_params]

        pos = [0]

        def nxt():
            r = params[pos[0]]
            pos[0] += 1
            return r

        def conv_set(xin, cin, cout, kmax, dil):
            """Multi-branch dilated 'same' conv set as ONE im2col matmul, fused with the
            per-branch BN affine (+ conv bias) and PReLU."""
            w = nxt(); sc = nxt(); sh = nxt(); al = nxt()
            half = ((kmax - 1) * dil) // 2
            # in-kernel 'same' padding: zero the staging scratch, drop the input centred.
            pad_ref[...] = jnp.zeros_like(pad_ref)
            pad_ref[pl.ds(half, T), pl.ds(0, cin)] = xin
            # im2col: the kmax shifted slices side by side -> one wide MXU contraction.
            for j in range(kmax):                           # static unroll over taps
                col_ref[:, pl.ds(j * cin, cin)] = pad_ref[pl.ds(j * dil, T), pl.ds(0, cin)]
            xcol = col_ref[:, pl.ds(0, kmax * cin)].astype(jnp.bfloat16)
            y = jnp.dot(xcol, w[...], preferred_element_type=jnp.float32)
            y = y * sc[...] + sh[...]                       # fused conv-bias + BN affine
            return jnp.where(y > 0.0, y, al[...] * y)       # PReLU

        # ---- leading transition: 1x1 conv (no bias) -> BN -> PReLU -------------------
        x = x_ref[0]                                        # (T, Cx)
        tw = nxt(); tsc = nxt(); tsh = nxt(); tal = nxt()
        h = jnp.dot(x.astype(jnp.bfloat16), tw[...], preferred_element_type=jnp.float32)
        h = h * tsc[...] + tsh[...]
        slab_ref[:, pl.ds(0, reduced)] = jnp.where(h > 0.0, h, tal[...] * h)

        # ---- dense layers; dense concat == channel slices of the VMEM slab -----------
        for (n_in, n_out, kmax, dil, has_down) in layers_meta:
            x_l = slab_ref[:, pl.ds(0, n_in)]               # dense-concatenated input
            out0 = conv_set(x_l, n_in, n_out, kmax, dil)    # dropout0: eval no-op
            out1 = conv_set(out0, n_out, n_out, kmax, dil)  # dropout1: eval no-op
            if has_down:
                dw = nxt(); db = nxt()
                res = jnp.dot(x_l.astype(jnp.bfloat16), dw[...],
                              preferred_element_type=jnp.float32) + db[...]
            else:
                res = x_l
            a_fin = nxt()
            y = out1 + res
            slab_ref[:, pl.ds(n_in, n_out)] = jnp.where(y > 0.0, y, a_fin[...] * y)

        # ---- epilogue -----------------------------------------------------------------
        if has_proj:   # final BatchNorm folded into the hidden_proj Linear weights
            pw = nxt(); pb = nxt()
            out = jnp.dot(slab_ref[...].astype(jnp.bfloat16), pw[...],
                          preferred_element_type=jnp.float32) + pb[...]
            o_ref[...] = out[None].astype(o_ref.dtype)
        else:          # emit the whole dense slab in one lane-dense store
            o_ref[...] = slab_ref[...][None].astype(o_ref.dtype)

    return kernel


def _flatten_call_params(call):
    """Canonical flat ordering consumed by the kernel's nxt()."""
    flat = []
    t = call["trans"]
    flat += [t["w"], t["scale"], t["shift"], t["alpha"]]
    for layer in call["layers"]:
        p = layer["params"]
        for cs in (p["cbcr0"], p["cbcr1"]):
            flat += [cs["w"], cs["scale"], cs["shift"], cs["alpha"]]
        if p["downsample"] is not None:
            flat += [p["downsample"]["w"], p["downsample"]["b"]]
        flat += [p["alpha_final"]]
    if call["proj"] is not None:
        flat += [call["proj"]["w"], call["proj"]["b"]]
    return flat


def _fused_block_forward(x, call):
    B, T, Cx = x.shape
    assert Cx == call["trans_in"]
    flat = _flatten_call_params(call)
    layers_meta = tuple(
        (l["n_in"], l["n_out"], l["kmax"], l["dilation"],
         l["params"]["downsample"] is not None)
        for l in call["layers"])
    has_proj = call["proj"] is not None
    slab_w = call["slab_width"]
    out_w = call["proj"]["w"].shape[1] if has_proj else slab_w

    pad_max = max((k - 1) * d for (_, _, k, d, _) in layers_meta)
    c_pad = max(max(m[0] for m in layers_meta), max(m[1] for m in layers_meta))
    col_w = max(m[2] * max(m[0], m[1]) for m in layers_meta)

    kernel = _make_fused_block_kernel(T, call["reduced"], layers_meta, has_proj, len(flat))

    in_specs = [pl.BlockSpec((1, T, Cx), lambda b: (b, 0, 0))]
    for p in flat:  # small weights: full-array blocks, constant index map across the grid
        in_specs.append(pl.BlockSpec(p.shape, lambda b, nd=p.ndim: (0,) * nd))

    return pl.pallas_call(
        kernel,
        out_shape=jax.ShapeDtypeStruct((B, T, out_w), x.dtype),
        grid=(B,),
        in_specs=in_specs,
        out_specs=pl.BlockSpec((1, T, out_w), lambda b: (b, 0, 0)),
        scratch_shapes=[
            pltpu.VMEM((T, slab_w), jnp.float32),            # dense-concat slab
            pltpu.VMEM((T + pad_max, c_pad), jnp.float32),   # in-kernel 'same' padding
            pltpu.VMEM((T, col_w), jnp.float32),             # im2col staging
        ],
        compiler_params=pltpu.CompilerParams(dimension_semantics=("parallel",)),
    )(x, *flat)


# --------------------------------------------------------------------------------------
# Deterministic parameter initialization (PyTorch-default-like shapes/scales),
# pre-packed into the fused/unified layout the kernel consumes.
# --------------------------------------------------------------------------------------
def _bn_affine(c):
    gamma = jnp.ones((c,), jnp.float32)
    beta = jnp.zeros((c,), jnp.float32)
    mean = jnp.zeros((c,), jnp.float32)
    var = jnp.ones((c,), jnp.float32)
    scale = gamma / jnp.sqrt(var + BN_EPS)
    shift = beta - mean * scale
    return scale, shift


def _conv_set_params(key, kernel_size_set, cin, n_out):
    """One multi-branch conv set -> unified im2col weight (Kmax*cin, n_out) + BN/PReLU affine.
    Smaller-K branch weights are zero-padded to Kmax taps (centred)."""
    nk = len(kernel_size_set)
    assert n_out % nk == 0
    nb = n_out // nk
    Kmax = max(kernel_size_set)
    keys = jax.random.split(key, nk)
    w_uni = jnp.zeros((Kmax, cin, n_out), jnp.float32)
    scales, shifts, alphas = [], [], []
    for bi, k in enumerate(kernel_size_set):
        assert (Kmax - k) % 2 == 0, "centred embedding needs Kmax-k even"
        kw, kb = jax.random.split(keys[bi])
        bound = 1.0 / math.sqrt(cin * k)
        w = jax.random.uniform(kw, (k, cin, nb), jnp.float32, -bound, bound)
        b = jax.random.uniform(kb, (nb,), jnp.float32, -bound, bound)
        j0 = (Kmax - k) // 2
        w_uni = w_uni.at[j0:j0 + k, :, bi * nb:(bi + 1) * nb].set(w)
        sc, sh = _bn_affine(nb)
        scales.append(sc)
        shifts.append(sh + sc * b)           # fold conv bias through the BN affine
        alphas.append(0.25 * jnp.ones((nb,), jnp.float32))   # PReLU default
    return dict(
        w=w_uni.reshape(Kmax * cin, n_out).astype(jnp.bfloat16),
        scale=jnp.concatenate(scales).reshape(1, n_out),
        shift=jnp.concatenate(shifts).reshape(1, n_out),
        alpha=jnp.concatenate(alphas).reshape(1, n_out),
    )


def _transition_params(key, cin, cout):
    bound = 1.0 / math.sqrt(cin)
    w = jax.random.uniform(key, (cin, cout), jnp.float32, -bound, bound)
    sc, sh = _bn_affine(cout)
    return dict(w=w.astype(jnp.bfloat16), scale=sc.reshape(1, cout),
                shift=sh.reshape(1, cout),
                alpha=0.25 * jnp.ones((1, cout), jnp.float32))


def _downsample_params(key, cin, cout):
    kw, kb = jax.random.split(key)
    bound = 1.0 / math.sqrt(cin)
    w = jax.random.uniform(kw, (cin, cout), jnp.float32, -bound, bound)
    b = jax.random.uniform(kb, (cout,), jnp.float32, -bound, bound)
    return dict(w=w.astype(jnp.bfloat16), b=b.reshape(1, cout))


def _dense_layer_params(key, n_in, n_out, kernel_size_set):
    k0, k1, kd = jax.random.split(key, 3)
    return dict(
        cbcr0=_conv_set_params(k0, kernel_size_set, n_in, n_out),
        cbcr1=_conv_set_params(k1, kernel_size_set, n_out, n_out),
        downsample=_downsample_params(kd, n_in, n_out) if n_in != n_out else None,
        alpha_final=0.25 * jnp.ones((1, n_out), jnp.float32),
    )


def init_dense_tcn(key, block_config, growth_rate_set, input_size, reduced_size,
                   kernel_size_set, dilation_size_set):
    Kmax = max(kernel_size_set)
    calls = []
    prev_width = input_size
    num_features = reduced_size
    for i, num_layers in enumerate(block_config):
        key, kt = jax.random.split(key)
        trans = _transition_params(kt, prev_width, reduced_size)   # transition_i (folded)
        layers = []
        for li in range(num_layers):
            key, kl = jax.random.split(key)
            n_in = reduced_size + li * growth_rate_set[i]
            dil = dilation_size_set[li % len(dilation_size_set)]
            layers.append(dict(
                params=_dense_layer_params(kl, n_in, growth_rate_set[i], kernel_size_set),
                n_in=n_in, n_out=growth_rate_set[i], dilation=dil, kmax=Kmax))
        num_features = reduced_size + num_layers * growth_rate_set[i]
        calls.append(dict(trans=trans, trans_in=prev_width, reduced=reduced_size,
                          layers=layers, slab_width=num_features, proj=None))
        prev_width = num_features

    # final BatchNorm folded into the hidden_proj Linear, fused into the last block call
    scale, shift = _bn_affine(num_features)
    key, kp = jax.random.split(key)
    kw1, kb1 = jax.random.split(kp)
    bound = 1.0 / math.sqrt(num_features)
    # stored as (num_features, input_size) == W.T of the PyTorch nn.Linear weight
    W = jax.random.uniform(kw1, (num_features, input_size), jnp.float32, -bound, bound)
    b = jax.random.uniform(kb1, (input_size,), jnp.float32, -bound, bound)
    W_eff = W * scale[:, None]
    b_eff = (b + shift @ W).reshape(1, input_size)
    calls[-1]["proj"] = dict(w=W_eff.astype(jnp.bfloat16), b=b_eff)

    return dict(calls=calls, num_features=num_features)


# --------------------------------------------------------------------------------------
# Forward pass: one fused pallas_call per dense block (2 calls total for this config)
# --------------------------------------------------------------------------------------
def dense_tcn_forward(x, lengths, B, params):
    """x: (B, T, input_size) -> (B, T, input_size).  lengths/B unused (as in PyTorch)."""
    del lengths, B
    h = x
    for call in params["calls"]:
        h = _fused_block_forward(h, call)
    return h


# --------------------------------------------------------------------------------------
if __name__ == "__main__":
    # small config consistent with the module
    block_config = (2, 2)
    growth_rate_set = (8, 8)
    input_size = 32
    reduced_size = 16
    num_tokens = 10            # unused in forward
    kernel_size_set = (3, 5)
    dilation_size_set = (1, 2)
    dropout = 0.2              # eval-mode -> identity
    relu_type = "prelu"

    Bsz, T = 2, 16

    root = jax.random.PRNGKey(0)
    kx, kp = jax.random.split(root)
    x = jax.random.normal(kx, (Bsz, T, input_size), jnp.float32)
    lengths = jnp.full((Bsz,), T, jnp.int32)

    params = init_dense_tcn(kp, block_config, growth_rate_set, input_size,
                            reduced_size, kernel_size_set, dilation_size_set)
    assert params["num_features"] == reduced_size + block_config[-1] * growth_rate_set[-1]

    fwd = jax.jit(lambda xx: dense_tcn_forward(xx, lengths, Bsz, params))
    out = jax.block_until_ready(fwd(x))

    assert out.shape == (Bsz, T, input_size), out.shape
    assert bool(jnp.all(jnp.isfinite(out)))
    print("KERNEL_OK")
</pallas_src>

<mosaic_0001>
module attributes {stable_mosaic.version = 11 : i64} {
  func.func @kernel(%arg0: i32, %arg1: memref<1x16x32xf32, #tpu.memory_space<vmem>>, %arg2: memref<32x16xbf16, #tpu.memory_space<vmem>>, %arg3: memref<1x16xf32, #tpu.memory_space<vmem>>, %arg4: memref<1x16xf32, #tpu.memory_space<vmem>>, %arg5: memref<1x16xf32, #tpu.memory_space<vmem>>, %arg6: memref<80x8xbf16, #tpu.memory_space<vmem>>, %arg7: memref<1x8xf32, #tpu.memory_space<vmem>>, %arg8: memref<1x8xf32, #tpu.memory_space<vmem>>, %arg9: memref<1x8xf32, #tpu.memory_space<vmem>>, %arg10: memref<40x8xbf16, #tpu.memory_space<vmem>>, %arg11: memref<1x8xf32, #tpu.memory_space<vmem>>, %arg12: memref<1x8xf32, #tpu.memory_space<vmem>>, %arg13: memref<1x8xf32, #tpu.memory_space<vmem>>, %arg14: memref<16x8xbf16, #tpu.memory_space<vmem>>, %arg15: memref<1x8xf32, #tpu.memory_space<vmem>>, %arg16: memref<1x8xf32, #tpu.memory_space<vmem>>, %arg17: memref<120x8xbf16, #tpu.memory_space<vmem>>, %arg18: memref<1x8xf32, #tpu.memory_space<vmem>>, %arg19: memref<1x8xf32, #tpu.memory_space<vmem>>, %arg20: memref<1x8xf32, #tpu.memory_space<vmem>>, %arg21: memref<40x8xbf16, #tpu.memory_space<vmem>>, %arg22: memref<1x8xf32, #tpu.memory_space<vmem>>, %arg23: memref<1x8xf32, #tpu.memory_space<vmem>>, %arg24: memref<1x8xf32, #tpu.memory_space<vmem>>, %arg25: memref<24x8xbf16, #tpu.memory_space<vmem>>, %arg26: memref<1x8xf32, #tpu.memory_space<vmem>>, %arg27: memref<1x8xf32, #tpu.memory_space<vmem>>, %arg28: memref<32x32xbf16, #tpu.memory_space<vmem>>, %arg29: memref<1x32xf32, #tpu.memory_space<vmem>>, %arg30: memref<1x16x32xf32, #tpu.memory_space<vmem>>, %arg31: memref<16x32xf32, #tpu.memory_space<vmem>>, %arg32: memref<24x24xf32, #tpu.memory_space<vmem>>, %arg33: memref<16x120xf32, #tpu.memory_space<vmem>>) attributes {dimension_semantics = [#tpu.dimension_semantics<parallel>], iteration_bounds = array<i64: 2>, scalar_prefetch = 0 : i64, scratch_operands = 3 : i64, tpu.core_type = #tpu.core_type<tc>, window_params = [{transform_indices = @transform_0, window_bounds = array<i64: 1, 16, 32>}, {pipeline_mode = #tpu.pipeline_mode<synchronous>, transform_indices = @transform_1, window_bounds = array<i64: 32, 16>}, {pipeline_mode = #tpu.pipeline_mode<synchronous>, transform_indices = @transform_2, window_bounds = array<i64: 1, 16>}, {pipeline_mode = #tpu.pipeline_mode<synchronous>, transform_indices = @transform_3, window_bounds = array<i64: 1, 16>}, {pipeline_mode = #tpu.pipeline_mode<synchronous>, transform_indices = @transform_4, window_bounds = array<i64: 1, 16>}, {pipeline_mode = #tpu.pipeline_mode<synchronous>, transform_indices = @transform_5, window_bounds = array<i64: 80, 8>}, {pipeline_mode = #tpu.pipeline_mode<synchronous>, transform_indices = @transform_6, window_bounds = array<i64: 1, 8>}, {pipeline_mode = #tpu.pipeline_mode<synchronous>, transform_indices = @transform_7, window_bounds = array<i64: 1, 8>}, {pipeline_mode = #tpu.pipeline_mode<synchronous>, transform_indices = @transform_8, window_bounds = array<i64: 1, 8>}, {pipeline_mode = #tpu.pipeline_mode<synchronous>, transform_indices = @transform_9, window_bounds = array<i64: 40, 8>}, {pipeline_mode = #tpu.pipeline_mode<synchronous>, transform_indices = @transform_10, window_bounds = array<i64: 1, 8>}, {pipeline_mode = #tpu.pipeline_mode<synchronous>, transform_indices = @transform_11, window_bounds = array<i64: 1, 8>}, {pipeline_mode = #tpu.pipeline_mode<synchronous>, transform_indices = @transform_12, window_bounds = array<i64: 1, 8>}, {pipeline_mode = #tpu.pipeline_mode<synchronous>, transform_indices = @transform_13, window_bounds = array<i64: 16, 8>}, {pipeline_mode = #tpu.pipeline_mode<synchronous>, transform_indices = @transform_14, window_bounds = array<i64: 1, 8>}, {pipeline_mode = #tpu.pipeline_mode<synchronous>, transform_indices = @transform_15, window_bounds = array<i64: 1, 8>}, {pipeline_mode = #tpu.pipeline_mode<synchronous>, transform_indices = @transform_16, window_bounds = array<i64: 120, 8>}, {pipeline_mode = #tpu.pipeline_mode<synchronous>, transform_indices = @transform_17, window_bounds = array<i64: 1, 8>}, {pipeline_mode = #tpu.pipeline_mode<synchronous>, transform_indices = @transform_18, window_bounds = array<i64: 1, 8>}, {pipeline_mode = #tpu.pipeline_mode<synchronous>, transform_indices = @transform_19, window_bounds = array<i64: 1, 8>}, {pipeline_mode = #tpu.pipeline_mode<synchronous>, transform_indices = @transform_20, window_bounds = array<i64: 40, 8>}, {pipeline_mode = #tpu.pipeline_mode<synchronous>, transform_indices = @transform_21, window_bounds = array<i64: 1, 8>}, {pipeline_mode = #tpu.pipeline_mode<synchronous>, transform_indices = @transform_22, window_bounds = array<i64: 1, 8>}, {pipeline_mode = #tpu.pipeline_mode<synchronous>, transform_indices = @transform_23, window_bounds = array<i64: 1, 8>}, {pipeline_mode = #tpu.pipeline_mode<synchronous>, transform_indices = @transform_24, window_bounds = array<i64: 24, 8>}, {pipeline_mode = #tpu.pipeline_mode<synchronous>, transform_indices = @transform_25, window_bounds = array<i64: 1, 8>}, {pipeline_mode = #tpu.pipeline_mode<synchronous>, transform_indices = @transform_26, window_bounds = array<i64: 1, 8>}, {pipeline_mode = #tpu.pipeline_mode<synchronous>, transform_indices = @transform_27, window_bounds = array<i64: 32, 32>}, {pipeline_mode = #tpu.pipeline_mode<synchronous>, transform_indices = @transform_28, window_bounds = array<i64: 1, 32>}, {transform_indices = @transform_29, window_bounds = array<i64: 1, 16, 32>}]} {
    %c0 = arith.constant 0 : index
    %c0_0 = arith.constant 0 : index
    %c0_1 = arith.constant 0 : index
    %0 = vector.load %arg1[%c0, %c0_0, %c0_1] : memref<1x16x32xf32, #tpu.memory_space<vmem>>, vector<1x16x32xf32>
    %1 = vector.shape_cast %0 : vector<1x16x32xf32> to vector<16x32xf32>
    %2 = arith.truncf %1 : vector<16x32xf32> to vector<16x32xbf16>
    %c0_2 = arith.constant 0 : index
    %c0_3 = arith.constant 0 : index
    %3 = vector.load %arg2[%c0_2, %c0_3] : memref<32x16xbf16, #tpu.memory_space<vmem>>, vector<32x16xbf16>
    %cst = arith.constant dense<0.000000e+00> : vector<16x16xf32>
    %4 = tpu.matmul %2, %3, %cst {dimension_numbers = #tpu.dot_dimension_numbers<[1], [0], [0], [1], [0, 0, 1, 1], [], []>} : vector<16x32xbf16>, vector<32x16xbf16>, vector<16x16xf32> -> vector<16x16xf32>
    %c0_4 = arith.constant 0 : index
    %c0_5 = arith.constant 0 : index
    %5 = vector.load %arg3[%c0_4, %c0_5] : memref<1x16xf32, #tpu.memory_space<vmem>>, vector<1x16xf32>
    %6 = vector.broadcast %5 : vector<1x16xf32> to vector<16x16xf32>
    %7 = arith.mulf %4, %6 : vector<16x16xf32>
    %c0_6 = arith.constant 0 : index
    %c0_7 = arith.constant 0 : index
    %8 = vector.load %arg4[%c0_6, %c0_7] : memref<1x16xf32, #tpu.memory_space<vmem>>, vector<1x16xf32>
    %9 = vector.broadcast %8 : vector<1x16xf32> to vector<16x16xf32>
    %10 = arith.addf %7, %9 : vector<16x16xf32>
    %cst_8 = arith.constant 0.000000e+00 : f32
    %11 = vector.broadcast %cst_8 : f32 to vector<16x16xf32>
    %12 = arith.cmpf ogt, %10, %11 : vector<16x16xf32>
    %c0_9 = arith.constant 0 : index
    %c0_10 = arith.constant 0 : index
    %13 = vector.load %arg5[%c0_9, %c0_10] : memref<1x16xf32, #tpu.memory_space<vmem>>, vector<1x16xf32>
    %14 = vector.broadcast %13 : vector<1x16xf32> to vector<16x16xf32>
    %15 = arith.mulf %14, %10 : vector<16x16xf32>
    %16 = arith.select %12, %10, %15 : vector<16x16xi1>, vector<16x16xf32>
    %c0_11 = arith.constant 0 : index
    %c0_12 = arith.constant 0 : index
    %17 = vector.load %arg31[%c0_11, %c0_12] : memref<16x32xf32, #tpu.memory_space<vmem>>, vector<16x16xf32>
    tpu.vector_store %arg31[%c0_11, %c0_12], %16 {strides = array<i32>} : memref<16x32xf32, #tpu.memory_space<vmem>>, vector<16x16xf32>,
    %c0_13 = arith.constant 0 : index
    %c0_14 = arith.constant 0 : index
    %18 = vector.load %arg31[%c0_13, %c0_14] : memref<16x32xf32, #tpu.memory_space<vmem>>, vector<16x16xf32>
    %cst_15 = arith.constant 0.000000e+00 : f32
    %19 = vector.broadcast %cst_15 : f32 to vector<24x24xf32>
    %c0_16 = arith.constant 0 : index
    %c0_17 = arith.constant 0 : index
    %20 = vector.load %arg32[%c0_16, %c0_17] : memref<24x24xf32, #tpu.memory_space<vmem>>, vector<24x24xf32>
    tpu.vector_store %arg32[%c0_16, %c0_17], %19 {strides = array<i32>} : memref<24x24xf32, #tpu.memory_space<vmem>>, vector<24x24xf32>,
    %c2 = arith.constant 2 : index
    %c0_18 = arith.constant 0 : index
    %21 = vector.load %arg32[%c2, %c0_18] : memref<24x24xf32, #tpu.memory_space<vmem>>, vector<16x16xf32>
    tpu.vector_store %arg32[%c2, %c0_18], %18 {strides = array<i32>} : memref<24x24xf32, #tpu.memory_space<vmem>>, vector<16x16xf32>,
    %c0_19 = arith.constant 0 : index
    %c0_20 = arith.constant 0 : index
    %22 = vector.load %arg32[%c0_19, %c0_20] : memref<24x24xf32, #tpu.memory_space<vmem>>, vector<16x16xf32>
    %c0_21 = arith.constant 0 : index
    %c0_22 = arith.constant 0 : index
    %23 = vector.load %arg33[%c0_21, %c0_22] : memref<16x120xf32, #tpu.memory_space<vmem>>, vector<16x16xf32>
    tpu.vector_store %arg33[%c0_21, %c0_22], %22 {strides = array<i32>} : memref<16x120xf32, #tpu.memory_space<vmem>>, vector<16x16xf32>,
    %c1 = arith.constant 1 : index
    %c0_23 = arith.constant 0 : index
    %24 = vector.load %arg32[%c1, %c0_23] : memref<24x24xf32, #tpu.memory_space<vmem>>, vector<16x16xf32>
    %c0_24 = arith.constant 0 : index
    %c16 = arith.constant 16 : index
    %25 = vector.load %arg33[%c0_24, %c16] : memref<16x120xf32, #tpu.memory_space<vmem>>, vector<16x16xf32>
    tpu.vector_store %arg33[%c0_24, %c16], %24 {strides = array<i32>} : memref<16x120xf32, #tpu.memory_space<vmem>>, vector<16x16xf32>,
    %c2_25 = arith.constant 2 : index
    %c0_26 = arith.constant 0 : index
    %26 = vector.load %arg32[%c2_25, %c0_26] : memref<24x24xf32, #tpu.memory_space<vmem>>, vector<16x16xf32>
    %c0_27 = arith.constant 0 : index
    %c32 = arith.constant 32 : index
    %27 = vector.load %arg33[%c0_27, %c32] : memref<16x120xf32, #tpu.memory_space<vmem>>, vector<16x16xf32>
    tpu.vector_store %arg33[%c0_27, %c32], %26 {strides = array<i32>} : memref<16x120xf32, #tpu.memory_space<vmem>>, vector<16x16xf32>,
    %c3 = arith.constant 3 : index
    %c0_28 = arith.constant 0 : index
    %28 = vector.load %arg32[%c3, %c0_28] : memref<24x24xf32, #tpu.memory_space<vmem>>, vector<16x16xf32>
    %c0_29 = arith.constant 0 : index
    %c48 = arith.constant 48 : index
    %29 = vector.load %arg33[%c0_29, %c48] : memref<16x120xf32, #tpu.memory_space<vmem>>, vector<16x16xf32>
    tpu.vector_store %arg33[%c0_29, %c48], %28 {strides = array<i32>} : memref<16x120xf32, #tpu.memory_space<vmem>>, vector<16x16xf32>,
    %c4 = arith.constant 4 : index
    %c0_30 = arith.constant 0 : index
    %30 = vector.load %arg32[%c4, %c0_30] : memref<24x24xf32, #tpu.memory_space<vmem>>, vector<16x16xf32>
    %c0_31 = arith.constant 0 : index
    %c64 = arith.constant 64 : index
    %31 = vector.load %arg33[%c0_31, %c64] : memref<16x120xf32, #tpu.memory_space<vmem>>, vector<16x16xf32>
    tpu.vector_store %arg33[%c0_31, %c64], %30 {strides = array<i32>} : memref<16x120xf32, #tpu.memory_space<vmem>>, vector<16x16xf32>,
    %c0_32 = arith.constant 0 : index
    %c0_33 = arith.constant 0 : index
    %32 = vector.load %arg33[%c0_32, %c0_33] : memref<16x120xf32, #tpu.memory_space<vmem>>, vector<16x80xf32>
    %33 = arith.truncf %32 : vector<16x80xf32> to vector<16x80xbf16>
    %c0_34 = arith.constant 0 : index
    %c0_35 = arith.constant 0 : index
    %34 = vector.load %arg6[%c0_34, %c0_35] : memref<80x8xbf16, #tpu.memory_space<vmem>>, vector<80x8xbf16>
    %cst_36 = arith.constant dense<0.000000e+00> : vector<16x8xf32>
    %35 = tpu.matmul %33, %34, %cst_36 {dimension_numbers = #tpu.dot_dimension_numbers<[1], [0], [0], [1], [0, 0, 1, 1], [], []>} : vector<16x80xbf16>, vector<80x8xbf16>, vector<16x8xf32> -> vector<16x8xf32>
    %c0_37 = arith.constant 0 : index
    %c0_38 = arith.constant 0 : index
    %36 = vector.load %arg7[%c0_37, %c0_38] : memref<1x8xf32, #tpu.memory_space<vmem>>, vector<1x8xf32>
    %37 = vector.broadcast %36 : vector<1x8xf32> to vector<16x8xf32>
    %38 = arith.mulf %35, %37 : vector<16x8xf32>
    %c0_39 = arith.constant 0 : index
    %c0_40 = arith.constant 0 : index
    %39 = vector.load %arg8[%c0_39, %c0_40] : memref<1x8xf32, #tpu.memory_space<vmem>>, vector<1x8xf32>
    %40 = vector.broadcast %39 : vector<1x8xf32> to vector<16x8xf32>
    %41 = arith.addf %38, %40 : vector<16x8xf32>
    %cst_41 = arith.constant 0.000000e+00 : f32
    %42 = vector.broadcast %cst_41 : f32 to vector<16x8xf32>
    %43 = arith.cmpf ogt, %41, %42 : vector<16x8xf32>
    %c0_42 = arith.constant 0 : index
    %c0_43 = arith.constant 0 : index
    %44 = vector.load %arg9[%c0_42, %c0_43] : memref<1x8xf32, #tpu.memory_space<vmem>>, vector<1x8xf32>
    %45 = vector.broadcast %44 : vector<1x8xf32> to vector<16x8xf32>
    %46 = arith.mulf %45, %41 : vector<16x8xf32>
    %47 = arith.select %43, %41, %46 : vector<16x8xi1>, vector<16x8xf32>
    %cst_44 = arith.constant 0.000000e+00 : f32
    %48 = vector.broadcast %cst_44 : f32 to vector<24x24xf32>
    %c0_45 = arith.constant 0 : index
    %c0_46 = arith.constant 0 : index
    %49 = vector.load %arg32[%c0_45, %c0_46] : memref<24x24xf32, #tpu.memory_space<vmem>>, vector<24x24xf32>
    tpu.vector_store %arg32[%c0_45, %c0_46], %48 {strides = array<i32>} : memref<24x24xf32, #tpu.memory_space<vmem>>, vector<24x24xf32>,
    %c2_47 = arith.constant 2 : index
    %c0_48 = arith.constant 0 : index
    %50 = vector.load %arg32[%c2_47, %c0_48] : memref<24x24xf32, #tpu.memory_space<vmem>>, vector<16x8xf32>
    tpu.vector_store %arg32[%c2_47, %c0_48], %47 {strides = array<i32>} : memref<24x24xf32, #tpu.memory_space<vmem>>, vector<16x8xf32>,
    %c0_49 = arith.constant 0 : index
    %c0_50 = arith.constant 0 : index
    %51 = vector.load %arg32[%c0_49, %c0_50] : memref<24x24xf32, #tpu.memory_space<vmem>>, vector<16x8xf32>
    %c0_51 = arith.constant 0 : index
    %c0_52 = arith.constant 0 : index
    %52 = vector.load %arg33[%c0_51, %c0_52] : memref<16x120xf32, #tpu.memory_space<vmem>>, vector<16x8xf32>
    tpu.vector_store %arg33[%c0_51, %c0_52], %51 {strides = array<i32>} : memref<16x120xf32, #tpu.memory_space<vmem>>, vector<16x8xf32>,
    %c1_53 = arith.constant 1 : index
    %c0_54 = arith.constant 0 : index
    %53 = vector.load %arg32[%c1_53, %c0_54] : memref<24x24xf32, #tpu.memory_space<vmem>>, vector<16x8xf32>
    %c0_55 = arith.constant 0 : index
    %c8 = arith.constant 8 : index
    %54 = vector.load %arg33[%c0_55, %c8] : memref<16x120xf32, #tpu.memory_space<vmem>>, vector<16x8xf32>
    tpu.vector_store %arg33[%c0_55, %c8], %53 {strides = array<i32>} : memref<16x120xf32, #tpu.memory_space<vmem>>, vector<16x8xf32>,
    %c2_56 = arith.constant 2 : index
    %c0_57 = arith.constant 0 : index
    %55 = vector.load %arg32[%c2_56, %c0_57] : memref<24x24xf32, #tpu.memory_space<vmem>>, vector<16x8xf32>
    %c0_58 = arith.constant 0 : index
    %c16_59 = arith.constant 16 : index
    %56 = vector.load %arg33[%c0_58, %c16_59] : memref<16x120xf32, #tpu.memory_space<vmem>>, vector<16x8xf32>
    tpu.vector_store %arg33[%c0_58, %c16_59], %55 {strides = array<i32>} : memref<16x120xf32, #tpu.memory_space<vmem>>, vector<16x8xf32>,
    %c3_60 = arith.constant 3 : index
    %c0_61 = arith.constant 0 : index
    %57 = vector.load %arg32[%c3_60, %c0_61] : memref<24x24xf32, #tpu.memory_space<vmem>>, vector<16x8xf32>
    %c0_62 = arith.constant 0 : index
    %c24 = arith.constant 24 : index
    %58 = vector.load %arg33[%c0_62, %c24] : memref<16x120xf32, #tpu.memory_space<vmem>>, vector<16x8xf32>
    tpu.vector_store %arg33[%c0_62, %c24], %57 {strides = array<i32>} : memref<16x120xf32, #tpu.memory_space<vmem>>, vector<16x8xf32>,
    %c4_63 = arith.constant 4 : index
    %c0_64 = arith.constant 0 : index
    %59 = vector.load %arg32[%c4_63, %c0_64] : memref<24x24xf32, #tpu.memory_space<vmem>>, vector<16x8xf32>
    %c0_65 = arith.constant 0 : index
    %c32_66 = arith.constant 32 : index
    %60 = vector.load %arg33[%c0_65, %c32_66] : memref<16x120xf32, #tpu.memory_space<vmem>>, vector<16x8xf32>
    tpu.vector_store %arg33[%c0_65, %c32_66], %59 {strides = array<i32>} : memref<16x120xf32, #tpu.memory_space<vmem>>, vector<16x8xf32>,
    %c0_67 = arith.constant 0 : index
    %c0_68 = arith.constant 0 : index
    %61 = vector.load %arg33[%c0_67, %c0_68] : memref<16x120xf32, #tpu.memory_space<vmem>>, vector<16x40xf32>
    %62 = arith.truncf %61 : vector<16x40xf32> to vector<16x40xbf16>
    %c0_69 = arith.constant 0 : index
    %c0_70 = arith.constant 0 : index
    %63 = vector.load %arg10[%c0_69, %c0_70] : memref<40x8xbf16, #tpu.memory_space<vmem>>, vector<40x8xbf16>
    %cst_71 = arith.constant dense<0.000000e+00> : vector<16x8xf32>
    %64 = tpu.matmul %62, %63, %cst_71 {dimension_numbers = #tpu.dot_dimension_numbers<[1], [0], [0], [1], [0, 0, 1, 1], [], []>} : vector<16x40xbf16>, vector<40x8xbf16>, vector<16x8xf32> -> vector<16x8xf32>
    %c0_72 = arith.constant 0 : index
    %c0_73 = arith.constant 0 : index
    %65 = vector.load %arg11[%c0_72, %c0_73] : memref<1x8xf32, #tpu.memory_space<vmem>>, vector<1x8xf32>
    %66 = vector.broadcast %65 : vector<1x8xf32> to vector<16x8xf32>
    %67 = arith.mulf %64, %66 : vector<16x8xf32>
    %c0_74 = arith.constant 0 : index
    %c0_75 = arith.constant 0 : index
    %68 = vector.load %arg12[%c0_74, %c0_75] : memref<1x8xf32, #tpu.memory_space<vmem>>, vector<1x8xf32>
    %69 = vector.broadcast %68 : vector<1x8xf32> to vector<16x8xf32>
    %70 = arith.addf %67, %69 : vector<16x8xf32>
    %cst_76 = arith.constant 0.000000e+00 : f32
    %71 = vector.broadcast %cst_76 : f32 to vector<16x8xf32>
    %72 = arith.cmpf ogt, %70, %71 : vector<16x8xf32>
    %c0_77 = arith.constant 0 : index
    %c0_78 = arith.constant 0 : index
    %73 = vector.load %arg13[%c0_77, %c0_78] : memref<1x8xf32, #tpu.memory_space<vmem>>, vector<1x8xf32>
    %74 = vector.broadcast %73 : vector<1x8xf32> to vector<16x8xf32>
    %75 = arith.mulf %74, %70 : vector<16x8xf32>
    %76 = arith.select %72, %70, %75 : vector<16x8xi1>, vector<16x8xf32>
    %77 = arith.truncf %18 : vector<16x16xf32> to vector<16x16xbf16>
    %c0_79 = arith.constant 0 : index
    %c0_80 = arith.constant 0 : index
    %78 = vector.load %arg14[%c0_79, %c0_80] : memref<16x8xbf16, #tpu.memory_space<vmem>>, vector<16x8xbf16>
    %cst_81 = arith.constant dense<0.000000e+00> : vector<16x8xf32>
    %79 = tpu.matmul %77, %78, %cst_81 {dimension_numbers = #tpu.dot_dimension_numbers<[1], [0], [0], [1], [0, 0, 1, 1], [], []>} : vector<16x16xbf16>, vector<16x8xbf16>, vector<16x8xf32> -> vector<16x8xf32>
    %c0_82 = arith.constant 0 : index
    %c0_83 = arith.constant 0 : index
    %80 = vector.load %arg15[%c0_82, %c0_83] : memref<1x8xf32, #tpu.memory_space<vmem>>, vector<1x8xf32>
    %81 = vector.broadcast %80 : vector<1x8xf32> to vector<16x8xf32>
    %82 = arith.addf %79, %81 : vector<16x8xf32>
    %83 = arith.addf %76, %82 : vector<16x8xf32>
    %cst_84 = arith.constant 0.000000e+00 : f32
    %84 = vector.broadcast %cst_84 : f32 to vector<16x8xf32>
    %85 = arith.cmpf ogt, %83, %84 : vector<16x8xf32>
    %c0_85 = arith.constant 0 : index
    %c0_86 = arith.constant 0 : index
    %86 = vector.load %arg16[%c0_85, %c0_86] : memref<1x8xf32, #tpu.memory_space<vmem>>, vector<1x8xf32>
    %87 = vector.broadcast %86 : vector<1x8xf32> to vector<16x8xf32>
    %88 = arith.mulf %87, %83 : vector<16x8xf32>
    %89 = arith.select %85, %83, %88 : vector<16x8xi1>, vector<16x8xf32>
    %c0_87 = arith.constant 0 : index
    %c16_88 = arith.constant 16 : index
    %90 = vector.load %arg31[%c0_87, %c16_88] : memref<16x32xf32, #tpu.memory_space<vmem>>, vector<16x8xf32>
    tpu.vector_store %arg31[%c0_87, %c16_88], %89 {strides = array<i32>} : memref<16x32xf32, #tpu.memory_space<vmem>>, vector<16x8xf32>,
    %c0_89 = arith.constant 0 : index
    %c0_90 = arith.constant 0 : index
    %91 = vector.load %arg31[%c0_89, %c0_90] : memref<16x32xf32, #tpu.memory_space<vmem>>, vector<16x24xf32>
    %cst_91 = arith.constant 0.000000e+00 : f32
    %92 = vector.broadcast %cst_91 : f32 to vector<24x24xf32>
    %c0_92 = arith.constant 0 : index
    %c0_93 = arith.constant 0 : index
    %93 = vector.load %arg32[%c0_92, %c0_93] : memref<24x24xf32, #tpu.memory_space<vmem>>, vector<24x24xf32>
    tpu.vector_store %arg32[%c0_92, %c0_93], %92 {strides = array<i32>} : memref<24x24xf32, #tpu.memory_space<vmem>>, vector<24x24xf32>,
    %c4_94 = arith.constant 4 : index
    %c0_95 = arith.constant 0 : index
    %94 = vector.load %arg32[%c4_94, %c0_95] : memref<24x24xf32, #tpu.memory_space<vmem>>, vector<16x24xf32>
    tpu.vector_store %arg32[%c4_94, %c0_95], %91 {strides = array<i32>} : memref<24x24xf32, #tpu.memory_space<vmem>>, vector<16x24xf32>,
    %c0_96 = arith.constant 0 : index
    %c0_97 = arith.constant 0 : index
    %95 = vector.load %arg32[%c0_96, %c0_97] : memref<24x24xf32, #tpu.memory_space<vmem>>, vector<16x24xf32>
    %c0_98 = arith.constant 0 : index
    %c0_99 = arith.constant 0 : index
    %96 = vector.load %arg33[%c0_98, %c0_99] : memref<16x120xf32, #tpu.memory_space<vmem>>, vector<16x24xf32>
    tpu.vector_store %arg33[%c0_98, %c0_99], %95 {strides = array<i32>} : memref<16x120xf32, #tpu.memory_space<vmem>>, vector<16x24xf32>,
    %c2_100 = arith.constant 2 : index
    %c0_101 = arith.constant 0 : index
    %97 = vector.load %arg32[%c2_100, %c0_101] : memref<24x24xf32, #tpu.memory_space<vmem>>, vector<16x24xf32>
    %c0_102 = arith.constant 0 : index
    %c24_103 = arith.constant 24 : index
    %98 = vector.load %arg33[%c0_102, %c24_103] : memref<16x120xf32, #tpu.memory_space<vmem>>, vector<16x24xf32>
    tpu.vector_store %arg33[%c0_102, %c24_103], %97 {strides = array<i32>} : memref<16x120xf32, #tpu.memory_space<vmem>>, vector<16x24xf32>,
    %c4_104 = arith.constant 4 : index
    %c0_105 = arith.constant 0 : index
    %99 = vector.load %arg32[%c4_104, %c0_105] : memref<24x24xf32, #tpu.memory_space<vmem>>, vector<16x24xf32>
    %c0_106 = arith.constant 0 : index
    %c48_107 = arith.constant 48 : index
    %100 = vector.load %arg33[%c0_106, %c48_107] : memref<16x120xf32, #tpu.memory_space<vmem>>, vector<16x24xf32>
    tpu.vector_store %arg33[%c0_106, %c48_107], %99 {strides = array<i32>} : memref<16x120xf32, #tpu.memory_space<vmem>>, vector<16x24xf32>,
    %c6 = arith.constant 6 : index
    %c0_108 = arith.constant 0 : index
    %101 = vector.load %arg32[%c6, %c0_108] : memref<24x24xf32, #tpu.memory_space<vmem>>, vector<16x24xf32>
    %c0_109 = arith.constant 0 : index
    %c72 = arith.constant 72 : index
    %102 = vector.load %arg33[%c0_109, %c72] : memref<16x120xf32, #tpu.memory_space<vmem>>, vector<16x24xf32>
    tpu.vector_store %arg33[%c0_109, %c72], %101 {strides = array<i32>} : memref<16x120xf32, #tpu.memory_space<vmem>>, vector<16x24xf32>,
    %c8_110 = arith.constant 8 : index
    %c0_111 = arith.constant 0 : index
    %103 = vector.load %arg32[%c8_110, %c0_111] : memref<24x24xf32, #tpu.memory_space<vmem>>, vector<16x24xf32>
    %c0_112 = arith.constant 0 : index
    %c96 = arith.constant 96 : index
    %104 = vector.load %arg33[%c0_112, %c96] : memref<16x120xf32, #tpu.memory_space<vmem>>, vector<16x24xf32>
    tpu.vector_store %arg33[%c0_112, %c96], %103 {strides = array<i32>} : memref<16x120xf32, #tpu.memory_space<vmem>>, vector<16x24xf32>,
    %c0_113 = arith.constant 0 : index
    %c0_114 = arith.constant 0 : index
    %105 = vector.load %arg33[%c0_113, %c0_114] : memref<16x120xf32, #tpu.memory_space<vmem>>, vector<16x120xf32>
    %106 = arith.truncf %105 : vector<16x120xf32> to vector<16x120xbf16>
    %c0_115 = arith.constant 0 : index
    %c0_116 = arith.constant 0 : index
    %107 = vector.load %arg17[%c0_115, %c0_116] : memref<120x8xbf16, #tpu.memory_space<vmem>>, vector<120x8xbf16>
    %cst_117 = arith.constant dense<0.000000e+00> : vector<16x8xf32>
    %108 = tpu.matmul %106, %107, %cst_117 {dimension_numbers = #tpu.dot_dimension_numbers<[1], [0], [0], [1], [0, 0, 1, 1], [], []>} : vector<16x120xbf16>, vector<120x8xbf16>, vector<16x8xf32> -> vector<16x8xf32>
    %c0_118 = arith.constant 0 : index
    %c0_119 = arith.constant 0 : index
    %109 = vector.load %arg18[%c0_118, %c0_119] : memref<1x8xf32, #tpu.memory_space<vmem>>, vector<1x8xf32>
    %110 = vector.broadcast %109 : vector<1x8xf32> to vector<16x8xf32>
    %111 = arith.mulf %108, %110 : vector<16x8xf32>
    %c0_120 = arith.constant 0 : index
    %c0_121 = arith.constant 0 : index
    %112 = vector.load %arg19[%c0_120, %c0_121] : memref<1x8xf32, #tpu.memory_space<vmem>>, vector<1x8xf32>
    %113 = vector.broadcast %112 : vector<1x8xf32> to vector<16x8xf32>
    %114 = arith.addf %111, %113 : vector<16x8xf32>
    %cst_122 = arith.constant 0.000000e+00 : f32
    %115 = vector.broadcast %cst_122 : f32 to vector<16x8xf32>
    %116 = arith.cmpf ogt, %114, %115 : vector<16x8xf32>
    %c0_123 = arith.constant 0 : index
    %c0_124 = arith.constant 0 : index
    %117 = vector.load %arg20[%c0_123, %c0_124] : memref<1x8xf32, #tpu.memory_space<vmem>>, vector<1x8xf32>
    %118 = vector.broadcast %117 : vector<1x8xf32> to vector<16x8xf32>
    %119 = arith.mulf %118, %114 : vector<16x8xf32>
    %120 = arith.select %116, %114, %119 : vector<16x8xi1>, vector<16x8xf32>
    %cst_125 = arith.constant 0.000000e+00 : f32
    %121 = vector.broadcast %cst_125 : f32 to vector<24x24xf32>
    %c0_126 = arith.constant 0 : index
    %c0_127 = arith.constant 0 : index
    %122 = vector.load %arg32[%c0_126, %c0_127] : memref<24x24xf32, #tpu.memory_space<vmem>>, vector<24x24xf32>
    tpu.vector_store %arg32[%c0_126, %c0_127], %121 {strides = array<i32>} : memref<24x24xf32, #tpu.memory_space<vmem>>, vector<24x24xf32>,
    %c4_128 = arith.constant 4 : index
    %c0_129 = arith.constant 0 : index
    %123 = vector.load %arg32[%c4_128, %c0_129] : memref<24x24xf32, #tpu.memory_space<vmem>>, vector<16x8xf32>
    tpu.vector_store %arg32[%c4_128, %c0_129], %120 {strides = array<i32>} : memref<24x24xf32, #tpu.memory_space<vmem>>, vector<16x8xf32>,
    %c0_130 = arith.constant 0 : index
    %c0_131 = arith.constant 0 : index
    %124 = vector.load %arg32[%c0_130, %c0_131] : memref<24x24xf32, #tpu.memory_space<vmem>>, vector<16x8xf32>
    %c0_132 = arith.constant 0 : index
    %c0_133 = arith.constant 0 : index
    %125 = vector.load %arg33[%c0_132, %c0_133] : memref<16x120xf32, #tpu.memory_space<vmem>>, vector<16x8xf32>
    tpu.vector_store %arg33[%c0_132, %c0_133], %124 {strides = array<i32>} : memref<16x120xf32, #tpu.memory_space<vmem>>, vector<16x8xf32>,
    %c2_134 = arith.constant 2 : index
    %c0_135 = arith.constant 0 : index
    %126 = vector.load %arg32[%c2_134, %c0_135] : memref<24x24xf32, #tpu.memory_space<vmem>>, vector<16x8xf32>
    %c0_136 = arith.constant 0 : index
    %c8_137 = arith.constant 8 : index
    %127 = vector.load %arg33[%c0_136, %c8_137] : memref<16x120xf32, #tpu.memory_space<vmem>>, vector<16x8xf32>
    tpu.vector_store %arg33[%c0_136, %c8_137], %126 {strides = array<i32>} : memref<16x120xf32, #tpu.memory_space<vmem>>, vector<16x8xf32>,
    %c4_138 = arith.constant 4 : index
    %c0_139 = arith.constant 0 : index
    %128 = vector.load %arg32[%c4_138, %c0_139] : memref<24x24xf32, #tpu.memory_space<vmem>>, vector<16x8xf32>
    %c0_140 = arith.constant 0 : index
    %c16_141 = arith.constant 16 : index
    %129 = vector.load %arg33[%c0_140, %c16_141] : memref<16x120xf32, #tpu.memory_space<vmem>>, vector<16x8xf32>
    tpu.vector_store %arg33[%c0_140, %c16_141], %128 {strides = array<i32>} : memref<16x120xf32, #tpu.memory_space<vmem>>, vector<16x8xf32>,
    %c6_142 = arith.constant 6 : index
    %c0_143 = arith.constant 0 : index
    %130 = vector.load %arg32[%c6_142, %c0_143] : memref<24x24xf32, #tpu.memory_space<vmem>>, vector<16x8xf32>
    %c0_144 = arith.constant 0 : index
    %c24_145 = arith.constant 24 : index
    %131 = vector.load %arg33[%c0_144, %c24_145] : memref<16x120xf32, #tpu.memory_space<vmem>>, vector<16x8xf32>
    tpu.vector_store %arg33[%c0_144, %c24_145], %130 {strides = array<i32>} : memref<16x120xf32, #tpu.memory_space<vmem>>, vector<16x8xf32>,
    %c8_146 = arith.constant 8 : index
    %c0_147 = arith.constant 0 : index
    %132 = vector.load %arg32[%c8_146, %c0_147] : memref<24x24xf32, #tpu.memory_space<vmem>>, vector<16x8xf32>
    %c0_148 = arith.constant 0 : index
    %c32_149 = arith.constant 32 : index
    %133 = vector.load %arg33[%c0_148, %c32_149] : memref<16x120xf32, #tpu.memory_space<vmem>>, vector<16x8xf32>
    tpu.vector_store %arg33[%c0_148, %c32_149], %132 {strides = array<i32>} : memref<16x120xf32, #tpu.memory_space<vmem>>, vector<16x8xf32>,
    %c0_150 = arith.constant 0 : index
    %c0_151 = arith.constant 0 : index
    %134 = vector.load %arg33[%c0_150, %c0_151] : memref<16x120xf32, #tpu.memory_space<vmem>>, vector<16x40xf32>
    %135 = arith.truncf %134 : vector<16x40xf32> to vector<16x40xbf16>
    %c0_152 = arith.constant 0 : index
    %c0_153 = arith.constant 0 : index
    %136 = vector.load %arg21[%c0_152, %c0_153] : memref<40x8xbf16, #tpu.memory_space<vmem>>, vector<40x8xbf16>
    %cst_154 = arith.constant dense<0.000000e+00> : vector<16x8xf32>
    %137 = tpu.matmul %135, %136, %cst_154 {dimension_numbers = #tpu.dot_dimension_numbers<[1], [0], [0], [1], [0, 0, 1, 1], [], []>} : vector<16x40xbf16>, vector<40x8xbf16>, vector<16x8xf32> -> vector<16x8xf32>
    %c0_155 = arith.constant 0 : index
    %c0_156 = arith.constant 0 : index
    %138 = vector.load %arg22[%c0_155, %c0_156] : memref<1x8xf32, #tpu.memory_space<vmem>>, vector<1x8xf32>
    %139 = vector.broadcast %138 : vector<1x8xf32> to vector<16x8xf32>
    %140 = arith.mulf %137, %139 : vector<16x8xf32>
    %c0_157 = arith.constant 0 : index
    %c0_158 = arith.constant 0 : index
    %141 = vector.load %arg23[%c0_157, %c0_158] : memref<1x8xf32, #tpu.memory_space<vmem>>, vector<1x8xf32>
    %142 = vector.broadcast %141 : vector<1x8xf32> to vector<16x8xf32>
    %143 = arith.addf %140, %142 : vector<16x8xf32>
    %cst_159 = arith.constant 0.000000e+00 : f32
    %144 = vector.broadcast %cst_159 : f32 to vector<16x8xf32>
    %145 = arith.cmpf ogt, %143, %144 : vector<16x8xf32>
    %c0_160 = arith.constant 0 : index
    %c0_161 = arith.constant 0 : index
    %146 = vector.load %arg24[%c0_160, %c0_161] : memref<1x8xf32, #tpu.memory_space<vmem>>, vector<1x8xf32>
    %147 = vector.broadcast %146 : vector<1x8xf32> to vector<16x8xf32>
    %148 = arith.mulf %147, %143 : vector<16x8xf32>
    %149 = arith.select %145, %143, %148 : vector<16x8xi1>, vector<16x8xf32>
    %150 = arith.truncf %91 : vector<16x24xf32> to vector<16x24xbf16>
    %c0_162 = arith.constant 0 : index
    %c0_163 = arith.constant 0 : index
    %151 = vector.load %arg25[%c0_162, %c0_163] : memref<24x8xbf16, #tpu.memory_space<vmem>>, vector<24x8xbf16>
    %cst_164 = arith.constant dense<0.000000e+00> : vector<16x8xf32>
    %152 = tpu.matmul %150, %151, %cst_164 {dimension_numbers = #tpu.dot_dimension_numbers<[1], [0], [0], [1], [0, 0, 1, 1], [], []>} : vector<16x24xbf16>, vector<24x8xbf16>, vector<16x8xf32> -> vector<16x8xf32>
    %c0_165 = arith.constant 0 : index
    %c0_166 = arith.constant 0 : index
    %153 = vector.load %arg26[%c0_165, %c0_166] : memref<1x8xf32, #tpu.memory_space<vmem>>, vector<1x8xf32>
    %154 = vector.broadcast %153 : vector<1x8xf32> to vector<16x8xf32>
    %155 = arith.addf %152, %154 : vector<16x8xf32>
    %156 = arith.addf %149, %155 : vector<16x8xf32>
    %cst_167 = arith.constant 0.000000e+00 : f32
    %157 = vector.broadcast %cst_167 : f32 to vector<16x8xf32>
    %158 = arith.cmpf ogt, %156, %157 : vector<16x8xf32>
    %c0_168 = arith.constant 0 : index
    %c0_169 = arith.constant 0 : index
    %159 = vector.load %arg27[%c0_168, %c0_169] : memref<1x8xf32, #tpu.memory_space<vmem>>, vector<1x8xf32>
    %160 = vector.broadcast %159 : vector<1x8xf32> to vector<16x8xf32>
    %161 = arith.mulf %160, %156 : vector<16x8xf32>
    %162 = arith.select %158, %156, %161 : vector<16x8xi1>, vector<16x8xf32>
    %c0_170 = arith.constant 0 : index
    %c24_171 = arith.constant 24 : index
    %163 = vector.load %arg31[%c0_170, %c24_171] : memref<16x32xf32, #tpu.memory_space<vmem>>, vector<16x8xf32>
    tpu.vector_store %arg31[%c0_170, %c24_171], %162 {strides = array<i32>} : memref<16x32xf32, #tpu.memory_space<vmem>>, vector<16x8xf32>,
    %c0_172 = arith.constant 0 : index
    %c0_173 = arith.constant 0 : index
    %164 = vector.load %arg31[%c0_172, %c0_173] : memref<16x32xf32, #tpu.memory_space<vmem>>, vector<16x32xf32>
    %165 = arith.truncf %164 : vector<16x32xf32> to vector<16x32xbf16>
    %c0_174 = arith.constant 0 : index
    %c0_175 = arith.constant 0 : index
    %166 = vector.load %arg28[%c0_174, %c0_175] : memref<32x32xbf16, #tpu.memory_space<vmem>>, vector<32x32xbf16>
    %cst_176 = arith.constant dense<0.000000e+00> : vector<16x32xf32>
    %167 = tpu.matmul %165, %166, %cst_176 {dimension_numbers = #tpu.dot_dimension_numbers<[1], [0], [0], [1], [0, 0, 1, 1], [], []>} : vector<16x32xbf16>, vector<32x32xbf16>, vector<16x32xf32> -> vector<16x32xf32>
    %c0_177 = arith.constant 0 : index
    %c0_178 = arith.constant 0 : index
    %168 = vector.load %arg29[%c0_177, %c0_178] : memref<1x32xf32, #tpu.memory_space<vmem>>, vector<1x32xf32>
    %169 = vector.broadcast %168 : vector<1x32xf32> to vector<16x32xf32>
    %170 = arith.addf %167, %169 : vector<16x32xf32>
    %171 = vector.shape_cast %170 : vector<16x32xf32> to vector<1x16x32xf32>
    %c0_179 = arith.constant 0 : index
    %c0_180 = arith.constant 0 : index
    %c0_181 = arith.constant 0 : index
    %172 = vector.load %arg30[%c0_179, %c0_180, %c0_181] : memref<1x16x32xf32, #tpu.memory_space<vmem>>, vector<1x16x32xf32>
    tpu.vector_store %arg30[%c0_179, %c0_180, %c0_181], %171 {strides = array<i32>} : memref<1x16x32xf32, #tpu.memory_space<vmem>>, vector<1x16x32xf32>,
    return
  }
  func.func @transform_0(%arg0: i32) -> (i32, i32, i32) {
    %c0_i32 = arith.constant 0 : i32
    %c0_i32_0 = arith.constant 0 : i32
    %c0_i32_1 = arith.constant 0 : i32
    return %arg0, %c0_i32, %c0_i32_0 : i32, i32, i32
  }
  func.func @transform_1(%arg0: i32) -> (i32, i32) {
    %c0_i32 = arith.constant 0 : i32
    %c0_i32_0 = arith.constant 0 : i32
    %c0_i32_1 = arith.constant 0 : i32
    return %c0_i32, %c0_i32_0 : i32, i32
  }
  func.func @transform_2(%arg0: i32) -> (i32, i32) {
    %c0_i32 = arith.constant 0 : i32
    %c0_i32_0 = arith.constant 0 : i32
    %c0_i32_1 = arith.constant 0 : i32
    return %c0_i32, %c0_i32_0 : i32, i32
  }
  func.func @transform_3(%arg0: i32) -> (i32, i32) {
    %c0_i32 = arith.constant 0 : i32
    %c0_i32_0 = arith.constant 0 : i32
    %c0_i32_1 = arith.constant 0 : i32
    return %c0_i32, %c0_i32_0 : i32, i32
  }
  func.func @transform_4(%arg0: i32) -> (i32, i32) {
    %c0_i32 = arith.constant 0 : i32
    %c0_i32_0 = arith.constant 0 : i32
    %c0_i32_1 = arith.constant 0 : i32
    return %c0_i32, %c0_i32_0 : i32, i32
  }
  func.func @transform_5(%arg0: i32) -> (i32, i32) {
    %c0_i32 = arith.constant 0 : i32
    %c0_i32_0 = arith.constant 0 : i32
    %c0_i32_1 = arith.constant 0 : i32
    return %c0_i32, %c0_i32_0 : i32, i32
  }
  func.func @transform_6(%arg0: i32) -> (i32, i32) {
    %c0_i32 = arith.constant 0 : i32
    %c0_i32_0 = arith.constant 0 : i32
    %c0_i32_1 = arith.constant 0 : i32
    return %c0_i32, %c0_i32_0 : i32, i32
  }
  func.func @transform_7(%arg0: i32) -> (i32, i32) {
    %c0_i32 = arith.constant 0 : i32
    %c0_i32_0 = arith.constant 0 : i32
    %c0_i32_1 = arith.constant 0 : i32
    return %c0_i32, %c0_i32_0 : i32, i32
  }
  func.func @transform_8(%arg0: i32) -> (i32, i32) {
    %c0_i32 = arith.constant 0 : i32
    %c0_i32_0 = arith.constant 0 : i32
    %c0_i32_1 = arith.constant 0 : i32
    return %c0_i32, %c0_i32_0 : i32, i32
  }
  func.func @transform_9(%arg0: i32) -> (i32, i32) {
    %c0_i32 = arith.constant 0 : i32
    %c0_i32_0 = arith.constant 0 : i32
    %c0_i32_1 = arith.constant 0 : i32
    return %c0_i32, %c0_i32_0 : i32, i32
  }
  func.func @transform_10(%arg0: i32) -> (i32, i32) {
    %c0_i32 = arith.constant 0 : i32
    %c0_i32_0 = arith.constant 0 : i32
    %c0_i32_1 = arith.constant 0 : i32
    return %c0_i32, %c0_i32_0 : i32, i32
  }
  func.func @transform_11(%arg0: i32) -> (i32, i32) {
    %c0_i32 = arith.constant 0 : i32
    %c0_i32_0 = arith.constant 0 : i32
    %c0_i32_1 = arith.constant 0 : i32
    return %c0_i32, %c0_i32_0 : i32, i32
  }
  func.func @transform_12(%arg0: i32) -> (i32, i32) {
    %c0_i32 = arith.constant 0 : i32
    %c0_i32_0 = arith.constant 0 : i32
    %c0_i32_1 = arith.constant 0 : i32
    return %c0_i32, %c0_i32_0 : i32, i32
  }
  func.func @transform_13(%arg0: i32) -> (i32, i32) {
    %c0_i32 = arith.constant 0 : i32
    %c0_i32_0 = arith.constant 0 : i32
    %c0_i32_1 = arith.constant 0 : i32
    return %c0_i32, %c0_i32_0 : i32, i32
  }
  func.func @transform_14(%arg0: i32) -> (i32, i32) {
    %c0_i32 = arith.constant 0 : i32
    %c0_i32_0 = arith.constant 0 : i32
    %c0_i32_1 = arith.constant 0 : i32
    return %c0_i32, %c0_i32_0 : i32, i32
  }
  func.func @transform_15(%arg0: i32) -> (i32, i32) {
    %c0_i32 = arith.constant 0 : i32
    %c0_i32_0 = arith.constant 0 : i32
    %c0_i32_1 = arith.constant 0 : i32
    return %c0_i32, %c0_i32_0 : i32, i32
  }
  func.func @transform_16(%arg0: i32) -> (i32, i32) {
    %c0_i32 = arith.constant 0 : i32
    %c0_i32_0 = arith.constant 0 : i32
    %c0_i32_1 = arith.constant 0 : i32
    return %c0_i32, %c0_i32_0 : i32, i32
  }
  func.func @transform_17(%arg0: i32) -> (i32, i32) {
    %c0_i32 = arith.constant 0 : i32
    %c0_i32_0 = arith.constant 0 : i32
    %c0_i32_1 = arith.constant 0 : i32
    return %c0_i32, %c0_i32_0 : i32, i32
  }
  func.func @transform_18(%arg0: i32) -> (i32, i32) {
    %c0_i32 = arith.constant 0 : i32
    %c0_i32_0 = arith.constant 0 : i32
    %c0_i32_1 = arith.constant 0 : i32
    return %c0_i32, %c0_i32_0 : i32, i32
  }
  func.func @transform_19(%arg0: i32) -> (i32, i32) {
    %c0_i32 = arith.constant 0 : i32
    %c0_i32_0 = arith.constant 0 : i32
    %c0_i32_1 = arith.constant 0 : i32
    return %c0_i32, %c0_i32_0 : i32, i32
  }
  func.func @transform_20(%arg0: i32) -> (i32, i32) {
    %c0_i32 = arith.constant 0 : i32
    %c0_i32_0 = arith.constant 0 : i32
    %c0_i32_1 = arith.constant 0 : i32
    return %c0_i32, %c0_i32_0 : i32, i32
  }
  func.func @transform_21(%arg0: i32) -> (i32, i32) {
    %c0_i32 = arith.constant 0 : i32
    %c0_i32_0 = arith.constant 0 : i32
    %c0_i32_1 = arith.constant 0 : i32
    return %c0_i32, %c0_i32_0 : i32, i32
  }
  func.func @transform_22(%arg0: i32) -> (i32, i32) {
    %c0_i32 = arith.constant 0 : i32
    %c0_i32_0 = arith.constant 0 : i32
    %c0_i32_1 = arith.constant 0 : i32
    return %c0_i32, %c0_i32_0 : i32, i32
  }
  func.func @transform_23(%arg0: i32) -> (i32, i32) {
    %c0_i32 = arith.constant 0 : i32
    %c0_i32_0 = arith.constant 0 : i32
    %c0_i32_1 = arith.constant 0 : i32
    return %c0_i32, %c0_i32_0 : i32, i32
  }
  func.func @transform_24(%arg0: i32) -> (i32, i32) {
    %c0_i32 = arith.constant 0 : i32
    %c0_i32_0 = arith.constant 0 : i32
    %c0_i32_1 = arith.constant 0 : i32
    return %c0_i32, %c0_i32_0 : i32, i32
  }
  func.func @transform_25(%arg0: i32) -> (i32, i32) {
    %c0_i32 = arith.constant 0 : i32
    %c0_i32_0 = arith.constant 0 : i32
    %c0_i32_1 = arith.constant 0 : i32
    return %c0_i32, %c0_i32_0 : i32, i32
  }
  func.func @transform_26(%arg0: i32) -> (i32, i32) {
    %c0_i32 = arith.constant 0 : i32
    %c0_i32_0 = arith.constant 0 : i32
    %c0_i32_1 = arith.constant 0 : i32
    return %c0_i32, %c0_i32_0 : i32, i32
  }
  func.func @transform_27(%arg0: i32) -> (i32, i32) {
    %c0_i32 = arith.constant 0 : i32
    %c0_i32_0 = arith.constant 0 : i32
    %c0_i32_1 = arith.constant 0 : i32
    return %c0_i32, %c0_i32_0 : i32, i32
  }
  func.func @transform_28(%arg0: i32) -> (i32, i32) {
    %c0_i32 = arith.constant 0 : i32
    %c0_i32_0 = arith.constant 0 : i32
    %c0_i32_1 = arith.constant 0 : i32
    return %c0_i32, %c0_i32_0 : i32, i32
  }
  func.func @transform_29(%arg0: i32) -> (i32, i32, i32) {
    %c0_i32 = arith.constant 0 : i32
    %c0_i32_0 = arith.constant 0 : i32
    %c0_i32_1 = arith.constant 0 : i32
    return %arg0, %c0_i32, %c0_i32_0 : i32, i32, i32
  }
}

module attributes {stable_mosaic.version = 11 : i64} {
  func.func @kernel(%arg0: i32, %arg1: memref<1x16x32xf32, #tpu.memory_space<vmem>>, %arg2: memref<32x16xbf16, #tpu.memory_space<vmem>>, %arg3: memref<1x16xf32, #tpu.memory_space<vmem>>, %arg4: memref<1x16xf32, #tpu.memory_space<vmem>>, %arg5: memref<1x16xf32, #tpu.memory_space<vmem>>, %arg6: memref<80x8xbf16, #tpu.memory_space<vmem>>, %arg7: memref<1x8xf32, #tpu.memory_space<vmem>>, %arg8: memref<1x8xf32, #tpu.memory_space<vmem>>, %arg9: memref<1x8xf32, #tpu.memory_space<vmem>>, %arg10: memref<40x8xbf16, #tpu.memory_space<vmem>>, %arg11: memref<1x8xf32, #tpu.memory_space<vmem>>, %arg12: memref<1x8xf32, #tpu.memory_space<vmem>>, %arg13: memref<1x8xf32, #tpu.memory_space<vmem>>, %arg14: memref<16x8xbf16, #tpu.memory_space<vmem>>, %arg15: memref<1x8xf32, #tpu.memory_space<vmem>>, %arg16: memref<1x8xf32, #tpu.memory_space<vmem>>, %arg17: memref<120x8xbf16, #tpu.memory_space<vmem>>, %arg18: memref<1x8xf32, #tpu.memory_space<vmem>>, %arg19: memref<1x8xf32, #tpu.memory_space<vmem>>, %arg20: memref<1x8xf32, #tpu.memory_space<vmem>>, %arg21: memref<40x8xbf16, #tpu.memory_space<vmem>>, %arg22: memref<1x8xf32, #tpu.memory_space<vmem>>, %arg23: memref<1x8xf32, #tpu.memory_space<vmem>>, %arg24: memref<1x8xf32, #tpu.memory_space<vmem>>, %arg25: memref<24x8xbf16, #tpu.memory_space<vmem>>, %arg26: memref<1x8xf32, #tpu.memory_space<vmem>>, %arg27: memref<1x8xf32, #tpu.memory_space<vmem>>, %arg28: memref<1x16x32xf32, #tpu.memory_space<vmem>>, %arg29: memref<16x32xf32, #tpu.memory_space<vmem>>, %arg30: memref<24x24xf32, #tpu.memory_space<vmem>>, %arg31: memref<16x120xf32, #tpu.memory_space<vmem>>) attributes {dimension_semantics = [#tpu.dimension_semantics<parallel>], iteration_bounds = array<i64: 2>, scalar_prefetch = 0 : i64, scratch_operands = 3 : i64, tpu.core_type = #tpu.core_type<tc>, window_params = [{transform_indices = @transform_0, window_bounds = array<i64: 1, 16, 32>}, {pipeline_mode = #tpu.pipeline_mode<synchronous>, transform_indices = @transform_1, window_bounds = array<i64: 32, 16>}, {pipeline_mode = #tpu.pipeline_mode<synchronous>, transform_indices = @transform_2, window_bounds = array<i64: 1, 16>}, {pipeline_mode = #tpu.pipeline_mode<synchronous>, transform_indices = @transform_3, window_bounds = array<i64: 1, 16>}, {pipeline_mode = #tpu.pipeline_mode<synchronous>, transform_indices = @transform_4, window_bounds = array<i64: 1, 16>}, {pipeline_mode = #tpu.pipeline_mode<synchronous>, transform_indices = @transform_5, window_bounds = array<i64: 80, 8>}, {pipeline_mode = #tpu.pipeline_mode<synchronous>, transform_indices = @transform_6, window_bounds = array<i64: 1, 8>}, {pipeline_mode = #tpu.pipeline_mode<synchronous>, transform_indices = @transform_7, window_bounds = array<i64: 1, 8>}, {pipeline_mode = #tpu.pipeline_mode<synchronous>, transform_indices = @transform_8, window_bounds = array<i64: 1, 8>}, {pipeline_mode = #tpu.pipeline_mode<synchronous>, transform_indices = @transform_9, window_bounds = array<i64: 40, 8>}, {pipeline_mode = #tpu.pipeline_mode<synchronous>, transform_indices = @transform_10, window_bounds = array<i64: 1, 8>}, {pipeline_mode = #tpu.pipeline_mode<synchronous>, transform_indices = @transform_11, window_bounds = array<i64: 1, 8>}, {pipeline_mode = #tpu.pipeline_mode<synchronous>, transform_indices = @transform_12, window_bounds = array<i64: 1, 8>}, {pipeline_mode = #tpu.pipeline_mode<synchronous>, transform_indices = @transform_13, window_bounds = array<i64: 16, 8>}, {pipeline_mode = #tpu.pipeline_mode<synchronous>, transform_indices = @transform_14, window_bounds = array<i64: 1, 8>}, {pipeline_mode = #tpu.pipeline_mode<synchronous>, transform_indices = @transform_15, window_bounds = array<i64: 1, 8>}, {pipeline_mode = #tpu.pipeline_mode<synchronous>, transform_indices = @transform_16, window_bounds = array<i64: 120, 8>}, {pipeline_mode = #tpu.pipeline_mode<synchronous>, transform_indices = @transform_17, window_bounds = array<i64: 1, 8>}, {pipeline_mode = #tpu.pipeline_mode<synchronous>, transform_indices = @transform_18, window_bounds = array<i64: 1, 8>}, {pipeline_mode = #tpu.pipeline_mode<synchronous>, transform_indices = @transform_19, window_bounds = array<i64: 1, 8>}, {pipeline_mode = #tpu.pipeline_mode<synchronous>, transform_indices = @transform_20, window_bounds = array<i64: 40, 8>}, {pipeline_mode = #tpu.pipeline_mode<synchronous>, transform_indices = @transform_21, window_bounds = array<i64: 1, 8>}, {pipeline_mode = #tpu.pipeline_mode<synchronous>, transform_indices = @transform_22, window_bounds = array<i64: 1, 8>}, {pipeline_mode = #tpu.pipeline_mode<synchronous>, transform_indices = @transform_23, window_bounds = array<i64: 1, 8>}, {pipeline_mode = #tpu.pipeline_mode<synchronous>, transform_indices = @transform_24, window_bounds = array<i64: 24, 8>}, {pipeline_mode = #tpu.pipeline_mode<synchronous>, transform_indices = @transform_25, window_bounds = array<i64: 1, 8>}, {pipeline_mode = #tpu.pipeline_mode<synchronous>, transform_indices = @transform_26, window_bounds = array<i64: 1, 8>}, {transform_indices = @transform_27, window_bounds = array<i64: 1, 16, 32>}]} {
    %c0 = arith.constant 0 : index
    %c0_0 = arith.constant 0 : index
    %c0_1 = arith.constant 0 : index
    %0 = vector.load %arg1[%c0, %c0_0, %c0_1] : memref<1x16x32xf32, #tpu.memory_space<vmem>>, vector<1x16x32xf32>
    %1 = vector.shape_cast %0 : vector<1x16x32xf32> to vector<16x32xf32>
    %2 = arith.truncf %1 : vector<16x32xf32> to vector<16x32xbf16>
    %c0_2 = arith.constant 0 : index
    %c0_3 = arith.constant 0 : index
    %3 = vector.load %arg2[%c0_2, %c0_3] : memref<32x16xbf16, #tpu.memory_space<vmem>>, vector<32x16xbf16>
    %cst = arith.constant dense<0.000000e+00> : vector<16x16xf32>
    %4 = tpu.matmul %2, %3, %cst {dimension_numbers = #tpu.dot_dimension_numbers<[1], [0], [0], [1], [0, 0, 1, 1], [], []>} : vector<16x32xbf16>, vector<32x16xbf16>, vector<16x16xf32> -> vector<16x16xf32>
    %c0_4 = arith.constant 0 : index
    %c0_5 = arith.constant 0 : index
    %5 = vector.load %arg3[%c0_4, %c0_5] : memref<1x16xf32, #tpu.memory_space<vmem>>, vector<1x16xf32>
    %6 = vector.broadcast %5 : vector<1x16xf32> to vector<16x16xf32>
    %7 = arith.mulf %4, %6 : vector<16x16xf32>
    %c0_6 = arith.constant 0 : index
    %c0_7 = arith.constant 0 : index
    %8 = vector.load %arg4[%c0_6, %c0_7] : memref<1x16xf32, #tpu.memory_space<vmem>>, vector<1x16xf32>
    %9 = vector.broadcast %8 : vector<1x16xf32> to vector<16x16xf32>
    %10 = arith.addf %7, %9 : vector<16x16xf32>
    %cst_8 = arith.constant 0.000000e+00 : f32
    %11 = vector.broadcast %cst_8 : f32 to vector<16x16xf32>
    %12 = arith.cmpf ogt, %10, %11 : vector<16x16xf32>
    %c0_9 = arith.constant 0 : index
    %c0_10 = arith.constant 0 : index
    %13 = vector.load %arg5[%c0_9, %c0_10] : memref<1x16xf32, #tpu.memory_space<vmem>>, vector<1x16xf32>
    %14 = vector.broadcast %13 : vector<1x16xf32> to vector<16x16xf32>
    %15 = arith.mulf %14, %10 : vector<16x16xf32>
    %16 = arith.select %12, %10, %15 : vector<16x16xi1>, vector<16x16xf32>
    %c0_11 = arith.constant 0 : index
    %c0_12 = arith.constant 0 : index
    %17 = vector.load %arg29[%c0_11, %c0_12] : memref<16x32xf32, #tpu.memory_space<vmem>>, vector<16x16xf32>
    tpu.vector_store %arg29[%c0_11, %c0_12], %16 {strides = array<i32>} : memref<16x32xf32, #tpu.memory_space<vmem>>, vector<16x16xf32>,
    %c0_13 = arith.constant 0 : index
    %c0_14 = arith.constant 0 : index
    %18 = vector.load %arg29[%c0_13, %c0_14] : memref<16x32xf32, #tpu.memory_space<vmem>>, vector<16x16xf32>
    %cst_15 = arith.constant 0.000000e+00 : f32
    %19 = vector.broadcast %cst_15 : f32 to vector<24x24xf32>
    %c0_16 = arith.constant 0 : index
    %c0_17 = arith.constant 0 : index
    %20 = vector.load %arg30[%c0_16, %c0_17] : memref<24x24xf32, #tpu.memory_space<vmem>>, vector<24x24xf32>
    tpu.vector_store %arg30[%c0_16, %c0_17], %19 {strides = array<i32>} : memref<24x24xf32, #tpu.memory_space<vmem>>, vector<24x24xf32>,
    %c2 = arith.constant 2 : index
    %c0_18 = arith.constant 0 : index
    %21 = vector.load %arg30[%c2, %c0_18] : memref<24x24xf32, #tpu.memory_space<vmem>>, vector<16x16xf32>
    tpu.vector_store %arg30[%c2, %c0_18], %18 {strides = array<i32>} : memref<24x24xf32, #tpu.memory_space<vmem>>, vector<16x16xf32>,
    %c0_19 = arith.constant 0 : index
    %c0_20 = arith.constant 0 : index
    %22 = vector.load %arg30[%c0_19, %c0_20] : memref<24x24xf32, #tpu.memory_space<vmem>>, vector<16x16xf32>
    %c0_21 = arith.constant 0 : index
    %c0_22 = arith.constant 0 : index
    %23 = vector.load %arg31[%c0_21, %c0_22] : memref<16x120xf32, #tpu.memory_space<vmem>>, vector<16x16xf32>
    tpu.vector_store %arg31[%c0_21, %c0_22], %22 {strides = array<i32>} : memref<16x120xf32, #tpu.memory_space<vmem>>, vector<16x16xf32>,
    %c1 = arith.constant 1 : index
    %c0_23 = arith.constant 0 : index
    %24 = vector.load %arg30[%c1, %c0_23] : memref<24x24xf32, #tpu.memory_space<vmem>>, vector<16x16xf32>
    %c0_24 = arith.constant 0 : index
    %c16 = arith.constant 16 : index
    %25 = vector.load %arg31[%c0_24, %c16] : memref<16x120xf32, #tpu.memory_space<vmem>>, vector<16x16xf32>
    tpu.vector_store %arg31[%c0_24, %c16], %24 {strides = array<i32>} : memref<16x120xf32, #tpu.memory_space<vmem>>, vector<16x16xf32>,
    %c2_25 = arith.constant 2 : index
    %c0_26 = arith.constant 0 : index
    %26 = vector.load %arg30[%c2_25, %c0_26] : memref<24x24xf32, #tpu.memory_space<vmem>>, vector<16x16xf32>
    %c0_27 = arith.constant 0 : index
    %c32 = arith.constant 32 : index
    %27 = vector.load %arg31[%c0_27, %c32] : memref<16x120xf32, #tpu.memory_space<vmem>>, vector<16x16xf32>
    tpu.vector_store %arg31[%c0_27, %c32], %26 {strides = array<i32>} : memref<16x120xf32, #tpu.memory_space<vmem>>, vector<16x16xf32>,
    %c3 = arith.constant 3 : index
    %c0_28 = arith.constant 0 : index
    %28 = vector.load %arg30[%c3, %c0_28] : memref<24x24xf32, #tpu.memory_space<vmem>>, vector<16x16xf32>
    %c0_29 = arith.constant 0 : index
    %c48 = arith.constant 48 : index
    %29 = vector.load %arg31[%c0_29, %c48] : memref<16x120xf32, #tpu.memory_space<vmem>>, vector<16x16xf32>
    tpu.vector_store %arg31[%c0_29, %c48], %28 {strides = array<i32>} : memref<16x120xf32, #tpu.memory_space<vmem>>, vector<16x16xf32>,
    %c4 = arith.constant 4 : index
    %c0_30 = arith.constant 0 : index
    %30 = vector.load %arg30[%c4, %c0_30] : memref<24x24xf32, #tpu.memory_space<vmem>>, vector<16x16xf32>
    %c0_31 = arith.constant 0 : index
    %c64 = arith.constant 64 : index
    %31 = vector.load %arg31[%c0_31, %c64] : memref<16x120xf32, #tpu.memory_space<vmem>>, vector<16x16xf32>
    tpu.vector_store %arg31[%c0_31, %c64], %30 {strides = array<i32>} : memref<16x120xf32, #tpu.memory_space<vmem>>, vector<16x16xf32>,
    %c0_32 = arith.constant 0 : index
    %c0_33 = arith.constant 0 : index
    %32 = vector.load %arg31[%c0_32, %c0_33] : memref<16x120xf32, #tpu.memory_space<vmem>>, vector<16x80xf32>
    %33 = arith.truncf %32 : vector<16x80xf32> to vector<16x80xbf16>
    %c0_34 = arith.constant 0 : index
    %c0_35 = arith.constant 0 : index
    %34 = vector.load %arg6[%c0_34, %c0_35] : memref<80x8xbf16, #tpu.memory_space<vmem>>, vector<80x8xbf16>
    %cst_36 = arith.constant dense<0.000000e+00> : vector<16x8xf32>
    %35 = tpu.matmul %33, %34, %cst_36 {dimension_numbers = #tpu.dot_dimension_numbers<[1], [0], [0], [1], [0, 0, 1, 1], [], []>} : vector<16x80xbf16>, vector<80x8xbf16>, vector<16x8xf32> -> vector<16x8xf32>
    %c0_37 = arith.constant 0 : index
    %c0_38 = arith.constant 0 : index
    %36 = vector.load %arg7[%c0_37, %c0_38] : memref<1x8xf32, #tpu.memory_space<vmem>>, vector<1x8xf32>
    %37 = vector.broadcast %36 : vector<1x8xf32> to vector<16x8xf32>
    %38 = arith.mulf %35, %37 : vector<16x8xf32>
    %c0_39 = arith.constant 0 : index
    %c0_40 = arith.constant 0 : index
    %39 = vector.load %arg8[%c0_39, %c0_40] : memref<1x8xf32, #tpu.memory_space<vmem>>, vector<1x8xf32>
    %40 = vector.broadcast %39 : vector<1x8xf32> to vector<16x8xf32>
    %41 = arith.addf %38, %40 : vector<16x8xf32>
    %cst_41 = arith.constant 0.000000e+00 : f32
    %42 = vector.broadcast %cst_41 : f32 to vector<16x8xf32>
    %43 = arith.cmpf ogt, %41, %42 : vector<16x8xf32>
    %c0_42 = arith.constant 0 : index
    %c0_43 = arith.constant 0 : index
    %44 = vector.load %arg9[%c0_42, %c0_43] : memref<1x8xf32, #tpu.memory_space<vmem>>, vector<1x8xf32>
    %45 = vector.broadcast %44 : vector<1x8xf32> to vector<16x8xf32>
    %46 = arith.mulf %45, %41 : vector<16x8xf32>
    %47 = arith.select %43, %41, %46 : vector<16x8xi1>, vector<16x8xf32>
    %cst_44 = arith.constant 0.000000e+00 : f32
    %48 = vector.broadcast %cst_44 : f32 to vector<24x24xf32>
    %c0_45 = arith.constant 0 : index
    %c0_46 = arith.constant 0 : index
    %49 = vector.load %arg30[%c0_45, %c0_46] : memref<24x24xf32, #tpu.memory_space<vmem>>, vector<24x24xf32>
    tpu.vector_store %arg30[%c0_45, %c0_46], %48 {strides = array<i32>} : memref<24x24xf32, #tpu.memory_space<vmem>>, vector<24x24xf32>,
    %c2_47 = arith.constant 2 : index
    %c0_48 = arith.constant 0 : index
    %50 = vector.load %arg30[%c2_47, %c0_48] : memref<24x24xf32, #tpu.memory_space<vmem>>, vector<16x8xf32>
    tpu.vector_store %arg30[%c2_47, %c0_48], %47 {strides = array<i32>} : memref<24x24xf32, #tpu.memory_space<vmem>>, vector<16x8xf32>,
    %c0_49 = arith.constant 0 : index
    %c0_50 = arith.constant 0 : index
    %51 = vector.load %arg30[%c0_49, %c0_50] : memref<24x24xf32, #tpu.memory_space<vmem>>, vector<16x8xf32>
    %c0_51 = arith.constant 0 : index
    %c0_52 = arith.constant 0 : index
    %52 = vector.load %arg31[%c0_51, %c0_52] : memref<16x120xf32, #tpu.memory_space<vmem>>, vector<16x8xf32>
    tpu.vector_store %arg31[%c0_51, %c0_52], %51 {strides = array<i32>} : memref<16x120xf32, #tpu.memory_space<vmem>>, vector<16x8xf32>,
    %c1_53 = arith.constant 1 : index
    %c0_54 = arith.constant 0 : index
    %53 = vector.load %arg30[%c1_53, %c0_54] : memref<24x24xf32, #tpu.memory_space<vmem>>, vector<16x8xf32>
    %c0_55 = arith.constant 0 : index
    %c8 = arith.constant 8 : index
    %54 = vector.load %arg31[%c0_55, %c8] : memref<16x120xf32, #tpu.memory_space<vmem>>, vector<16x8xf32>
    tpu.vector_store %arg31[%c0_55, %c8], %53 {strides = array<i32>} : memref<16x120xf32, #tpu.memory_space<vmem>>, vector<16x8xf32>,
    %c2_56 = arith.constant 2 : index
    %c0_57 = arith.constant 0 : index
    %55 = vector.load %arg30[%c2_56, %c0_57] : memref<24x24xf32, #tpu.memory_space<vmem>>, vector<16x8xf32>
    %c0_58 = arith.constant 0 : index
    %c16_59 = arith.constant 16 : index
    %56 = vector.load %arg31[%c0_58, %c16_59] : memref<16x120xf32, #tpu.memory_space<vmem>>, vector<16x8xf32>
    tpu.vector_store %arg31[%c0_58, %c16_59], %55 {strides = array<i32>} : memref<16x120xf32, #tpu.memory_space<vmem>>, vector<16x8xf32>,
    %c3_60 = arith.constant 3 : index
    %c0_61 = arith.constant 0 : index
    %57 = vector.load %arg30[%c3_60, %c0_61] : memref<24x24xf32, #tpu.memory_space<vmem>>, vector<16x8xf32>
    %c0_62 = arith.constant 0 : index
    %c24 = arith.constant 24 : index
    %58 = vector.load %arg31[%c0_62, %c24] : memref<16x120xf32, #tpu.memory_space<vmem>>, vector<16x8xf32>
    tpu.vector_store %arg31[%c0_62, %c24], %57 {strides = array<i32>} : memref<16x120xf32, #tpu.memory_space<vmem>>, vector<16x8xf32>,
    %c4_63 = arith.constant 4 : index
    %c0_64 = arith.constant 0 : index
    %59 = vector.load %arg30[%c4_63, %c0_64] : memref<24x24xf32, #tpu.memory_space<vmem>>, vector<16x8xf32>
    %c0_65 = arith.constant 0 : index
    %c32_66 = arith.constant 32 : index
    %60 = vector.load %arg31[%c0_65, %c32_66] : memref<16x120xf32, #tpu.memory_space<vmem>>, vector<16x8xf32>
    tpu.vector_store %arg31[%c0_65, %c32_66], %59 {strides = array<i32>} : memref<16x120xf32, #tpu.memory_space<vmem>>, vector<16x8xf32>,
    %c0_67 = arith.constant 0 : index
    %c0_68 = arith.constant 0 : index
    %61 = vector.load %arg31[%c0_67, %c0_68] : memref<16x120xf32, #tpu.memory_space<vmem>>, vector<16x40xf32>
    %62 = arith.truncf %61 : vector<16x40xf32> to vector<16x40xbf16>
    %c0_69 = arith.constant 0 : index
    %c0_70 = arith.constant 0 : index
    %63 = vector.load %arg10[%c0_69, %c0_70] : memref<40x8xbf16, #tpu.memory_space<vmem>>, vector<40x8xbf16>
    %cst_71 = arith.constant dense<0.000000e+00> : vector<16x8xf32>
    %64 = tpu.matmul %62, %63, %cst_71 {dimension_numbers = #tpu.dot_dimension_numbers<[1], [0], [0], [1], [0, 0, 1, 1], [], []>} : vector<16x40xbf16>, vector<40x8xbf16>, vector<16x8xf32> -> vector<16x8xf32>
    %c0_72 = arith.constant 0 : index
    %c0_73 = arith.constant 0 : index
    %65 = vector.load %arg11[%c0_72, %c0_73] : memref<1x8xf32, #tpu.memory_space<vmem>>, vector<1x8xf32>
    %66 = vector.broadcast %65 : vector<1x8xf32> to vector<16x8xf32>
    %67 = arith.mulf %64, %66 : vector<16x8xf32>
    %c0_74 = arith.constant 0 : index
    %c0_75 = arith.constant 0 : index
    %68 = vector.load %arg12[%c0_74, %c0_75] : memref<1x8xf32, #tpu.memory_space<vmem>>, vector<1x8xf32>
    %69 = vector.broadcast %68 : vector<1x8xf32> to vector<16x8xf32>
    %70 = arith.addf %67, %69 : vector<16x8xf32>
    %cst_76 = arith.constant 0.000000e+00 : f32
    %71 = vector.broadcast %cst_76 : f32 to vector<16x8xf32>
    %72 = arith.cmpf ogt, %70, %71 : vector<16x8xf32>
    %c0_77 = arith.constant 0 : index
    %c0_78 = arith.constant 0 : index
    %73 = vector.load %arg13[%c0_77, %c0_78] : memref<1x8xf32, #tpu.memory_space<vmem>>, vector<1x8xf32>
    %74 = vector.broadcast %73 : vector<1x8xf32> to vector<16x8xf32>
    %75 = arith.mulf %74, %70 : vector<16x8xf32>
    %76 = arith.select %72, %70, %75 : vector<16x8xi1>, vector<16x8xf32>
    %77 = arith.truncf %18 : vector<16x16xf32> to vector<16x16xbf16>
    %c0_79 = arith.constant 0 : index
    %c0_80 = arith.constant 0 : index
    %78 = vector.load %arg14[%c0_79, %c0_80] : memref<16x8xbf16, #tpu.memory_space<vmem>>, vector<16x8xbf16>
    %cst_81 = arith.constant dense<0.000000e+00> : vector<16x8xf32>
    %79 = tpu.matmul %77, %78, %cst_81 {dimension_numbers = #tpu.dot_dimension_numbers<[1], [0], [0], [1], [0, 0, 1, 1], [], []>} : vector<16x16xbf16>, vector<16x8xbf16>, vector<16x8xf32> -> vector<16x8xf32>
    %c0_82 = arith.constant 0 : index
    %c0_83 = arith.constant 0 : index
    %80 = vector.load %arg15[%c0_82, %c0_83] : memref<1x8xf32, #tpu.memory_space<vmem>>, vector<1x8xf32>
    %81 = vector.broadcast %80 : vector<1x8xf32> to vector<16x8xf32>
    %82 = arith.addf %79, %81 : vector<16x8xf32>
    %83 = arith.addf %76, %82 : vector<16x8xf32>
    %cst_84 = arith.constant 0.000000e+00 : f32
    %84 = vector.broadcast %cst_84 : f32 to vector<16x8xf32>
    %85 = arith.cmpf ogt, %83, %84 : vector<16x8xf32>
    %c0_85 = arith.constant 0 : index
    %c0_86 = arith.constant 0 : index
    %86 = vector.load %arg16[%c0_85, %c0_86] : memref<1x8xf32, #tpu.memory_space<vmem>>, vector<1x8xf32>
    %87 = vector.broadcast %86 : vector<1x8xf32> to vector<16x8xf32>
    %88 = arith.mulf %87, %83 : vector<16x8xf32>
    %89 = arith.select %85, %83, %88 : vector<16x8xi1>, vector<16x8xf32>
    %c0_87 = arith.constant 0 : index
    %c16_88 = arith.constant 16 : index
    %90 = vector.load %arg29[%c0_87, %c16_88] : memref<16x32xf32, #tpu.memory_space<vmem>>, vector<16x8xf32>
    tpu.vector_store %arg29[%c0_87, %c16_88], %89 {strides = array<i32>} : memref<16x32xf32, #tpu.memory_space<vmem>>, vector<16x8xf32>,
    %c0_89 = arith.constant 0 : index
    %c0_90 = arith.constant 0 : index
    %91 = vector.load %arg29[%c0_89, %c0_90] : memref<16x32xf32, #tpu.memory_space<vmem>>, vector<16x24xf32>
    %cst_91 = arith.constant 0.000000e+00 : f32
    %92 = vector.broadcast %cst_91 : f32 to vector<24x24xf32>
    %c0_92 = arith.constant 0 : index
    %c0_93 = arith.constant 0 : index
    %93 = vector.load %arg30[%c0_92, %c0_93] : memref<24x24xf32, #tpu.memory_space<vmem>>, vector<24x24xf32>
    tpu.vector_store %arg30[%c0_92, %c0_93], %92 {strides = array<i32>} : memref<24x24xf32, #tpu.memory_space<vmem>>, vector<24x24xf32>,
    %c4_94 = arith.constant 4 : index
    %c0_95 = arith.constant 0 : index
    %94 = vector.load %arg30[%c4_94, %c0_95] : memref<24x24xf32, #tpu.memory_space<vmem>>, vector<16x24xf32>
    tpu.vector_store %arg30[%c4_94, %c0_95], %91 {strides = array<i32>} : memref<24x24xf32, #tpu.memory_space<vmem>>, vector<16x24xf32>,
    %c0_96 = arith.constant 0 : index
    %c0_97 = arith.constant 0 : index
    %95 = vector.load %arg30[%c0_96, %c0_97] : memref<24x24xf32, #tpu.memory_space<vmem>>, vector<16x24xf32>
    %c0_98 = arith.constant 0 : index
    %c0_99 = arith.constant 0 : index
    %96 = vector.load %arg31[%c0_98, %c0_99] : memref<16x120xf32, #tpu.memory_space<vmem>>, vector<16x24xf32>
    tpu.vector_store %arg31[%c0_98, %c0_99], %95 {strides = array<i32>} : memref<16x120xf32, #tpu.memory_space<vmem>>, vector<16x24xf32>,
    %c2_100 = arith.constant 2 : index
    %c0_101 = arith.constant 0 : index
    %97 = vector.load %arg30[%c2_100, %c0_101] : memref<24x24xf32, #tpu.memory_space<vmem>>, vector<16x24xf32>
    %c0_102 = arith.constant 0 : index
    %c24_103 = arith.constant 24 : index
    %98 = vector.load %arg31[%c0_102, %c24_103] : memref<16x120xf32, #tpu.memory_space<vmem>>, vector<16x24xf32>
    tpu.vector_store %arg31[%c0_102, %c24_103], %97 {strides = array<i32>} : memref<16x120xf32, #tpu.memory_space<vmem>>, vector<16x24xf32>,
    %c4_104 = arith.constant 4 : index
    %c0_105 = arith.constant 0 : index
    %99 = vector.load %arg30[%c4_104, %c0_105] : memref<24x24xf32, #tpu.memory_space<vmem>>, vector<16x24xf32>
    %c0_106 = arith.constant 0 : index
    %c48_107 = arith.constant 48 : index
    %100 = vector.load %arg31[%c0_106, %c48_107] : memref<16x120xf32, #tpu.memory_space<vmem>>, vector<16x24xf32>
    tpu.vector_store %arg31[%c0_106, %c48_107], %99 {strides = array<i32>} : memref<16x120xf32, #tpu.memory_space<vmem>>, vector<16x24xf32>,
    %c6 = arith.constant 6 : index
    %c0_108 = arith.constant 0 : index
    %101 = vector.load %arg30[%c6, %c0_108] : memref<24x24xf32, #tpu.memory_space<vmem>>, vector<16x24xf32>
    %c0_109 = arith.constant 0 : index
    %c72 = arith.constant 72 : index
    %102 = vector.load %arg31[%c0_109, %c72] : memref<16x120xf32, #tpu.memory_space<vmem>>, vector<16x24xf32>
    tpu.vector_store %arg31[%c0_109, %c72], %101 {strides = array<i32>} : memref<16x120xf32, #tpu.memory_space<vmem>>, vector<16x24xf32>,
    %c8_110 = arith.constant 8 : index
    %c0_111 = arith.constant 0 : index
    %103 = vector.load %arg30[%c8_110, %c0_111] : memref<24x24xf32, #tpu.memory_space<vmem>>, vector<16x24xf32>
    %c0_112 = arith.constant 0 : index
    %c96 = arith.constant 96 : index
    %104 = vector.load %arg31[%c0_112, %c96] : memref<16x120xf32, #tpu.memory_space<vmem>>, vector<16x24xf32>
    tpu.vector_store %arg31[%c0_112, %c96], %103 {strides = array<i32>} : memref<16x120xf32, #tpu.memory_space<vmem>>, vector<16x24xf32>,
    %c0_113 = arith.constant 0 : index
    %c0_114 = arith.constant 0 : index
    %105 = vector.load %arg31[%c0_113, %c0_114] : memref<16x120xf32, #tpu.memory_space<vmem>>, vector<16x120xf32>
    %106 = arith.truncf %105 : vector<16x120xf32> to vector<16x120xbf16>
    %c0_115 = arith.constant 0 : index
    %c0_116 = arith.constant 0 : index
    %107 = vector.load %arg17[%c0_115, %c0_116] : memref<120x8xbf16, #tpu.memory_space<vmem>>, vector<120x8xbf16>
    %cst_117 = arith.constant dense<0.000000e+00> : vector<16x8xf32>
    %108 = tpu.matmul %106, %107, %cst_117 {dimension_numbers = #tpu.dot_dimension_numbers<[1], [0], [0], [1], [0, 0, 1, 1], [], []>} : vector<16x120xbf16>, vector<120x8xbf16>, vector<16x8xf32> -> vector<16x8xf32>
    %c0_118 = arith.constant 0 : index
    %c0_119 = arith.constant 0 : index
    %109 = vector.load %arg18[%c0_118, %c0_119] : memref<1x8xf32, #tpu.memory_space<vmem>>, vector<1x8xf32>
    %110 = vector.broadcast %109 : vector<1x8xf32> to vector<16x8xf32>
    %111 = arith.mulf %108, %110 : vector<16x8xf32>
    %c0_120 = arith.constant 0 : index
    %c0_121 = arith.constant 0 : index
    %112 = vector.load %arg19[%c0_120, %c0_121] : memref<1x8xf32, #tpu.memory_space<vmem>>, vector<1x8xf32>
    %113 = vector.broadcast %112 : vector<1x8xf32> to vector<16x8xf32>
    %114 = arith.addf %111, %113 : vector<16x8xf32>
    %cst_122 = arith.constant 0.000000e+00 : f32
    %115 = vector.broadcast %cst_122 : f32 to vector<16x8xf32>
    %116 = arith.cmpf ogt, %114, %115 : vector<16x8xf32>
    %c0_123 = arith.constant 0 : index
    %c0_124 = arith.constant 0 : index
    %117 = vector.load %arg20[%c0_123, %c0_124] : memref<1x8xf32, #tpu.memory_space<vmem>>, vector<1x8xf32>
    %118 = vector.broadcast %117 : vector<1x8xf32> to vector<16x8xf32>
    %119 = arith.mulf %118, %114 : vector<16x8xf32>
    %120 = arith.select %116, %114, %119 : vector<16x8xi1>, vector<16x8xf32>
    %cst_125 = arith.constant 0.000000e+00 : f32
    %121 = vector.broadcast %cst_125 : f32 to vector<24x24xf32>
    %c0_126 = arith.constant 0 : index
    %c0_127 = arith.constant 0 : index
    %122 = vector.load %arg30[%c0_126, %c0_127] : memref<24x24xf32, #tpu.memory_space<vmem>>, vector<24x24xf32>
    tpu.vector_store %arg30[%c0_126, %c0_127], %121 {strides = array<i32>} : memref<24x24xf32, #tpu.memory_space<vmem>>, vector<24x24xf32>,
    %c4_128 = arith.constant 4 : index
    %c0_129 = arith.constant 0 : index
    %123 = vector.load %arg30[%c4_128, %c0_129] : memref<24x24xf32, #tpu.memory_space<vmem>>, vector<16x8xf32>
    tpu.vector_store %arg30[%c4_128, %c0_129], %120 {strides = array<i32>} : memref<24x24xf32, #tpu.memory_space<vmem>>, vector<16x8xf32>,
    %c0_130 = arith.constant 0 : index
    %c0_131 = arith.constant 0 : index
    %124 = vector.load %arg30[%c0_130, %c0_131] : memref<24x24xf32, #tpu.memory_space<vmem>>, vector<16x8xf32>
    %c0_132 = arith.constant 0 : index
    %c0_133 = arith.constant 0 : index
    %125 = vector.load %arg31[%c0_132, %c0_133] : memref<16x120xf32, #tpu.memory_space<vmem>>, vector<16x8xf32>
    tpu.vector_store %arg31[%c0_132, %c0_133], %124 {strides = array<i32>} : memref<16x120xf32, #tpu.memory_space<vmem>>, vector<16x8xf32>,
    %c2_134 = arith.constant 2 : index
    %c0_135 = arith.constant 0 : index
    %126 = vector.load %arg30[%c2_134, %c0_135] : memref<24x24xf32, #tpu.memory_space<vmem>>, vector<16x8xf32>
    %c0_136 = arith.constant 0 : index
    %c8_137 = arith.constant 8 : index
    %127 = vector.load %arg31[%c0_136, %c8_137] : memref<16x120xf32, #tpu.memory_space<vmem>>, vector<16x8xf32>
    tpu.vector_store %arg31[%c0_136, %c8_137], %126 {strides = array<i32>} : memref<16x120xf32, #tpu.memory_space<vmem>>, vector<16x8xf32>,
    %c4_138 = arith.constant 4 : index
    %c0_139 = arith.constant 0 : index
    %128 = vector.load %arg30[%c4_138, %c0_139] : memref<24x24xf32, #tpu.memory_space<vmem>>, vector<16x8xf32>
    %c0_140 = arith.constant 0 : index
    %c16_141 = arith.constant 16 : index
    %129 = vector.load %arg31[%c0_140, %c16_141] : memref<16x120xf32, #tpu.memory_space<vmem>>, vector<16x8xf32>
    tpu.vector_store %arg31[%c0_140, %c16_141], %128 {strides = array<i32>} : memref<16x120xf32, #tpu.memory_space<vmem>>, vector<16x8xf32>,
    %c6_142 = arith.constant 6 : index
    %c0_143 = arith.constant 0 : index
    %130 = vector.load %arg30[%c6_142, %c0_143] : memref<24x24xf32, #tpu.memory_space<vmem>>, vector<16x8xf32>
    %c0_144 = arith.constant 0 : index
    %c24_145 = arith.constant 24 : index
    %131 = vector.load %arg31[%c0_144, %c24_145] : memref<16x120xf32, #tpu.memory_space<vmem>>, vector<16x8xf32>
    tpu.vector_store %arg31[%c0_144, %c24_145], %130 {strides = array<i32>} : memref<16x120xf32, #tpu.memory_space<vmem>>, vector<16x8xf32>,
    %c8_146 = arith.constant 8 : index
    %c0_147 = arith.constant 0 : index
    %132 = vector.load %arg30[%c8_146, %c0_147] : memref<24x24xf32, #tpu.memory_space<vmem>>, vector<16x8xf32>
    %c0_148 = arith.constant 0 : index
    %c32_149 = arith.constant 32 : index
    %133 = vector.load %arg31[%c0_148, %c32_149] : memref<16x120xf32, #tpu.memory_space<vmem>>, vector<16x8xf32>
    tpu.vector_store %arg31[%c0_148, %c32_149], %132 {strides = array<i32>} : memref<16x120xf32, #tpu.memory_space<vmem>>, vector<16x8xf32>,
    %c0_150 = arith.constant 0 : index
    %c0_151 = arith.constant 0 : index
    %134 = vector.load %arg31[%c0_150, %c0_151] : memref<16x120xf32, #tpu.memory_space<vmem>>, vector<16x40xf32>
    %135 = arith.truncf %134 : vector<16x40xf32> to vector<16x40xbf16>
    %c0_152 = arith.constant 0 : index
    %c0_153 = arith.constant 0 : index
    %136 = vector.load %arg21[%c0_152, %c0_153] : memref<40x8xbf16, #tpu.memory_space<vmem>>, vector<40x8xbf16>
    %cst_154 = arith.constant dense<0.000000e+00> : vector<16x8xf32>
    %137 = tpu.matmul %135, %136, %cst_154 {dimension_numbers = #tpu.dot_dimension_numbers<[1], [0], [0], [1], [0, 0, 1, 1], [], []>} : vector<16x40xbf16>, vector<40x8xbf16>, vector<16x8xf32> -> vector<16x8xf32>
    %c0_155 = arith.constant 0 : index
    %c0_156 = arith.constant 0 : index
    %138 = vector.load %arg22[%c0_155, %c0_156] : memref<1x8xf32, #tpu.memory_space<vmem>>, vector<1x8xf32>
    %139 = vector.broadcast %138 : vector<1x8xf32> to vector<16x8xf32>
    %140 = arith.mulf %137, %139 : vector<16x8xf32>
    %c0_157 = arith.constant 0 : index
    %c0_158 = arith.constant 0 : index
    %141 = vector.load %arg23[%c0_157, %c0_158] : memref<1x8xf32, #tpu.memory_space<vmem>>, vector<1x8xf32>
    %142 = vector.broadcast %141 : vector<1x8xf32> to vector<16x8xf32>
    %143 = arith.addf %140, %142 : vector<16x8xf32>
    %cst_159 = arith.constant 0.000000e+00 : f32
    %144 = vector.broadcast %cst_159 : f32 to vector<16x8xf32>
    %145 = arith.cmpf ogt, %143, %144 : vector<16x8xf32>
    %c0_160 = arith.constant 0 : index
    %c0_161 = arith.constant 0 : index
    %146 = vector.load %arg24[%c0_160, %c0_161] : memref<1x8xf32, #tpu.memory_space<vmem>>, vector<1x8xf32>
    %147 = vector.broadcast %146 : vector<1x8xf32> to vector<16x8xf32>
    %148 = arith.mulf %147, %143 : vector<16x8xf32>
    %149 = arith.select %145, %143, %148 : vector<16x8xi1>, vector<16x8xf32>
    %150 = arith.truncf %91 : vector<16x24xf32> to vector<16x24xbf16>
    %c0_162 = arith.constant 0 : index
    %c0_163 = arith.constant 0 : index
    %151 = vector.load %arg25[%c0_162, %c0_163] : memref<24x8xbf16, #tpu.memory_space<vmem>>, vector<24x8xbf16>
    %cst_164 = arith.constant dense<0.000000e+00> : vector<16x8xf32>
    %152 = tpu.matmul %150, %151, %cst_164 {dimension_numbers = #tpu.dot_dimension_numbers<[1], [0], [0], [1], [0, 0, 1, 1], [], []>} : vector<16x24xbf16>, vector<24x8xbf16>, vector<16x8xf32> -> vector<16x8xf32>
    %c0_165 = arith.constant 0 : index
    %c0_166 = arith.constant 0 : index
    %153 = vector.load %arg26[%c0_165, %c0_166] : memref<1x8xf32, #tpu.memory_space<vmem>>, vector<1x8xf32>
    %154 = vector.broadcast %153 : vector<1x8xf32> to vector<16x8xf32>
    %155 = arith.addf %152, %154 : vector<16x8xf32>
    %156 = arith.addf %149, %155 : vector<16x8xf32>
    %cst_167 = arith.constant 0.000000e+00 : f32
    %157 = vector.broadcast %cst_167 : f32 to vector<16x8xf32>
    %158 = arith.cmpf ogt, %156, %157 : vector<16x8xf32>
    %c0_168 = arith.constant 0 : index
    %c0_169 = arith.constant 0 : index
    %159 = vector.load %arg27[%c0_168, %c0_169] : memref<1x8xf32, #tpu.memory_space<vmem>>, vector<1x8xf32>
    %160 = vector.broadcast %159 : vector<1x8xf32> to vector<16x8xf32>
    %161 = arith.mulf %160, %156 : vector<16x8xf32>
    %162 = arith.select %158, %156, %161 : vector<16x8xi1>, vector<16x8xf32>
    %c0_170 = arith.constant 0 : index
    %c24_171 = arith.constant 24 : index
    %163 = vector.load %arg29[%c0_170, %c24_171] : memref<16x32xf32, #tpu.memory_space<vmem>>, vector<16x8xf32>
    tpu.vector_store %arg29[%c0_170, %c24_171], %162 {strides = array<i32>} : memref<16x32xf32, #tpu.memory_space<vmem>>, vector<16x8xf32>,
    %c0_172 = arith.constant 0 : index
    %c0_173 = arith.constant 0 : index
    %164 = vector.load %arg29[%c0_172, %c0_173] : memref<16x32xf32, #tpu.memory_space<vmem>>, vector<16x32xf32>
    %165 = vector.shape_cast %164 : vector<16x32xf32> to vector<1x16x32xf32>
    %c0_174 = arith.constant 0 : index
    %c0_175 = arith.constant 0 : index
    %c0_176 = arith.constant 0 : index
    %166 = vector.load %arg28[%c0_174, %c0_175, %c0_176] : memref<1x16x32xf32, #tpu.memory_space<vmem>>, vector<1x16x32xf32>
    tpu.vector_store %arg28[%c0_174, %c0_175, %c0_176], %165 {strides = array<i32>} : memref<1x16x32xf32, #tpu.memory_space<vmem>>, vector<1x16x32xf32>,
    return
  }
  func.func @transform_0(%arg0: i32) -> (i32, i32, i32) {
    %c0_i32 = arith.constant 0 : i32
    %c0_i32_0 = arith.constant 0 : i32
    %c0_i32_1 = arith.constant 0 : i32
    return %arg0, %c0_i32, %c0_i32_0 : i32, i32, i32
  }
  func.func @transform_1(%arg0: i32) -> (i32, i32) {
    %c0_i32 = arith.constant 0 : i32
    %c0_i32_0 = arith.constant 0 : i32
    %c0_i32_1 = arith.constant 0 : i32
    return %c0_i32, %c0_i32_0 : i32, i32
  }
  func.func @transform_2(%arg0: i32) -> (i32, i32) {
    %c0_i32 = arith.constant 0 : i32
    %c0_i32_0 = arith.constant 0 : i32
    %c0_i32_1 = arith.constant 0 : i32
    return %c0_i32, %c0_i32_0 : i32, i32
  }
  func.func @transform_3(%arg0: i32) -> (i32, i32) {
    %c0_i32 = arith.constant 0 : i32
    %c0_i32_0 = arith.constant 0 : i32
    %c0_i32_1 = arith.constant 0 : i32
    return %c0_i32, %c0_i32_0 : i32, i32
  }
  func.func @transform_4(%arg0: i32) -> (i32, i32) {
    %c0_i32 = arith.constant 0 : i32
    %c0_i32_0 = arith.constant 0 : i32
    %c0_i32_1 = arith.constant 0 : i32
    return %c0_i32, %c0_i32_0 : i32, i32
  }
  func.func @transform_5(%arg0: i32) -> (i32, i32) {
    %c0_i32 = arith.constant 0 : i32
    %c0_i32_0 = arith.constant 0 : i32
    %c0_i32_1 = arith.constant 0 : i32
    return %c0_i32, %c0_i32_0 : i32, i32
  }
  func.func @transform_6(%arg0: i32) -> (i32, i32) {
    %c0_i32 = arith.constant 0 : i32
    %c0_i32_0 = arith.constant 0 : i32
    %c0_i32_1 = arith.constant 0 : i32
    return %c0_i32, %c0_i32_0 : i32, i32
  }
  func.func @transform_7(%arg0: i32) -> (i32, i32) {
    %c0_i32 = arith.constant 0 : i32
    %c0_i32_0 = arith.constant 0 : i32
    %c0_i32_1 = arith.constant 0 : i32
    return %c0_i32, %c0_i32_0 : i32, i32
  }
  func.func @transform_8(%arg0: i32) -> (i32, i32) {
    %c0_i32 = arith.constant 0 : i32
    %c0_i32_0 = arith.constant 0 : i32
    %c0_i32_1 = arith.constant 0 : i32
    return %c0_i32, %c0_i32_0 : i32, i32
  }
  func.func @transform_9(%arg0: i32) -> (i32, i32) {
    %c0_i32 = arith.constant 0 : i32
    %c0_i32_0 = arith.constant 0 : i32
    %c0_i32_1 = arith.constant 0 : i32
    return %c0_i32, %c0_i32_0 : i32, i32
  }
  func.func @transform_10(%arg0: i32) -> (i32, i32) {
    %c0_i32 = arith.constant 0 : i32
    %c0_i32_0 = arith.constant 0 : i32
    %c0_i32_1 = arith.constant 0 : i32
    return %c0_i32, %c0_i32_0 : i32, i32
  }
  func.func @transform_11(%arg0: i32) -> (i32, i32) {
    %c0_i32 = arith.constant 0 : i32
    %c0_i32_0 = arith.constant 0 : i32
    %c0_i32_1 = arith.constant 0 : i32
    return %c0_i32, %c0_i32_0 : i32, i32
  }
  func.func @transform_12(%arg0: i32) -> (i32, i32) {
    %c0_i32 = arith.constant 0 : i32
    %c0_i32_0 = arith.constant 0 : i32
    %c0_i32_1 = arith.constant 0 : i32
    return %c0_i32, %c0_i32_0 : i32, i32
  }
  func.func @transform_13(%arg0: i32) -> (i32, i32) {
    %c0_i32 = arith.constant 0 : i32
    %c0_i32_0 = arith.constant 0 : i32
    %c0_i32_1 = arith.constant 0 : i32
    return %c0_i32, %c0_i32_0 : i32, i32
  }
  func.func @transform_14(%arg0: i32) -> (i32, i32) {
    %c0_i32 = arith.constant 0 : i32
    %c0_i32_0 = arith.constant 0 : i32
    %c0_i32_1 = arith.constant 0 : i32
    return %c0_i32, %c0_i32_0 : i32, i32
  }
  func.func @transform_15(%arg0: i32) -> (i32, i32) {
    %c0_i32 = arith.constant 0 : i32
    %c0_i32_0 = arith.constant 0 : i32
    %c0_i32_1 = arith.constant 0 : i32
    return %c0_i32, %c0_i32_0 : i32, i32
  }
  func.func @transform_16(%arg0: i32) -> (i32, i32) {
    %c0_i32 = arith.constant 0 : i32
    %c0_i32_0 = arith.constant 0 : i32
    %c0_i32_1 = arith.constant 0 : i32
    return %c0_i32, %c0_i32_0 : i32, i32
  }
  func.func @transform_17(%arg0: i32) -> (i32, i32) {
    %c0_i32 = arith.constant 0 : i32
    %c0_i32_0 = arith.constant 0 : i32
    %c0_i32_1 = arith.constant 0 : i32
    return %c0_i32, %c0_i32_0 : i32, i32
  }
  func.func @transform_18(%arg0: i32) -> (i32, i32) {
    %c0_i32 = arith.constant 0 : i32
    %c0_i32_0 = arith.constant 0 : i32
    %c0_i32_1 = arith.constant 0 : i32
    return %c0_i32, %c0_i32_0 : i32, i32
  }
  func.func @transform_19(%arg0: i32) -> (i32, i32) {
    %c0_i32 = arith.constant 0 : i32
    %c0_i32_0 = arith.constant 0 : i32
    %c0_i32_1 = arith.constant 0 : i32
    return %c0_i32, %c0_i32_0 : i32, i32
  }
  func.func @transform_20(%arg0: i32) -> (i32, i32) {
    %c0_i32 = arith.constant 0 : i32
    %c0_i32_0 = arith.constant 0 : i32
    %c0_i32_1 = arith.constant 0 : i32
    return %c0_i32, %c0_i32_0 : i32, i32
  }
  func.func @transform_21(%arg0: i32) -> (i32, i32) {
    %c0_i32 = arith.constant 0 : i32
    %c0_i32_0 = arith.constant 0 : i32
    %c0_i32_1 = arith.constant 0 : i32
    return %c0_i32, %c0_i32_0 : i32, i32
  }
  func.func @transform_22(%arg0: i32) -> (i32, i32) {
    %c0_i32 = arith.constant 0 : i32
    %c0_i32_0 = arith.constant 0 : i32
    %c0_i32_1 = arith.constant 0 : i32
    return %c0_i32, %c0_i32_0 : i32, i32
  }
  func.func @transform_23(%arg0: i32) -> (i32, i32) {
    %c0_i32 = arith.constant 0 : i32
    %c0_i32_0 = arith.constant 0 : i32
    %c0_i32_1 = arith.constant 0 : i32
    return %c0_i32, %c0_i32_0 : i32, i32
  }
  func.func @transform_24(%arg0: i32) -> (i32, i32) {
    %c0_i32 = arith.constant 0 : i32
    %c0_i32_0 = arith.constant 0 : i32
    %c0_i32_1 = arith.constant 0 : i32
    return %c0_i32, %c0_i32_0 : i32, i32
  }
  func.func @transform_25(%arg0: i32) -> (i32, i32) {
    %c0_i32 = arith.constant 0 : i32
    %c0_i32_0 = arith.constant 0 : i32
    %c0_i32_1 = arith.constant 0 : i32
    return %c0_i32, %c0_i32_0 : i32, i32
  }
  func.func @transform_26(%arg0: i32) -> (i32, i32) {
    %c0_i32 = arith.constant 0 : i32
    %c0_i32_0 = arith.constant 0 : i32
    %c0_i32_1 = arith.constant 0 : i32
    return %c0_i32, %c0_i32_0 : i32, i32
  }
  func.func @transform_27(%arg0: i32) -> (i32, i32, i32) {
    %c0_i32 = arith.constant 0 : i32
    %c0_i32_0 = arith.constant 0 : i32
    %c0_i32_1 = arith.constant 0 : i32
    return %arg0, %c0_i32, %c0_i32_0 : i32, i32, i32
  }
}

</mosaic_0001>

<llo_original>
// kernel: _lambda_.2
$region0: #{_lambda_.2}
  #allocation0 [shape = 'u32[]', space=smem, size = 0x4, offset = 0x4, fixed_abs, tag = 'smem constant byte address 0x4 - core index']
  #allocation1 [shape = 'u32[144,128]{1,0:T(1,128)}', space=vmem, size = 0x12000, scoped, tag = 'internal scratch']
  #allocation2 [shape = 'f32[16,32]{1,0:T(8,128)}', space=vmem, size = 0x2000, scoped, tag = 'scratch operand']
  #allocation3 [shape = 'f32[24,24]{1,0:T(8,128)}', space=vmem, size = 0x3000, scoped, tag = 'scratch operand']
  #allocation4 [shape = 'f32[16,120]{1,0:T(8,128)}', space=vmem, size = 0x2000, scoped, tag = 'scratch operand']
  %s0 = inlined_call_operand.hbm [shape: f32[2,16,32], index: 0, kind: input, shape index: {}]
  %s1 = inlined_call_operand.vmem [shape: bf16[32,16], index: 1, kind: input, shape index: {}]
  %s2 = inlined_call_operand.vmem [shape: f32[1,16], index: 2, kind: input, shape index: {}]
  %s3 = inlined_call_operand.vmem [shape: f32[1,16], index: 3, kind: input, shape index: {}]
  %s4 = inlined_call_operand.vmem [shape: f32[1,16], index: 4, kind: input, shape index: {}]
  %s5 = inlined_call_operand.vmem [shape: bf16[80,8], index: 5, kind: input, shape index: {}]
  %s6 = inlined_call_operand.vmem [shape: f32[1,8], index: 6, kind: input, shape index: {}, may-alias: {6,10,17,21}]
  %s7 = inlined_call_operand.hbm [shape: f32[1,8], index: 7, kind: input, shape index: {}]
  %s8 = inlined_call_operand.vmem [shape: f32[1,8], index: 8, kind: input, shape index: {}, may-alias: {8,12,15,19,23,26}]
  %s9 = inlined_call_operand.hbm [shape: bf16[40,8], index: 9, kind: input, shape index: {}]
  %s10 = inlined_call_operand.vmem [shape: f32[1,8], index: 10, kind: input, shape index: {}, may-alias: {6,10,17,21}]
  %s11 = inlined_call_operand.hbm [shape: f32[1,8], index: 11, kind: input, shape index: {}]
  %s12 = inlined_call_operand.vmem [shape: f32[1,8], index: 12, kind: input, shape index: {}, may-alias: {8,12,15,19,23,26}]
  %s13 = inlined_call_operand.vmem [shape: bf16[16,8], index: 13, kind: input, shape index: {}]
  %s14 = inlined_call_operand.hbm [shape: f32[1,8], index: 14, kind: input, shape index: {}]
  %s15 = inlined_call_operand.vmem [shape: f32[1,8], index: 15, kind: input, shape index: {}, may-alias: {8,12,15,19,23,26}]
  %s16 = inlined_call_operand.vmem [shape: bf16[120,8], index: 16, kind: input, shape index: {}]
  %s17 = inlined_call_operand.vmem [shape: f32[1,8], index: 17, kind: input, shape index: {}, may-alias: {6,10,17,21}]
  %s18 = inlined_call_operand.hbm [shape: f32[1,8], index: 18, kind: input, shape index: {}]
  %s19 = inlined_call_operand.vmem [shape: f32[1,8], index: 19, kind: input, shape index: {}, may-alias: {8,12,15,19,23,26}]
  %s20 = inlined_call_operand.vmem [shape: bf16[40,8], index: 20, kind: input, shape index: {}]
  %s21 = inlined_call_operand.vmem [shape: f32[1,8], index: 21, kind: input, shape index: {}, may-alias: {6,10,17,21}]
  %s22 = inlined_call_operand.hbm [shape: f32[1,8], index: 22, kind: input, shape index: {}]
  %s23 = inlined_call_operand.vmem [shape: f32[1,8], index: 23, kind: input, shape index: {}, may-alias: {8,12,15,19,23,26}]
  %s24 = inlined_call_operand.hbm [shape: bf16[24,8], index: 24, kind: input, shape index: {}]
  %s25 = inlined_call_operand.hbm [shape: f32[1,8], index: 25, kind: input, shape index: {}]
  %s26 = inlined_call_operand.vmem [shape: f32[1,8], index: 26, kind: input, shape index: {}, may-alias: {8,12,15,19,23,26}]
  %s27 = inlined_call_operand.vmem [shape: f32[2,16,32], index: 27, kind: output, shape index: {}]
  %s28 = sld [smem:[#allocation0]]
  $region177: #{_lambda_.2} parent=0
    _
  %s30 = ssub.s32 1, %s28
  %s31 = scalar_select 0, %s30, %s28
  $region1: #{_lambda_.2} parent=0
    #allocation5 [shape = 'u8[16384]{0}', space=vmem, size = 0x4000, scoped, tag = 'input window, operand 0']
    #allocation6 [shape = 's32[2]{0}', space=sflag, size = 0x8, scoped, tag = 'scoped memory for _lambda_.2']
    #allocation7 [shape = 'u8[512]{0}', space=vmem, size = 0x400, scoped, tag = 'input window, operand 7, single buffered']
    #allocation8 [shape = 's32[1]{0}', space=sflag, size = 0x4, scoped, tag = 'scoped memory for _lambda_.2']
    #allocation9 [shape = 'u8[10240]{0}', space=vmem, size = 0x2800, scoped, tag = 'input window, operand 9, single buffered']
    #allocation10 [shape = 'u8[512]{0}', space=vmem, size = 0x400, scoped, tag = 'input window, operand 11, single buffered']
    #allocation11 [shape = 's32[1]{0}', space=sflag, size = 0x4, scoped, tag = 'scoped memory for _lambda_.2']
    #allocation12 [shape = 'u8[512]{0}', space=vmem, size = 0x400, scoped, tag = 'input window, operand 14, single buffered']
    #allocation13 [shape = 'u8[512]{0}', space=vmem, size = 0x400, scoped, tag = 'input window, operand 18, single buffered']
    #allocation14 [shape = 's32[1]{0}', space=sflag, size = 0x4, scoped, tag = 'scoped memory for _lambda_.2']
    #allocation15 [shape = 'u8[512]{0}', space=vmem, size = 0x400, scoped, tag = 'input window, operand 22, single buffered']
    #allocation16 [shape = 'u8[6144]{0}', space=vmem, size = 0x1800, scoped, tag = 'input window, operand 24, single buffered']
    #allocation17 [shape = 's32[1]{0}', space=sflag, size = 0x4, scoped, tag = 'scoped memory for _lambda_.2']
    #allocation18 [shape = 'u8[512]{0}', space=vmem, size = 0x400, scoped, tag = 'input window, operand 25, single buffered']
    %32 = vsyncpa [#allocation6], 0
    %s33 = scalar_lea.sflag [#allocation6], 1
    %34 = vsyncpa %s33, 0
    %35 = vsyncpa [#allocation8], 0
    %36 = vsyncpa [#allocation11], 0
    %37 = vsyncpa [#allocation14], 0
    %38 = vsyncpa [#allocation17], 0
    loop: start=0, step=1, limit=4
    $region2: #{_lambda_.2} parent=1 // loop_pre_header
      _
    $region3: #{_lambda_.2} parent=1 // loop_header
      %s40 = sphi 0, %s44
      %p41 = scmp.ge.s32.totalorder %s40, 4
      %s50 = sphi 0, %s52
      %s53 = sphi 0, %s50
      %s54 = sphi 0, %s53
      %s70 = sphi 0, %s54
      %s74 = sphi 0, %s74
      %s76 = sphi 0, %s74
      %s77 = sphi 0, %s76
      %s91 = sphi 0, %s77
      %s95 = sphi 0, %s95
      %s97 = sphi 0, %s95
      %s98 = sphi 0, %s97
      %s112 = sphi 0, %s98
      %s116 = sphi 0, %s116
      %s118 = sphi 0, %s116
      %s119 = sphi 0, %s118
      %s133 = sphi 0, %s119
      %s137 = sphi 0, %s137
      %s139 = sphi 0, %s137
      %s140 = sphi 0, %s139
      %s154 = sphi 0, %s140
      %s158 = sphi 0, %s158
      %s160 = sphi 0, %s158
      %s161 = sphi 0, %s160
      %s175 = sphi 0, %s161
      %s179 = sphi 0, %s179
      %s181 = sphi 0, %s179
      %s182 = sphi 0, %s181
      %s196 = sphi 0, %s182
      %s200 = sphi 0, %s200
      %s202 = sphi 0, %s200
      %s203 = sphi 0, %s202
      %s217 = sphi 0, %s203
      %s221 = sphi 0, %s221
      %s223 = sphi 0, %s221
      %s224 = sphi 0, %s223
      %s238 = sphi 0, %s224
      %s242 = sphi 0, %s242
      %s244 = sphi 0, %s242
      %s245 = sphi 0, %s244
      %s259 = sphi 0, %s245
      %s263 = sphi 0, %s263
      %s265 = sphi 0, %s263
      %s266 = sphi 0, %s265
      %s280 = sphi 0, %s266
      %s284 = sphi 0, %s284
      %s286 = sphi 0, %s284
      %s287 = sphi 0, %s286
      %s301 = sphi 0, %s287
      %s305 = sphi 0, %s305
      %s307 = sphi 0, %s305
      %s308 = sphi 0, %s307
      %s322 = sphi 0, %s308
      %s326 = sphi 0, %s326
      %s328 = sphi 0, %s326
      %s329 = sphi 0, %s328
      %s343 = sphi 0, %s329
      %s347 = sphi 0, %s347
      %s349 = sphi 0, %s347
      %s350 = sphi 0, %s349
      %s364 = sphi 0, %s350
      %s368 = sphi 0, %s368
      %s370 = sphi 0, %s368
      %s371 = sphi 0, %s370
      %s385 = sphi 0, %s371
      %s389 = sphi 0, %s389
      %s391 = sphi 0, %s389
      %s392 = sphi 0, %s391
      %s406 = sphi 0, %s392
      %s410 = sphi 0, %s410
      %s412 = sphi 0, %s410
      %s413 = sphi 0, %s412
      %s427 = sphi 0, %s413
      %s431 = sphi 0, %s431
      %s433 = sphi 0, %s431
      %s434 = sphi 0, %s433
      %s448 = sphi 0, %s434
      %s452 = sphi 0, %s452
      %s454 = sphi 0, %s452
      %s455 = sphi 0, %s454
      %s469 = sphi 0, %s455
      %s473 = sphi 0, %s473
      %s475 = sphi 0, %s473
      %s476 = sphi 0, %s475
      %s490 = sphi 0, %s476
      %s494 = sphi 0, %s494
      %s496 = sphi 0, %s494
      %s497 = sphi 0, %s496
      %s511 = sphi 0, %s497
      %s515 = sphi 0, %s515
      %s517 = sphi 0, %s515
      %s518 = sphi 0, %s517
      %s532 = sphi 0, %s518
      %s536 = sphi 0, %s536
      %s538 = sphi 0, %s536
      %s539 = sphi 0, %s538
      %s553 = sphi 0, %s539
      %s557 = sphi 0, %s557
      %s559 = sphi 0, %s557
      %s560 = sphi 0, %s559
      %s574 = sphi 0, %s560
      %s578 = sphi 0, %s578
      %s580 = sphi 0, %s578
      %s581 = sphi 0, %s580
      %s595 = sphi 0, %s581
      %s599 = sphi 0, %s599
      %s601 = sphi 0, %s599
      %s602 = sphi 0, %s601
      %s616 = sphi 0, %s602
      %s622 = sphi 0, %s624
      %s625 = sphi 0, %s622
      %s626 = sphi 0, %s625
      %s642 = sphi 0, %s626
    $region4: #{_lambda_.2} parent=1 // loop_header_branch
      %43 = sbr.rel (%p41) target = $region8
    $region5: #{_lambda_.2} parent=1 // loop_body
      %s45 = ssub.s32 %s40, 1
      %s46 = ssub.s32 %s40, 2
      %s47 = sadd.s32 %s40, 1
      %s48 = ssub.s32 %s40, %s47
      %p49 = scmp.eq.s32.totalorder %s48, 0
      %s51 = sadd.s32 %s50, 1
      %s52 = scalar_select %p49, %s50, %s51
      %p55 = pneg %p49
      %p56 = scmp.eq.s32.totalorder %s40, 1
      %p57 = por %p55, %p56
      %p58 = scmp.ne.s32.totalorder %s50, %s53
      %p59 = scmp.eq.s32.totalorder %s40, 0
      %p60 = por %p58, %p59
      %p61 = scmp.ne.s32.totalorder %s50, %s53
      %p62 = scmp.eq.s32.totalorder %s45, 1
      %p63 = por %p61, %p62
      %p64 = scmp.ne.s32.totalorder %s53, %s54
      %p65 = scmp.eq.s32.totalorder %s45, 0
      %p66 = por %p64, %p65
      %p67 = scmp.ne.s32.totalorder %s53, %s54
      %p68 = scmp.eq.s32.totalorder %s46, 1
      %p69 = por %p67, %p68
      %p71 = scmp.ne.s32.totalorder %s54, %s70
      %p72 = scmp.eq.s32.totalorder %s46, 0
      %p73 = por %p71, %p72
      %s75 = sadd.s32 %s74, 1
      %p78 = scmp.eq.s32.totalorder %s40, 1
      %p79 = scmp.ne.s32.totalorder %s74, %s76
      %p80 = scmp.eq.s32.totalorder %s40, 0
      %p81 = por %p79, %p80
      %p82 = scmp.ne.s32.totalorder %s74, %s76
      %p83 = scmp.eq.s32.totalorder %s45, 1
      %p84 = por %p82, %p83
      %p85 = scmp.ne.s32.totalorder %s76, %s77
      %p86 = scmp.eq.s32.totalorder %s45, 0
      %p87 = por %p85, %p86
      %p88 = scmp.ne.s32.totalorder %s76, %s77
      %p89 = scmp.eq.s32.totalorder %s46, 1
      %p90 = por %p88, %p89
      %p92 = scmp.ne.s32.totalorder %s77, %s91
      %p93 = scmp.eq.s32.totalorder %s46, 0
      %p94 = por %p92, %p93
      %s96 = sadd.s32 %s95, 1
      %p99 = scmp.eq.s32.totalorder %s40, 1
      %p100 = scmp.ne.s32.totalorder %s95, %s97
      %p101 = scmp.eq.s32.totalorder %s40, 0
      %p102 = por %p100, %p101
      %p103 = scmp.ne.s32.totalorder %s95, %s97
      %p104 = scmp.eq.s32.totalorder %s45, 1
      %p105 = por %p103, %p104
      %p106 = scmp.ne.s32.totalorder %s97, %s98
      %p107 = scmp.eq.s32.totalorder %s45, 0
      %p108 = por %p106, %p107
      %p109 = scmp.ne.s32.totalorder %s97, %s98
      %p110 = scmp.eq.s32.totalorder %s46, 1
      %p111 = por %p109, %p110
      %p113 = scmp.ne.s32.totalorder %s98, %s112
      %p114 = scmp.eq.s32.totalorder %s46, 0
      %p115 = por %p113, %p114
      %s117 = sadd.s32 %s116, 1
      %p120 = scmp.eq.s32.totalorder %s40, 1
      %p121 = scmp.ne.s32.totalorder %s116, %s118
      %p122 = scmp.eq.s32.totalorder %s40, 0
      %p123 = por %p121, %p122
      %p124 = scmp.ne.s32.totalorder %s116, %s118
      %p125 = scmp.eq.s32.totalorder %s45, 1
      %p126 = por %p124, %p125
      %p127 = scmp.ne.s32.totalorder %s118, %s119
      %p128 = scmp.eq.s32.totalorder %s45, 0
      %p129 = por %p127, %p128
      %p130 = scmp.ne.s32.totalorder %s118, %s119
      %p131 = scmp.eq.s32.totalorder %s46, 1
      %p132 = por %p130, %p131
      %p134 = scmp.ne.s32.totalorder %s119, %s133
      %p135 = scmp.eq.s32.totalorder %s46, 0
      %p136 = por %p134, %p135
      %s138 = sadd.s32 %s137, 1
      %p141 = scmp.eq.s32.totalorder %s40, 1
      %p142 = scmp.ne.s32.totalorder %s137, %s139
      %p143 = scmp.eq.s32.totalorder %s40, 0
      %p144 = por %p142, %p143
      %p145 = scmp.ne.s32.totalorder %s137, %s139
      %p146 = scmp.eq.s32.totalorder %s45, 1
      %p147 = por %p145, %p146
      %p148 = scmp.ne.s32.totalorder %s139, %s140
      %p149 = scmp.eq.s32.totalorder %s45, 0
      %p150 = por %p148, %p149
      %p151 = scmp.ne.s32.totalorder %s139, %s140
      %p152 = scmp.eq.s32.totalorder %s46, 1
      %p153 = por %p151, %p152
      %p155 = scmp.ne.s32.totalorder %s140, %s154
      %p156 = scmp.eq.s32.totalorder %s46, 0
      %p157 = por %p155, %p156
      %s159 = sadd.s32 %s158, 1
      %p162 = scmp.eq.s32.totalorder %s40, 1
      %p163 = scmp.ne.s32.totalorder %s158, %s160
      %p164 = scmp.eq.s32.totalorder %s40, 0
      %p165 = por %p163, %p164
      %p166 = scmp.ne.s32.totalorder %s158, %s160
      %p167 = scmp.eq.s32.totalorder %s45, 1
      %p168 = por %p166, %p167
      %p169 = scmp.ne.s32.totalorder %s160, %s161
      %p170 = scmp.eq.s32.totalorder %s45, 0
      %p171 = por %p169, %p170
      %p172 = scmp.ne.s32.totalorder %s160, %s161
      %p173 = scmp.eq.s32.totalorder %s46, 1
      %p174 = por %p172, %p173
      %p176 = scmp.ne.s32.totalorder %s161, %s175
      %p177 = scmp.eq.s32.totalorder %s46, 0
      %p178 = por %p176, %p177
      %s180 = sadd.s32 %s179, 1
      %p183 = scmp.eq.s32.totalorder %s40, 1
      %p184 = scmp.ne.s32.totalorder %s179, %s181
      %p185 = scmp.eq.s32.totalorder %s40, 0
      %p186 = por %p184, %p185
      %p187 = scmp.ne.s32.totalorder %s179, %s181
      %p188 = scmp.eq.s32.totalorder %s45, 1
      %p189 = por %p187, %p188
      %p190 = scmp.ne.s32.totalorder %s181, %s182
      %p191 = scmp.eq.s32.totalorder %s45, 0
      %p192 = por %p190, %p191
      %p193 = scmp.ne.s32.totalorder %s181, %s182
      %p194 = scmp.eq.s32.totalorder %s46, 1
      %p195 = por %p193, %p194
      %p197 = scmp.ne.s32.totalorder %s182, %s196
      %p198 = scmp.eq.s32.totalorder %s46, 0
      %p199 = por %p197, %p198
      %s201 = sadd.s32 %s200, 1
      %p204 = scmp.eq.s32.totalorder %s40, 1
      %p205 = scmp.ne.s32.totalorder %s200, %s202
      %p206 = scmp.eq.s32.totalorder %s40, 0
      %p207 = por %p205, %p206
      %p208 = scmp.ne.s32.totalorder %s200, %s202
      %p209 = scmp.eq.s32.totalorder %s45, 1
      %p210 = por %p208, %p209
      %p211 = scmp.ne.s32.totalorder %s202, %s203
      %p212 = scmp.eq.s32.totalorder %s45, 0
      %p213 = por %p211, %p212
      %p214 = scmp.ne.s32.totalorder %s202, %s203
      %p215 = scmp.eq.s32.totalorder %s46, 1
      %p216 = por %p214, %p215
      %p218 = scmp.ne.s32.totalorder %s203, %s217
      %p219 = scmp.eq.s32.totalorder %s46, 0
      %p220 = por %p218, %p219
      %s222 = sadd.s32 %s221, 1
      %p225 = scmp.eq.s32.totalorder %s40, 1
      %p226 = scmp.ne.s32.totalorder %s221, %s223
      %p227 = scmp.eq.s32.totalorder %s40, 0
      %p228 = por %p226, %p227
      %p229 = scmp.ne.s32.totalorder %s221, %s223
      %p230 = scmp.eq.s32.totalorder %s45, 1
      %p231 = por %p229, %p230
      %p232 = scmp.ne.s32.totalorder %s223, %s224
      %p233 = scmp.eq.s32.totalorder %s45, 0
      %p234 = por %p232, %p233
      %p235 = scmp.ne.s32.totalorder %s223, %s224
      %p236 = scmp.eq.s32.totalorder %s46, 1
      %p237 = por %p235, %p236
      %p239 = scmp.ne.s32.totalorder %s224, %s238
      %p240 = scmp.eq.s32.totalorder %s46, 0
      %p241 = por %p239, %p240
      %s243 = sadd.s32 %s242, 1
      %p246 = scmp.eq.s32.totalorder %s40, 1
      %p247 = scmp.ne.s32.totalorder %s242, %s244
      %p248 = scmp.eq.s32.totalorder %s40, 0
      %p249 = por %p247, %p248
      %p250 = scmp.ne.s32.totalorder %s242, %s244
      %p251 = scmp.eq.s32.totalorder %s45, 1
      %p252 = por %p250, %p251
      %p253 = scmp.ne.s32.totalorder %s244, %s245
      %p254 = scmp.eq.s32.totalorder %s45, 0
      %p255 = por %p253, %p254
      %p256 = scmp.ne.s32.totalorder %s244, %s245
      %p257 = scmp.eq.s32.totalorder %s46, 1
      %p258 = por %p256, %p257
      %p260 = scmp.ne.s32.totalorder %s245, %s259
      %p261 = scmp.eq.s32.totalorder %s46, 0
      %p262 = por %p260, %p261
      %s264 = sadd.s32 %s263, 1
      %p267 = scmp.eq.s32.totalorder %s40, 1
      %p268 = scmp.ne.s32.totalorder %s263, %s265
      %p269 = scmp.eq.s32.totalorder %s40, 0
      %p270 = por %p268, %p269
      %p271 = scmp.ne.s32.totalorder %s263, %s265
      %p272 = scmp.eq.s32.totalorder %s45, 1
      %p273 = por %p271, %p272
      %p274 = scmp.ne.s32.totalorder %s265, %s266
      %p275 = scmp.eq.s32.totalorder %s45, 0
      %p276 = por %p274, %p275
      %p277 = scmp.ne.s32.totalorder %s265, %s266
      %p278 = scmp.eq.s32.totalorder %s46, 1
      %p279 = por %p277, %p278
      %p281 = scmp.ne.s32.totalorder %s266, %s280
      %p282 = scmp.eq.s32.totalorder %s46, 0
      %p283 = por %p281, %p282
      %s285 = sadd.s32 %s284, 1
      %p288 = scmp.eq.s32.totalorder %s40, 1
      %p289 = scmp.ne.s32.totalorder %s284, %s286
      %p290 = scmp.eq.s32.totalorder %s40, 0
      %p291 = por %p289, %p290
      %p292 = scmp.ne.s32.totalorder %s284, %s286
      %p293 = scmp.eq.s32.totalorder %s45, 1
      %p294 = por %p292, %p293
      %p295 = scmp.ne.s32.totalorder %s286, %s287
      %p296 = scmp.eq.s32.totalorder %s45, 0
      %p297 = por %p295, %p296
      %p298 = scmp.ne.s32.totalorder %s286, %s287
      %p299 = scmp.eq.s32.totalorder %s46, 1
      %p300 = por %p298, %p299
      %p302 = scmp.ne.s32.totalorder %s287, %s301
      %p303 = scmp.eq.s32.totalorder %s46, 0
      %p304 = por %p302, %p303
      %s306 = sadd.s32 %s305, 1
      %p309 = scmp.eq.s32.totalorder %s40, 1
      %p310 = scmp.ne.s32.totalorder %s305, %s307
      %p311 = scmp.eq.s32.totalorder %s40, 0
      %p312 = por %p310, %p311
      %p313 = scmp.ne.s32.totalorder %s305, %s307
      %p314 = scmp.eq.s32.totalorder %s45, 1
      %p315 = por %p313, %p314
      %p316 = scmp.ne.s32.totalorder %s307, %s308
      %p317 = scmp.eq.s32.totalorder %s45, 0
      %p318 = por %p316, %p317
      %p319 = scmp.ne.s32.totalorder %s307, %s308
      %p320 = scmp.eq.s32.totalorder %s46, 1
      %p321 = por %p319, %p320
      %p323 = scmp.ne.s32.totalorder %s308, %s322
      %p324 = scmp.eq.s32.totalorder %s46, 0
      %p325 = por %p323, %p324
      %s327 = sadd.s32 %s326, 1
      %p330 = scmp.eq.s32.totalorder %s40, 1
      %p331 = scmp.ne.s32.totalorder %s326, %s328
      %p332 = scmp.eq.s32.totalorder %s40, 0
      %p333 = por %p331, %p332
      %p334 = scmp.ne.s32.totalorder %s326, %s328
      %p335 = scmp.eq.s32.totalorder %s45, 1
      %p336 = por %p334, %p335
      %p337 = scmp.ne.s32.totalorder %s328, %s329
      %p338 = scmp.eq.s32.totalorder %s45, 0
      %p339 = por %p337, %p338
      %p340 = scmp.ne.s32.totalorder %s328, %s329
      %p341 = scmp.eq.s32.totalorder %s46, 1
      %p342 = por %p340, %p341
      %p344 = scmp.ne.s32.totalorder %s329, %s343
      %p345 = scmp.eq.s32.totalorder %s46, 0
      %p346 = por %p344, %p345
      %s348 = sadd.s32 %s347, 1
      %p351 = scmp.eq.s32.totalorder %s40, 1
      %p352 = scmp.ne.s32.totalorder %s347, %s349
      %p353 = scmp.eq.s32.totalorder %s40, 0
      %p354 = por %p352, %p353
      %p355 = scmp.ne.s32.totalorder %s347, %s349
      %p356 = scmp.eq.s32.totalorder %s45, 1
      %p357 = por %p355, %p356
      %p358 = scmp.ne.s32.totalorder %s349, %s350
      %p359 = scmp.eq.s32.totalorder %s45, 0
      %p360 = por %p358, %p359
      %p361 = scmp.ne.s32.totalorder %s349, %s350
      %p362 = scmp.eq.s32.totalorder %s46, 1
      %p363 = por %p361, %p362
      %p365 = scmp.ne.s32.totalorder %s350, %s364
      %p366 = scmp.eq.s32.totalorder %s46, 0
      %p367 = por %p365, %p366
      %s369 = sadd.s32 %s368, 1
      %p372 = scmp.eq.s32.totalorder %s40, 1
      %p373 = scmp.ne.s32.totalorder %s368, %s370
      %p374 = scmp.eq.s32.totalorder %s40, 0
      %p375 = por %p373, %p374
      %p376 = scmp.ne.s32.totalorder %s368, %s370
      %p377 = scmp.eq.s32.totalorder %s45, 1
      %p378 = por %p376, %p377
      %p379 = scmp.ne.s32.totalorder %s370, %s371
      %p380 = scmp.eq.s32.totalorder %s45, 0
      %p381 = por %p379, %p380
      %p382 = scmp.ne.s32.totalorder %s370, %s371
      %p383 = scmp.eq.s32.totalorder %s46, 1
      %p384 = por %p382, %p383
      %p386 = scmp.ne.s32.totalorder %s371, %s385
      %p387 = scmp.eq.s32.totalorder %s46, 0
      %p388 = por %p386, %p387
      %s390 = sadd.s32 %s389, 1
      %p393 = scmp.eq.s32.totalorder %s40, 1
      %p394 = scmp.ne.s32.totalorder %s389, %s391
      %p395 = scmp.eq.s32.totalorder %s40, 0
      %p396 = por %p394, %p395
      %p397 = scmp.ne.s32.totalorder %s389, %s391
      %p398 = scmp.eq.s32.totalorder %s45, 1
      %p399 = por %p397, %p398
      %p400 = scmp.ne.s32.totalorder %s391, %s392
      %p401 = scmp.eq.s32.totalorder %s45, 0
      %p402 = por %p400, %p401
      %p403 = scmp.ne.s32.totalorder %s391, %s392
      %p404 = scmp.eq.s32.totalorder %s46, 1
      %p405 = por %p403, %p404
      %p407 = scmp.ne.s32.totalorder %s392, %s406
      %p408 = scmp.eq.s32.totalorder %s46, 0
      %p409 = por %p407, %p408
      %s411 = sadd.s32 %s410, 1
      %p414 = scmp.eq.s32.totalorder %s40, 1
      %p415 = scmp.ne.s32.totalorder %s410, %s412
      %p416 = scmp.eq.s32.totalorder %s40, 0
      %p417 = por %p415, %p416
      %p418 = scmp.ne.s32.totalorder %s410, %s412
      %p419 = scmp.eq.s32.totalorder %s45, 1
      %p420 = por %p418, %p419
      %p421 = scmp.ne.s32.totalorder %s412, %s413
      %p422 = scmp.eq.s32.totalorder %s45, 0
      %p423 = por %p421, %p422
      %p424 = scmp.ne.s32.totalorder %s412, %s413
      %p425 = scmp.eq.s32.totalorder %s46, 1
      %p426 = por %p424, %p425
      %p428 = scmp.ne.s32.totalorder %s413, %s427
      %p429 = scmp.eq.s32.totalorder %s46, 0
      %p430 = por %p428, %p429
      %s432 = sadd.s32 %s431, 1
      %p435 = scmp.eq.s32.totalorder %s40, 1
      %p436 = scmp.ne.s32.totalorder %s431, %s433
      %p437 = scmp.eq.s32.totalorder %s40, 0
      %p438 = por %p436, %p437
      %p439 = scmp.ne.s32.totalorder %s431, %s433
      %p440 = scmp.eq.s32.totalorder %s45, 1
      %p441 = por %p439, %p440
      %p442 = scmp.ne.s32.totalorder %s433, %s434
      %p443 = scmp.eq.s32.totalorder %s45, 0
      %p444 = por %p442, %p443
      %p445 = scmp.ne.s32.totalorder %s433, %s434
      %p446 = scmp.eq.s32.totalorder %s46, 1
      %p447 = por %p445, %p446
      %p449 = scmp.ne.s32.totalorder %s434, %s448
      %p450 = scmp.eq.s32.totalorder %s46, 0
      %p451 = por %p449, %p450
      %s453 = sadd.s32 %s452, 1
      %p456 = scmp.eq.s32.totalorder %s40, 1
      %p457 = scmp.ne.s32.totalorder %s452, %s454
      %p458 = scmp.eq.s32.totalorder %s40, 0
      %p459 = por %p457, %p458
      %p460 = scmp.ne.s32.totalorder %s452, %s454
      %p461 = scmp.eq.s32.totalorder %s45, 1
      %p462 = por %p460, %p461
      %p463 = scmp.ne.s32.totalorder %s454, %s455
      %p464 = scmp.eq.s32.totalorder %s45, 0
      %p465 = por %p463, %p464
      %p466 = scmp.ne.s32.totalorder %s454, %s455
      %p467 = scmp.eq.s32.totalorder %s46, 1
      %p468 = por %p466, %p467
      %p470 = scmp.ne.s32.totalorder %s455, %s469
      %p471 = scmp.eq.s32.totalorder %s46, 0
      %p472 = por %p470, %p471
      %s474 = sadd.s32 %s473, 1
      %p477 = scmp.eq.s32.totalorder %s40, 1
      %p478 = scmp.ne.s32.totalorder %s473, %s475
      %p479 = scmp.eq.s32.totalorder %s40, 0
      %p480 = por %p478, %p479
      %p481 = scmp.ne.s32.totalorder %s473, %s475
      %p482 = scmp.eq.s32.totalorder %s45, 1
      %p483 = por %p481, %p482
      %p484 = scmp.ne.s32.totalorder %s475, %s476
      %p485 = scmp.eq.s32.totalorder %s45, 0
      %p486 = por %p484, %p485
      %p487 = scmp.ne.s32.totalorder %s475, %s476
      %p488 = scmp.eq.s32.totalorder %s46, 1
      %p489 = por %p487, %p488
      %p491 = scmp.ne.s32.totalorder %s476, %s490
      %p492 = scmp.eq.s32.totalorder %s46, 0
      %p493 = por %p491, %p492
      %s495 = sadd.s32 %s494, 1
      %p498 = scmp.eq.s32.totalorder %s40, 1
      %p499 = scmp.ne.s32.totalorder %s494, %s496
      %p500 = scmp.eq.s32.totalorder %s40, 0
      %p501 = por %p499, %p500
      %p502 = scmp.ne.s32.totalorder %s494, %s496
      %p503 = scmp.eq.s32.totalorder %s45, 1
      %p504 = por %p502, %p503
      %p505 = scmp.ne.s32.totalorder %s496, %s497
      %p506 = scmp.eq.s32.totalorder %s45, 0
      %p507 = por %p505, %p506
      %p508 = scmp.ne.s32.totalorder %s496, %s497
      %p509 = scmp.eq.s32.totalorder %s46, 1
      %p510 = por %p508, %p509
      %p512 = scmp.ne.s32.totalorder %s497, %s511
      %p513 = scmp.eq.s32.totalorder %s46, 0
      %p514 = por %p512, %p513
      %s516 = sadd.s32 %s515, 1
      %p519 = scmp.eq.s32.totalorder %s40, 1
      %p520 = scmp.ne.s32.totalorder %s515, %s517
      %p521 = scmp.eq.s32.totalorder %s40, 0
      %p522 = por %p520, %p521
      %p523 = scmp.ne.s32.totalorder %s515, %s517
      %p524 = scmp.eq.s32.totalorder %s45, 1
      %p525 = por %p523, %p524
      %p526 = scmp.ne.s32.totalorder %s517, %s518
      %p527 = scmp.eq.s32.totalorder %s45, 0
      %p528 = por %p526, %p527
      %p529 = scmp.ne.s32.totalorder %s517, %s518
      %p530 = scmp.eq.s32.totalorder %s46, 1
      %p531 = por %p529, %p530
      %p533 = scmp.ne.s32.totalorder %s518, %s532
      %p534 = scmp.eq.s32.totalorder %s46, 0
      %p535 = por %p533, %p534
      %s537 = sadd.s32 %s536, 1
      %p540 = scmp.eq.s32.totalorder %s40, 1
      %p541 = scmp.ne.s32.totalorder %s536, %s538
      %p542 = scmp.eq.s32.totalorder %s40, 0
      %p543 = por %p541, %p542
      %p544 = scmp.ne.s32.totalorder %s536, %s538
      %p545 = scmp.eq.s32.totalorder %s45, 1
      %p546 = por %p544, %p545
      %p547 = scmp.ne.s32.totalorder %s538, %s539
      %p548 = scmp.eq.s32.totalorder %s45, 0
      %p549 = por %p547, %p548
      %p550 = scmp.ne.s32.totalorder %s538, %s539
      %p551 = scmp.eq.s32.totalorder %s46, 1
      %p552 = por %p550, %p551
      %p554 = scmp.ne.s32.totalorder %s539, %s553
      %p555 = scmp.eq.s32.totalorder %s46, 0
      %p556 = por %p554, %p555
      %s558 = sadd.s32 %s557, 1
      %p561 = scmp.eq.s32.totalorder %s40, 1
      %p562 = scmp.ne.s32.totalorder %s557, %s559
      %p563 = scmp.eq.s32.totalorder %s40, 0
      %p564 = por %p562, %p563
      %p565 = scmp.ne.s32.totalorder %s557, %s559
      %p566 = scmp.eq.s32.totalorder %s45, 1
      %p567 = por %p565, %p566
      %p568 = scmp.ne.s32.totalorder %s559, %s560
      %p569 = scmp.eq.s32.totalorder %s45, 0
      %p570 = por %p568, %p569
      %p571 = scmp.ne.s32.totalorder %s559, %s560
      %p572 = scmp.eq.s32.totalorder %s46, 1
      %p573 = por %p571, %p572
      %p575 = scmp.ne.s32.totalorder %s560, %s574
      %p576 = scmp.eq.s32.totalorder %s46, 0
      %p577 = por %p575, %p576
      %s579 = sadd.s32 %s578, 1
      %p582 = scmp.eq.s32.totalorder %s40, 1
      %p583 = scmp.ne.s32.totalorder %s578, %s580
      %p584 = scmp.eq.s32.totalorder %s40, 0
      %p585 = por %p583, %p584
      %p586 = scmp.ne.s32.totalorder %s578, %s580
      %p587 = scmp.eq.s32.totalorder %s45, 1
      %p588 = por %p586, %p587
      %p589 = scmp.ne.s32.totalorder %s580, %s581
      %p590 = scmp.eq.s32.totalorder %s45, 0
      %p591 = por %p589, %p590
      %p592 = scmp.ne.s32.totalorder %s580, %s581
      %p593 = scmp.eq.s32.totalorder %s46, 1
      %p594 = por %p592, %p593
      %p596 = scmp.ne.s32.totalorder %s581, %s595
      %p597 = scmp.eq.s32.totalorder %s46, 0
      %p598 = por %p596, %p597
      %s600 = sadd.s32 %s599, 1
      %p603 = scmp.eq.s32.totalorder %s40, 1
      %p604 = scmp.ne.s32.totalorder %s599, %s601
      %p605 = scmp.eq.s32.totalorder %s40, 0
      %p606 = por %p604, %p605
      %p607 = scmp.ne.s32.totalorder %s599, %s601
      %p608 = scmp.eq.s32.totalorder %s45, 1
      %p609 = por %p607, %p608
      %p610 = scmp.ne.s32.totalorder %s601, %s602
      %p611 = scmp.eq.s32.totalorder %s45, 0
      %p612 = por %p610, %p611
      %p613 = scmp.ne.s32.totalorder %s601, %s602
      %p614 = scmp.eq.s32.totalorder %s46, 1
      %p615 = por %p613, %p614
      %p617 = scmp.ne.s32.totalorder %s602, %s616
      %p618 = scmp.eq.s32.totalorder %s46, 0
      %p619 = por %p617, %p618
      %s620 = ssub.s32 %s40, %s47
      %p621 = scmp.eq.s32.totalorder %s620, 0
      %s623 = sadd.s32 %s622, 1
      %s624 = scalar_select %p621, %s622, %s623
      %p627 = pneg %p621
      %p628 = scmp.eq.s32.totalorder %s40, 1
      %p629 = por %p627, %p628
      %p630 = scmp.ne.s32.totalorder %s622, %s625
      %p631 = scmp.eq.s32.totalorder %s40, 0
      %p632 = por %p630, %p631
      %p633 = scmp.ne.s32.totalorder %s622, %s625
      %p634 = scmp.eq.s32.totalorder %s45, 1
      %p635 = por %p633, %p634
      %p636 = scmp.ne.s32.totalorder %s625, %s626
      %p637 = scmp.eq.s32.totalorder %s45, 0
      %p638 = por %p636, %p637
      %p639 = scmp.ne.s32.totalorder %s625, %s626
      %p640 = scmp.eq.s32.totalorder %s46, 1
      %p641 = por %p639, %p640
      %p643 = scmp.ne.s32.totalorder %s626, %s642
      %p644 = scmp.eq.s32.totalorder %s46, 0
      %p645 = por %p643, %p644
      %p646 = scmp.le.s32.totalorder 1, %s40
      %p647 = scmp.lt.s32.totalorder %s40, 3
      %p648 = pnand %p646, %p647
      %p649 = pneg %p648
      // Predicated region
      $region9: #{_lambda_.2} parent=5 // pred_check
        _
      $region10: #{_lambda_.2} parent=5 // pred_check_branch
        %651 = sbr.rel (%p648) target = $region12
      $region11: #{_lambda_.2} parent=5 // pred_region
        %s652 = ssub.s32 %s40, 1
        // Predicated region
        $region13: #{_lambda_.2} parent=11 // pred_check
          %p653 = pneg %p87
        $region14: #{_lambda_.2} parent=11 // pred_check_branch
          %655 = sbr.rel (%p653) target = $region16
        $region15: #{_lambda_.2} parent=11 // pred_region
          _
        $region16: #{_lambda_.2} parent=11 // pred_fallthru
          _
        // Predicated region
        $region17: #{_lambda_.2} parent=11 // pred_check
          %p656 = pneg %p108
        $region18: #{_lambda_.2} parent=11 // pred_check_branch
          %658 = sbr.rel (%p656) target = $region20
        $region19: #{_lambda_.2} parent=11 // pred_region
          _
        $region20: #{_lambda_.2} parent=11 // pred_fallthru
          _
        // Predicated region
        $region21: #{_lambda_.2} parent=11 // pred_check
          %p659 = pneg %p129
        $region22: #{_lambda_.2} parent=11 // pred_check_branch
          %661 = sbr.rel (%p659) target = $region24
        $region23: #{_lambda_.2} parent=11 // pred_region
          _
        $region24: #{_lambda_.2} parent=11 // pred_fallthru
          _
        // Predicated region
        $region25: #{_lambda_.2} parent=11 // pred_check
          %p662 = pneg %p150
        $region26: #{_lambda_.2} parent=11 // pred_check_branch
          %664 = sbr.rel (%p662) target = $region28
        $region27: #{_lambda_.2} parent=11 // pred_region
          _
        $region28: #{_lambda_.2} parent=11 // pred_fallthru
          _
        // Predicated region
        $region29: #{_lambda_.2} parent=11 // pred_check
          %p665 = pneg %p171
        $region30: #{_lambda_.2} parent=11 // pred_check_branch
          %667 = sbr.rel (%p665) target = $region32
        $region31: #{_lambda_.2} parent=11 // pred_region
          _
        $region32: #{_lambda_.2} parent=11 // pred_fallthru
          _
        // Predicated region
        $region33: #{_lambda_.2} parent=11 // pred_check
          %p668 = pneg %p192
        $region34: #{_lambda_.2} parent=11 // pred_check_branch
          %670 = sbr.rel (%p668) target = $region36
        $region35: #{_lambda_.2} parent=11 // pred_region
          _
        $region36: #{_lambda_.2} parent=11 // pred_fallthru
          _
        // Predicated region
        $region37: #{_lambda_.2} parent=11 // pred_check
          %p671 = pneg %p213
        $region38: #{_lambda_.2} parent=11 // pred_check_branch
          %673 = sbr.rel (%p671) target = $region40
        $region39: #{_lambda_.2} parent=11 // pred_region
          %s675 = ssub.s32 16, 16
          %676 = vsyncadd [#allocation8], %s675
          %s678 = sshll.u32 [#allocation7], 4
          %s679 = int_to_ptr.vmem [resolvable:$true] %s678
          %681 = dma.hbm_to_vmem [thread:$0]  %s7, 16, %s679, [#allocation8]
        $region40: #{_lambda_.2} parent=11 // pred_fallthru
          _
        // Predicated region
        $region41: #{_lambda_.2} parent=11 // pred_check
          %p682 = pneg %p234
        $region42: #{_lambda_.2} parent=11 // pred_check_branch
          %684 = sbr.rel (%p682) target = $region44
        $region43: #{_lambda_.2} parent=11 // pred_region
          _
        $region44: #{_lambda_.2} parent=11 // pred_fallthru
          _
        // Predicated region
        $region45: #{_lambda_.2} parent=11 // pred_check
          %p685 = pneg %p255
        $region46: #{_lambda_.2} parent=11 // pred_check_branch
          %687 = sbr.rel (%p685) target = $region48
        $region47: #{_lambda_.2} parent=11 // pred_region
          %s689 = ssub.s32 320, 320
          %690 = vsyncadd [#allocation8], %s689
          %s691 = sshll.u32 [#allocation9], 4
          %s692 = int_to_ptr.vmem [resolvable:$true] %s691
          %697 = dma.hbm_to_vmem [thread:$0]  %s9, 320, %s692, [#allocation8], 64, 64, 4
        $region48: #{_lambda_.2} parent=11 // pred_fallthru
          _
        // Predicated region
        $region49: #{_lambda_.2} parent=11 // pred_check
          %p698 = pneg %p276
        $region50: #{_lambda_.2} parent=11 // pred_check_branch
          %700 = sbr.rel (%p698) target = $region52
        $region51: #{_lambda_.2} parent=11 // pred_region
          _
        $region52: #{_lambda_.2} parent=11 // pred_fallthru
          _
        // Predicated region
        $region53: #{_lambda_.2} parent=11 // pred_check
          %p701 = pneg %p297
        $region54: #{_lambda_.2} parent=11 // pred_check_branch
          %703 = sbr.rel (%p701) target = $region56
        $region55: #{_lambda_.2} parent=11 // pred_region
          %s705 = ssub.s32 16, 16
          %706 = vsyncadd [#allocation11], %s705
          %s708 = sshll.u32 [#allocation10], 4
          %s709 = int_to_ptr.vmem [resolvable:$true] %s708
          %711 = dma.hbm_to_vmem [thread:$0]  %s11, 16, %s709, [#allocation11]
        $region56: #{_lambda_.2} parent=11 // pred_fallthru
          _
        // Predicated region
        $region57: #{_lambda_.2} parent=11 // pred_check
          %p712 = pneg %p318
        $region58: #{_lambda_.2} parent=11 // pred_check_branch
          %714 = sbr.rel (%p712) target = $region60
        $region59: #{_lambda_.2} parent=11 // pred_region
          _
        $region60: #{_lambda_.2} parent=11 // pred_fallthru
          _
        // Predicated region
        $region61: #{_lambda_.2} parent=11 // pred_check
          %p715 = pneg %p339
        $region62: #{_lambda_.2} parent=11 // pred_check_branch
          %717 = sbr.rel (%p715) target = $region64
        $region63: #{_lambda_.2} parent=11 // pred_region
          _
        $region64: #{_lambda_.2} parent=11 // pred_fallthru
          _
        // Predicated region
        $region65: #{_lambda_.2} parent=11 // pred_check
          %p718 = pneg %p360
        $region66: #{_lambda_.2} parent=11 // pred_check_branch
          %720 = sbr.rel (%p718) target = $region68
        $region67: #{_lambda_.2} parent=11 // pred_region
          %s722 = ssub.s32 16, 16
          %723 = vsyncadd [#allocation11], %s722
          %s725 = sshll.u32 [#allocation12], 4
          %s726 = int_to_ptr.vmem [resolvable:$true] %s725
          %728 = dma.hbm_to_vmem [thread:$0]  %s14, 16, %s726, [#allocation11]
        $region68: #{_lambda_.2} parent=11 // pred_fallthru
          _
        // Predicated region
        $region69: #{_lambda_.2} parent=11 // pred_check
          %p729 = pneg %p381
        $region70: #{_lambda_.2} parent=11 // pred_check_branch
          %731 = sbr.rel (%p729) target = $region72
        $region71: #{_lambda_.2} parent=11 // pred_region
          _
        $region72: #{_lambda_.2} parent=11 // pred_fallthru
          _
        // Predicated region
        $region73: #{_lambda_.2} parent=11 // pred_check
          %p732 = pneg %p402
        $region74: #{_lambda_.2} parent=11 // pred_check_branch
          %734 = sbr.rel (%p732) target = $region76
        $region75: #{_lambda_.2} parent=11 // pred_region
          _
        $region76: #{_lambda_.2} parent=11 // pred_fallthru
          _
        // Predicated region
        $region77: #{_lambda_.2} parent=11 // pred_check
          %p735 = pneg %p423
        $region78: #{_lambda_.2} parent=11 // pred_check_branch
          %737 = sbr.rel (%p735) target = $region80
        $region79: #{_lambda_.2} parent=11 // pred_region
          _
        $region80: #{_lambda_.2} parent=11 // pred_fallthru
          _
        // Predicated region
        $region81: #{_lambda_.2} parent=11 // pred_check
          %p738 = pneg %p444
        $region82: #{_lambda_.2} parent=11 // pred_check_branch
          %740 = sbr.rel (%p738) target = $region84
        $region83: #{_lambda_.2} parent=11 // pred_region
          %s742 = ssub.s32 16, 16
          %743 = vsyncadd [#allocation14], %s742
          %s745 = sshll.u32 [#allocation13], 4
          %s746 = int_to_ptr.vmem [resolvable:$true] %s745
          %748 = dma.hbm_to_vmem [thread:$0]  %s18, 16, %s746, [#allocation14]
        $region84: #{_lambda_.2} parent=11 // pred_fallthru
          _
        // Predicated region
        $region85: #{_lambda_.2} parent=11 // pred_check
          %p749 = pneg %p465
        $region86: #{_lambda_.2} parent=11 // pred_check_branch
          %751 = sbr.rel (%p749) target = $region88
        $region87: #{_lambda_.2} parent=11 // pred_region
          _
        $region88: #{_lambda_.2} parent=11 // pred_fallthru
          _
        // Predicated region
        $region89: #{_lambda_.2} parent=11 // pred_check
          %p752 = pneg %p486
        $region90: #{_lambda_.2} parent=11 // pred_check_branch
          %754 = sbr.rel (%p752) target = $region92
        $region91: #{_lambda_.2} parent=11 // pred_region
          _
        $region92: #{_lambda_.2} parent=11 // pred_fallthru
          _
        // Predicated region
        $region93: #{_lambda_.2} parent=11 // pred_check
          %p755 = pneg %p507
        $region94: #{_lambda_.2} parent=11 // pred_check_branch
          %757 = sbr.rel (%p755) target = $region96
        $region95: #{_lambda_.2} parent=11 // pred_region
          _
        $region96: #{_lambda_.2} parent=11 // pred_fallthru
          _
        // Predicated region
        $region97: #{_lambda_.2} parent=11 // pred_check
          %p758 = pneg %p528
        $region98: #{_lambda_.2} parent=11 // pred_check_branch
          %760 = sbr.rel (%p758) target = $region100
        $region99: #{_lambda_.2} parent=11 // pred_region
          %s762 = ssub.s32 16, 16
          %763 = vsyncadd [#allocation14], %s762
          %s765 = sshll.u32 [#allocation15], 4
          %s766 = int_to_ptr.vmem [resolvable:$true] %s765
          %768 = dma.hbm_to_vmem [thread:$0]  %s22, 16, %s766, [#allocation14]
        $region100: #{_lambda_.2} parent=11 // pred_fallthru
          _
        // Predicated region
        $region101: #{_lambda_.2} parent=11 // pred_check
          %p769 = pneg %p549
        $region102: #{_lambda_.2} parent=11 // pred_check_branch
          %771 = sbr.rel (%p769) target = $region104
        $region103: #{_lambda_.2} parent=11 // pred_region
          _
        $region104: #{_lambda_.2} parent=11 // pred_fallthru
          _
        // Predicated region
        $region105: #{_lambda_.2} parent=11 // pred_check
          %p772 = pneg %p570
        $region106: #{_lambda_.2} parent=11 // pred_check_branch
          %774 = sbr.rel (%p772) target = $region108
        $region107: #{_lambda_.2} parent=11 // pred_region
          %s776 = ssub.s32 192, 192
          %777 = vsyncadd [#allocation17], %s776
          %s778 = sshll.u32 [#allocation16], 4
          %s779 = int_to_ptr.vmem [resolvable:$true] %s778
          %784 = dma.hbm_to_vmem [thread:$0]  %s24, 192, %s779, [#allocation17], 64, 64, 4
        $region108: #{_lambda_.2} parent=11 // pred_fallthru
          _
        // Predicated region
        $region109: #{_lambda_.2} parent=11 // pred_check
          %p785 = pneg %p591
        $region110: #{_lambda_.2} parent=11 // pred_check_branch
          %787 = sbr.rel (%p785) target = $region112
        $region111: #{_lambda_.2} parent=11 // pred_region
          %s789 = ssub.s32 16, 16
          %790 = vsyncadd [#allocation17], %s789
          %s792 = sshll.u32 [#allocation18], 4
          %s793 = int_to_ptr.vmem [resolvable:$true] %s792
          %795 = dma.hbm_to_vmem [thread:$0]  %s25, 16, %s793, [#allocation17]
        $region112: #{_lambda_.2} parent=11 // pred_fallthru
          _
        // Predicated region
        $region113: #{_lambda_.2} parent=11 // pred_check
          %p796 = pneg %p612
        $region114: #{_lambda_.2} parent=11 // pred_check_branch
          %798 = sbr.rel (%p796) target = $region116
        $region115: #{_lambda_.2} parent=11 // pred_region
          _
        $region116: #{_lambda_.2} parent=11 // pred_fallthru
          _
      $region12: #{_lambda_.2} parent=5 // pred_fallthru
        _
      %p799 = scmp.lt.s32.totalorder %s40, 2
      // Predicated region
      $region117: #{_lambda_.2} parent=5 // pred_check
        %p800 = pneg %p799
      $region118: #{_lambda_.2} parent=5 // pred_check_branch
        %802 = sbr.rel (%p800) target = $region120
      $region119: #{_lambda_.2} parent=5 // pred_region
        // Predicated region
        $region121: #{_lambda_.2} parent=119 // pred_check
          %p803 = pneg %p60
        $region122: #{_lambda_.2} parent=119 // pred_check_branch
          %805 = sbr.rel (%p803) target = $region124
        $region123: #{_lambda_.2} parent=119 // pred_region
          %s806 = sand.u32 %s50, 1
          %s807 = scalar_lea.sflag [#allocation6], %s806
          %s808 = sand.u32 %s50, 1
          %s809 = smul.addr %s808, 16
          %s810 = scalar_lea.vmem [#allocation5], %s809
          %s812 = ssub.s32 256, 256
          %813 = vsyncadd %s807, %s812
          %s814 = smul.addr %s40, 2
          %s815 = smul.addr %s814, 128
          %s816 = scalar_lea.hbm %s0, %s815
          %s817 = sshll.u32 %s810, 4
          %s818 = int_to_ptr.vmem [resolvable:$true] %s817
          %823 = dma.hbm_to_vmem [thread:$0]  %s816, 256, %s818, %s807, 128, 128, 8
        $region124: #{_lambda_.2} parent=119 // pred_fallthru
          _
      $region120: #{_lambda_.2} parent=5 // pred_fallthru
        _
      %p824 = scmp.le.s32.totalorder 1, %s40
      %p825 = scmp.lt.s32.totalorder %s40, 3
      %p826 = pnand %p824, %p825
      %p827 = pneg %p826
      // Predicated region
      $region125: #{_lambda_.2} parent=5 // pred_check
        _
      $region126: #{_lambda_.2} parent=5 // pred_check_branch
        %829 = sbr.rel (%p826) target = $region128
      $region127: #{_lambda_.2} parent=5 // pred_region
        %s830 = ssub.s32 %s40, 1
        %s831 = sand.u32 %s53, 1
        %s832 = scalar_lea.sflag [#allocation6], %s831
        %s833 = sand.u32 %s53, 1
        %s834 = smul.addr %s833, 16
        %s835 = scalar_lea.vmem [#allocation5], %s834
        // Predicated region
        $region129: #{_lambda_.2} parent=127 // pred_check
          %p836 = pneg %p66
        $region130: #{_lambda_.2} parent=127 // pred_check_branch
          %838 = sbr.rel (%p836) target = $region132
        $region131: #{_lambda_.2} parent=127 // pred_region
          %839 = dma.done %s832, 256
        $region132: #{_lambda_.2} parent=127 // pred_fallthru
          _
        // Predicated region
        $region133: #{_lambda_.2} parent=127 // pred_check
          %p840 = pneg %p213
        $region134: #{_lambda_.2} parent=127 // pred_check_branch
          %842 = sbr.rel (%p840) target = $region136
        $region135: #{_lambda_.2} parent=127 // pred_region
          %843 = dma.done [#allocation8], 16
        $region136: #{_lambda_.2} parent=127 // pred_fallthru
          _
        // Predicated region
        $region137: #{_lambda_.2} parent=127 // pred_check
          %p844 = pneg %p255
        $region138: #{_lambda_.2} parent=127 // pred_check_branch
          %846 = sbr.rel (%p844) target = $region140
        $region139: #{_lambda_.2} parent=127 // pred_region
          %847 = dma.done [#allocation8], 320
        $region140: #{_lambda_.2} parent=127 // pred_fallthru
          _
        // Predicated region
        $region141: #{_lambda_.2} parent=127 // pred_check
          %p848 = pneg %p297
        $region142: #{_lambda_.2} parent=127 // pred_check_branch
          %850 = sbr.rel (%p848) target = $region144
        $region143: #{_lambda_.2} parent=127 // pred_region
          %851 = dma.done [#allocation11], 16
        $region144: #{_lambda_.2} parent=127 // pred_fallthru
          _
        // Predicated region
        $region145: #{_lambda_.2} parent=127 // pred_check
          %p852 = pneg %p360
        $region146: #{_lambda_.2} parent=127 // pred_check_branch
          %854 = sbr.rel (%p852) target = $region148
        $region147: #{_lambda_.2} parent=127 // pred_region
          %855 = dma.done [#allocation11], 16
        $region148: #{_lambda_.2} parent=127 // pred_fallthru
          _
        // Predicated region
        $region149: #{_lambda_.2} parent=127 // pred_check
          %p856 = pneg %p444
        $region150: #{_lambda_.2} parent=127 // pred_check_branch
          %858 = sbr.rel (%p856) target = $region152
        $region151: #{_lambda_.2} parent=127 // pred_region
          %859 = dma.done [#allocation14], 16
        $region152: #{_lambda_.2} parent=127 // pred_fallthru
          _
        // Predicated region
        $region153: #{_lambda_.2} parent=127 // pred_check
          %p860 = pneg %p528
        $region154: #{_lambda_.2} parent=127 // pred_check_branch
          %862 = sbr.rel (%p860) target = $region156
        $region155: #{_lambda_.2} parent=127 // pred_region
          %863 = dma.done [#allocation14], 16
        $region156: #{_lambda_.2} parent=127 // pred_fallthru
          _
        // Predicated region
        $region157: #{_lambda_.2} parent=127 // pred_check
          %p864 = pneg %p570
        $region158: #{_lambda_.2} parent=127 // pred_check_branch
          %866 = sbr.rel (%p864) target = $region160
        $region159: #{_lambda_.2} parent=127 // pred_region
          %867 = dma.done [#allocation17], 192
        $region160: #{_lambda_.2} parent=127 // pred_fallthru
          _
        // Predicated region
        $region161: #{_lambda_.2} parent=127 // pred_check
          %p868 = pneg %p591
        $region162: #{_lambda_.2} parent=127 // pred_check_branch
          %870 = sbr.rel (%p868) target = $region164
        $region163: #{_lambda_.2} parent=127 // pred_region
          %871 = dma.done [#allocation17], 16
        $region164: #{_lambda_.2} parent=127 // pred_fallthru
          _
        %s872 = sand.u32 %s53, 1
        %s873 = scalar_lea.sflag [#allocation6], %s872
        %s874 = sand.u32 %s53, 1
        %s875 = smul.addr %s874, 16
        %s876 = scalar_lea.vmem [#allocation5], %s875
        %p877 = pneg %p66
        %p878 = pneg %p63
        %p879 = pneg %p87
        %p880 = pneg %p84
        %p881 = pneg %p108
        %p882 = pneg %p105
        %p883 = pneg %p129
        %p884 = pneg %p126
        %p885 = pneg %p150
        %p886 = pneg %p147
        %p887 = pneg %p171
        %p888 = pneg %p168
        %p889 = pneg %p192
        %p890 = pneg %p189
        %p891 = pneg %p213
        %p892 = pneg %p210
        %p893 = pneg %p234
        %p894 = pneg %p231
        %p895 = pneg %p255
        %p896 = pneg %p252
        %p897 = pneg %p276
        %p898 = pneg %p273
        %p899 = pneg %p297
        %p900 = pneg %p294
        %p901 = pneg %p318
        %p902 = pneg %p315
        %p903 = pneg %p339
        %p904 = pneg %p336
        %p905 = pneg %p360
        %p906 = pneg %p357
        %p907 = pneg %p381
        %p908 = pneg %p378
        %p909 = pneg %p402
        %p910 = pneg %p399
        %p911 = pneg %p423
        %p912 = pneg %p420
        %p913 = pneg %p444
        %p914 = pneg %p441
        %p915 = pneg %p465
        %p916 = pneg %p462
        %p917 = pneg %p486
        %p918 = pneg %p483
        %p919 = pneg %p507
        %p920 = pneg %p504
        %p921 = pneg %p528
        %p922 = pneg %p525
        %p923 = pneg %p549
        %p924 = pneg %p546
        %p925 = pneg %p570
        %p926 = pneg %p567
        %p927 = pneg %p591
        %p928 = pneg %p588
        %p929 = pneg %p612
        %p930 = pneg %p609
        %p931 = pneg %p638
        %p932 = pneg %p635
        %p933 = scmp.lt.s32.totalorder %s45, 1
        %s934 = scalar_select %p933, %s45, 1
        %s935 = smul.addr %s934, 2
        %s936 = smul.addr %s935, 8
        %s937 = scalar_lea.vmem %s27, %s936
        %p938 = scmp.lt.s32.totalorder %s45, 1
        %s939 = scalar_select %p938, %s45, 1
        %s940 = smul.addr %s939, 2
        %s941 = smul.addr %s940, 8
        %s942 = scalar_lea.vmem %s27, %s941
        %v944 = vld [vmem:[%s835] sm:$0xff]
        %v945 = vld [vmem:[%s835 + $0x8] sm:$0xff]
        %v946 = vpack.c.bf16 %v945, %v944
        %v947 = vld [vmem:[%s1] sm:$0xf]
        %v948 = vld [vmem:[%s1 + $0x4] sm:$0xf]
        %v949 = vld [vmem:[%s1 + $0x8] sm:$0xf]
        %v950 = vld [vmem:[%s1 + $0xc] sm:$0xf]
        %v955 = vunpack.c.l.b16 %v947
        %v956 = vunpack.c.l.b16 %v948
        %v957 = vunpack.c.l.b16 %v949
        %v958 = vunpack.c.l.b16 %v950
        %v959 = vpack.c.b16 %v956, %v955
        %v960 = vpack.c.b16 %v958, %v957
        %vm963 = vcmask 261120
        %v965 = vsel %vm963, %v946, 0
        %967 = vmatprep.subr.bf16.mxu0 0
        %968 = vmatpush1.bf16.msra.mxu0 %v959
        %969 = vmatprep.subr.bf16.mxu0 0
        %970 = vmatpush1.bf16.msra.mxu0 %v960
        %971 = vmatprep.subr.bf16.mxu0 0
        %972 = vmatpush1.bf16.msra.mxu0 0
        %973 = vmatprep.subr.bf16.mxu0 0
        %974 = vmatpush1.bf16.msra.mxu0 0
        %975 = vmatprep.subr.bf16.mxu0 0
        %976 = vmatpush1.bf16.msra.mxu0 0
        %977 = vmatprep.subr.bf16.mxu0 0
        %978 = vmatpush1.bf16.msra.mxu0 0
        %979 = vmatprep.subr.bf16.mxu0 0
        %980 = vmatpush1.bf16.msra.mxu0 0
        %981 = vmatprep.subr.bf16.mxu0 0
        %982 = vmatpush1.bf16.msra.mxu0 0
        %983 = vmatprep.subr.bf16.mxu0 0
        %984 = vmatpush1.bf16.msra.mxu0 0
        %985 = vmatprep.subr.bf16.mxu0 0
        %986 = vmatpush1.bf16.msra.mxu0 0
        %987 = vmatprep.subr.bf16.mxu0 0
        %988 = vmatpush1.bf16.msra.mxu0 0
        %989 = vmatprep.subr.bf16.mxu0 0
        %990 = vmatpush1.bf16.msra.mxu0 0
        %991 = vmatprep.subr.bf16.mxu0 0
        %992 = vmatpush1.bf16.msra.mxu0 0
        %993 = vmatprep.subr.bf16.mxu0 0
        %994 = vmatpush1.bf16.msra.mxu0 0
        %995 = vmatprep.subr.bf16.mxu0 0
        %996 = vmatpush1.bf16.msra.mxu0 0
        %997 = vmatprep.subr.bf16.mxu0 0
        %998 = vmatpush1.bf16.msra.mxu0 0
        %999 = vmatprep.mubr.bf16.mxu0 0
        %1000 = vmatmul.mubr.bf16.gmra.mrb[0].mxu0 %v965
        %v1001 = vpop.f32.mrb[0].mxu0
        %v1002 = vadd.f32 0.0, %v1001
        %v1003 = vpop.f32.mrb[0].mxu0
        %v1004 = vpop.f32.mrb[0].mxu0
        %v1005 = vadd.f32 0.0, %v1004
        %v1006 = vpop.f32.mrb[0].mxu0
        %1007 = vdwg.mxu0
        %v1008 = vld [vmem:[%s2] sm:$0x1]
        %v1010 = vlaneseq
        %v1011 = vshrl.u32 %v1010, 7
        %v1012 = vsub.s32 0, %v1011
        %v1013 = vrot.slane %v1008, %v1012
        %v1015 = vmul.f32 %v1002, %v1013
        %v1016 = vmul.f32 %v1005, %v1013
        %v1017 = vld [vmem:[%s3] sm:$0x1]
        %v1019 = vlaneseq
        %v1020 = vshrl.u32 %v1019, 7
        %v1021 = vsub.s32 0, %v1020
        %v1022 = vrot.slane %v1017, %v1021
        %v1024 = vadd.f32 %v1015, %v1022
        %v1025 = vadd.f32 %v1016, %v1022
        %vm1026 = vcmp.gt.f32.partialorder %v1024, 0.0
        %vm1027 = vcmp.gt.f32.partialorder %v1025, 0.0
        %v1028 = vld [vmem:[%s4] sm:$0x1]
        %v1030 = vlaneseq
        %v1031 = vshrl.u32 %v1030, 7
        %v1032 = vsub.s32 0, %v1031
        %v1033 = vrot.slane %v1028, %v1032
        %v1035 = vmul.f32 %v1033, %v1024
        %v1036 = vmul.f32 %v1033, %v1025
        %v1037 = vsel %vm1026, %v1024, %v1035
        %v1038 = vsel %vm1027, %v1025, %v1036
        %vm1039 = vcmask 130048
        %1040 = vst.msk [vmem:[#allocation2] sm:$0xff] %vm1039, %v1037
        %1041 = vst.msk [vmem:[#allocation2 + $0x8] sm:$0xff] %vm1039, %v1038
        %v1042 = vld [vmem:[#allocation2] sm:$0xff]
        %v1043 = vld [vmem:[#allocation2 + $0x8] sm:$0xff]
        %vm1044 = vcmask 195584
        %1045 = vst.msk [vmem:[#allocation3] sm:$0xff] %vm1044, 0.0
        %1046 = vst.msk [vmem:[#allocation3 + $0x8] sm:$0xff] %vm1044, 0.0
        %1047 = vst.msk [vmem:[#allocation3 + $0x10] sm:$0xff] %vm1044, 0.0
        %1048 = vst.msk [vmem:[#allocation3 + $0x2] sm:$0xff] %vm1039, %v1042
        %1049 = vst.msk [vmem:[#allocation3 + $0xa] sm:$0xff] %vm1039, %v1043
        %v1050 = vld [vmem:[#allocation3] sm:$0xff]
        %v1051 = vld [vmem:[#allocation3 + $0x8] sm:$0xff]
        %1052 = vst.msk [vmem:[#allocation4] sm:$0xff] %vm1039, %v1050
        %1053 = vst.msk [vmem:[#allocation4 + $0x8] sm:$0xff] %vm1039, %v1051
        %v1054 = vld [vmem:[#allocation3 + $0x1] sm:$0xff]
        %v1055 = vld [vmem:[#allocation3 + $0x9] sm:$0xff]
        %1058 = vrot.lane.b32.xlu0 %v1054, 16
        %v1059 = vpop.permute.xlu0 %1058
        %1060 = vrot.lane.b32.xlu0 %v1055, 16
        %v1061 = vpop.permute.xlu0 %1060
        %vm1064 = vcmask 261248
        %1065 = vst.msk [vmem:[#allocation4] sm:$0xff] %vm1064, %v1059
        %1066 = vst.msk [vmem:[#allocation4 + $0x8] sm:$0xff] %vm1064, %v1061
        %v1067 = vld [vmem:[#allocation3 + $0x2] sm:$0xff]
        %v1068 = vld [vmem:[#allocation3 + $0xa] sm:$0xff]
        %1071 = vrot.lane.b32.xlu0 %v1067, 32
        %v1072 = vpop.permute.xlu0 %1071
        %1073 = vrot.lane.b32.xlu0 %v1068, 32
        %v1074 = vpop.permute.xlu0 %1073
        %vm1077 = vcmask 392448
        %1078 = vst.msk [vmem:[#allocation4] sm:$0xff] %vm1077, %v1072
        %1079 = vst.msk [vmem:[#allocation4 + $0x8] sm:$0xff] %vm1077, %v1074
        %v1080 = vld [vmem:[#allocation3 + $0x3] sm:$0xff]
        %v1081 = vld [vmem:[#allocation3 + $0xb] sm:$0xff]
        %1084 = vrot.lane.b32.xlu0 %v1080, 48
        %v1085 = vpop.permute.xlu0 %1084
        %1086 = vrot.lane.b32.xlu0 %v1081, 48
        %v1087 = vpop.permute.xlu0 %1086
        %vm1090 = vcmask 523648
        %1091 = vst.msk [vmem:[#allocation4] sm:$0xff] %vm1090, %v1085
        %1092 = vst.msk [vmem:[#allocation4 + $0x8] sm:$0xff] %vm1090, %v1087
        %v1093 = vld [vmem:[#allocation3 + $0x4] sm:$0xff]
        %v1094 = vld [vmem:[#allocation3 + $0xc] sm:$0xff]
        %1097 = vrot.lane.b32.xlu0 %v1093, 64
        %v1098 = vpop.permute.xlu0 %1097
        %1099 = vrot.lane.b32.xlu0 %v1094, 64
        %v1100 = vpop.permute.xlu0 %1099
        %vm1103 = vcmask 654848
        %1104 = vst.msk [vmem:[#allocation4] sm:$0xff] %vm1103, %v1098
        %1105 = vst.msk [vmem:[#allocation4 + $0x8] sm:$0xff] %vm1103, %v1100
        %v1106 = vld [vmem:[#allocation4] sm:$0xff]
        %v1107 = vld [vmem:[#allocation4 + $0x8] sm:$0xff]
        %v1108 = vpack.c.bf16 %v1107, %v1106
        %v1109 = vld [vmem:[%s5] sm:$0xf]
        %v1110 = vld [vmem:[%s5 + $0x4] sm:$0xf]
        %v1111 = vld [vmem:[%s5 + $0x8] sm:$0xf]
        %v1112 = vld [vmem:[%s5 + $0xc] sm:$0xf]
        %v1113 = vld [vmem:[%s5 + $0x10] sm:$0xf]
        %v1114 = vld [vmem:[%s5 + $0x14] sm:$0xf]
        %v1115 = vld [vmem:[%s5 + $0x18] sm:$0xf]
        %v1116 = vld [vmem:[%s5 + $0x1c] sm:$0xf]
        %v1117 = vld [vmem:[%s5 + $0x20] sm:$0xf]
        %v1118 = vld [vmem:[%s5 + $0x24] sm:$0xf]
        %v1129 = vunpack.c.l.b16 %v1109
        %v1130 = vunpack.c.l.b16 %v1110
        %v1131 = vunpack.c.l.b16 %v1111
        %v1132 = vunpack.c.l.b16 %v1112
        %v1133 = vunpack.c.l.b16 %v1113
        %v1134 = vunpack.c.l.b16 %v1114
        %v1135 = vunpack.c.l.b16 %v1115
        %v1136 = vunpack.c.l.b16 %v1116
        %v1137 = vunpack.c.l.b16 %v1117
        %v1138 = vunpack.c.l.b16 %v1118
        %v1139 = vpack.c.b16 %v1130, %v1129
        %v1140 = vpack.c.b16 %v1132, %v1131
        %v1141 = vpack.c.b16 %v1134, %v1133
        %v1142 = vpack.c.b16 %v1136, %v1135
        %v1143 = vpack.c.b16 %v1138, %v1137
        %vm1149 = vcmask 654336
        %v1151 = vsel %vm1149, %v1108, 0
        %1153 = vmatprep.subr.bf16.mxu0 0
        %1154 = vmatpush1.bf16.msra.mxu0 %v1139
        %1155 = vmatprep.subr.bf16.mxu0 0
        %1156 = vmatpush1.bf16.msra.mxu0 %v1140
        %1157 = vmatprep.subr.bf16.mxu0 0
        %1158 = vmatpush1.bf16.msra.mxu0 %v1141
        %1159 = vmatprep.subr.bf16.mxu0 0
        %1160 = vmatpush1.bf16.msra.mxu0 %v1142
        %1161 = vmatprep.subr.bf16.mxu0 0
        %1162 = vmatpush1.bf16.msra.mxu0 %v1143
        %1163 = vmatprep.subr.bf16.mxu0 0
        %1164 = vmatpush1.bf16.msra.mxu0 0
        %1165 = vmatprep.subr.bf16.mxu0 0
        %1166 = vmatpush1.bf16.msra.mxu0 0
        %1167 = vmatprep.subr.bf16.mxu0 0
        %1168 = vmatpush1.bf16.msra.mxu0 0
        %1169 = vmatprep.subr.bf16.mxu0 0
        %1170 = vmatpush1.bf16.msra.mxu0 0
        %1171 = vmatprep.subr.bf16.mxu0 0
        %1172 = vmatpush1.bf16.msra.mxu0 0
        %1173 = vmatprep.subr.bf16.mxu0 0
        %1174 = vmatpush1.bf16.msra.mxu0 0
        %1175 = vmatprep.subr.bf16.mxu0 0
        %1176 = vmatpush1.bf16.msra.mxu0 0
        %1177 = vmatprep.subr.bf16.mxu0 0
        %1178 = vmatpush1.bf16.msra.mxu0 0
        %1179 = vmatprep.subr.bf16.mxu0 0
        %1180 = vmatpush1.bf16.msra.mxu0 0
        %1181 = vmatprep.subr.bf16.mxu0 0
        %1182 = vmatpush1.bf16.msra.mxu0 0
        %1183 = vmatprep.subr.bf16.mxu0 0
        %1184 = vmatpush1.bf16.msra.mxu0 0
        %1185 = vmatprep.mubr.bf16.mxu0 0
        %1186 = vmatmul.mubr.bf16.gmra.mrb[0].mxu0 %v1151
        %v1187 = vpop.f32.mrb[0].mxu0
        %v1188 = vadd.f32 0.0, %v1187
        %v1189 = vpop.f32.mrb[0].mxu0
        %v1190 = vpop.f32.mrb[0].mxu0
        %v1191 = vadd.f32 0.0, %v1190
        %v1192 = vpop.f32.mrb[0].mxu0
        %1193 = vdwg.mxu0
        %v1194 = vld [vmem:[%s6] sm:$0x1]
        %v1196 = vlaneseq
        %v1197 = vshrl.u32 %v1196, 7
        %v1198 = vsub.s32 0, %v1197
        %v1199 = vrot.slane %v1194, %v1198
        %v1201 = vmul.f32 %v1188, %v1199
        %v1202 = vmul.f32 %v1191, %v1199
        %v1203 = vld [vmem:[#allocation7] sm:$0x1]
        %v1205 = vlaneseq
        %v1206 = vshrl.u32 %v1205, 7
        %v1207 = vsub.s32 0, %v1206
        %v1208 = vrot.slane %v1203, %v1207
        %v1210 = vadd.f32 %v1201, %v1208
        %v1211 = vadd.f32 %v1202, %v1208
        %vm1212 = vcmp.gt.f32.partialorder %v1210, 0.0
        %vm1213 = vcmp.gt.f32.partialorder %v1211, 0.0
        %v1214 = vld [vmem:[%s8] sm:$0x1]
        %v1216 = vlaneseq
        %v1217 = vshrl.u32 %v1216, 7
        %v1218 = vsub.s32 0, %v1217
        %v1219 = vrot.slane %v1214, %v1218
        %v1221 = vmul.f32 %v1219, %v1210
        %v1222 = vmul.f32 %v1219, %v1211
        %v1223 = vsel %vm1212, %v1210, %v1221
        %v1224 = vsel %vm1213, %v1211, %v1222
        %1225 = vst.msk [vmem:[#allocation3] sm:$0xff] %vm1044, 0.0
        %1226 = vst.msk [vmem:[#allocation3 + $0x8] sm:$0xff] %vm1044, 0.0
        %1227 = vst.msk [vmem:[#allocation3 + $0x10] sm:$0xff] %vm1044, 0.0
        %vm1228 = vcmask 64512
        %1229 = vst.msk [vmem:[#allocation3 + $0x2] sm:$0xff] %vm1228, %v1223
        %1230 = vst.msk [vmem:[#allocation3 + $0xa] sm:$0xff] %vm1228, %v1224
        %v1231 = vld [vmem:[#allocation3] sm:$0xff]
        %v1232 = vld [vmem:[#allocation3 + $0x8] sm:$0xff]
        %1233 = vst.msk [vmem:[#allocation4] sm:$0xff] %vm1228, %v1231
        %1234 = vst.msk [vmem:[#allocation4 + $0x8] sm:$0xff] %vm1228, %v1232
        %v1235 = vld [vmem:[#allocation3 + $0x1] sm:$0xff]
        %v1236 = vld [vmem:[#allocation3 + $0x9] sm:$0xff]
        %1239 = vrot.lane.b32.xlu0 %v1235, 8
        %v1240 = vpop.permute.xlu0 %1239
        %1241 = vrot.lane.b32.xlu0 %v1236, 8
        %v1242 = vpop.permute.xlu0 %1241
        %vm1245 = vcmask 130112
        %1246 = vst.msk [vmem:[#allocation4] sm:$0xff] %vm1245, %v1240
        %1247 = vst.msk [vmem:[#allocation4 + $0x8] sm:$0xff] %vm1245, %v1242
        %v1248 = vld [vmem:[#allocation3 + $0x2] sm:$0xff]
        %v1249 = vld [vmem:[#allocation3 + $0xa] sm:$0xff]
        %1252 = vrot.lane.b32.xlu0 %v1248, 16
        %v1253 = vpop.permute.xlu0 %1252
        %1254 = vrot.lane.b32.xlu0 %v1249, 16
        %v1255 = vpop.permute.xlu0 %1254
        %vm1258 = vcmask 195712
        %1259 = vst.msk [vmem:[#allocation4] sm:$0xff] %vm1258, %v1253
        %1260 = vst.msk [vmem:[#allocation4 + $0x8] sm:$0xff] %vm1258, %v1255
        %v1261 = vld [vmem:[#allocation3 + $0x3] sm:$0xff]
        %v1262 = vld [vmem:[#allocation3 + $0xb] sm:$0xff]
        %1265 = vrot.lane.b32.xlu0 %v1261, 24
        %v1266 = vpop.permute.xlu0 %1265
        %1267 = vrot.lane.b32.xlu0 %v1262, 24
        %v1268 = vpop.permute.xlu0 %1267
        %vm1271 = vcmask 261312
        %1272 = vst.msk [vmem:[#allocation4] sm:$0xff] %vm1271, %v1266
        %1273 = vst.msk [vmem:[#allocation4 + $0x8] sm:$0xff] %vm1271, %v1268
        %v1274 = vld [vmem:[#allocation3 + $0x4] sm:$0xff]
        %v1275 = vld [vmem:[#allocation3 + $0xc] sm:$0xff]
        %1278 = vrot.lane.b32.xlu0 %v1274, 32
        %v1279 = vpop.permute.xlu0 %1278
        %1280 = vrot.lane.b32.xlu0 %v1275, 32
        %v1281 = vpop.permute.xlu0 %1280
        %vm1284 = vcmask 326912
        %1285 = vst.msk [vmem:[#allocation4] sm:$0xff] %vm1284, %v1279
        %1286 = vst.msk [vmem:[#allocation4 + $0x8] sm:$0xff] %vm1284, %v1281
        %v1287 = vld [vmem:[#allocation4] sm:$0xff]
        %v1288 = vld [vmem:[#allocation4 + $0x8] sm:$0xff]
        %v1289 = vpack.c.bf16 %v1288, %v1287
        %v1290 = vld [vmem:[#allocation9] sm:$0xf]
        %v1291 = vld [vmem:[#allocation9 + $0x4] sm:$0xf]
        %v1292 = vld [vmem:[#allocation9 + $0x8] sm:$0xf]
        %v1293 = vld [vmem:[#allocation9 + $0xc] sm:$0xf]
        %v1294 = vld [vmem:[#allocation9 + $0x10] sm:$0xf]
        %v1300 = vunpack.c.l.b16 %v1290
        %v1301 = vunpack.c.l.b16 %v1291
        %v1302 = vunpack.c.l.b16 %v1292
        %v1303 = vunpack.c.l.b16 %v1293
        %v1304 = vunpack.c.l.b16 %v1294
        %v1305 = vpack.c.b16 %v1301, %v1300
        %v1306 = vpack.c.b16 %v1303, %v1302
        %v1307 = vpack.c.b16 %v1304, %v1304
        %vm1310 = vcmask 326656
        %v1312 = vsel %vm1310, %v1289, 0
        %vm1314 = vcmask 1043456
        %v1316 = vsel %vm1314, %v1307, 0
        %1318 = vmatprep.subr.bf16.mxu0 0
        %1319 = vmatpush1.bf16.msra.mxu0 %v1305
        %1320 = vmatprep.subr.bf16.mxu0 0
        %1321 = vmatpush1.bf16.msra.mxu0 %v1306
        %1322 = vmatprep.subr.bf16.mxu0 0
        %1323 = vmatpush1.bf16.msra.mxu0 %v1316
        %1324 = vmatprep.subr.bf16.mxu0 0
        %1325 = vmatpush1.bf16.msra.mxu0 0
        %1326 = vmatprep.subr.bf16.mxu0 0
        %1327 = vmatpush1.bf16.msra.mxu0 0
        %1328 = vmatprep.subr.bf16.mxu0 0
        %1329 = vmatpush1.bf16.msra.mxu0 0
        %1330 = vmatprep.subr.bf16.mxu0 0
        %1331 = vmatpush1.bf16.msra.mxu0 0
        %1332 = vmatprep.subr.bf16.mxu0 0
        %1333 = vmatpush1.bf16.msra.mxu0 0
        %1334 = vmatprep.subr.bf16.mxu0 0
        %1335 = vmatpush1.bf16.msra.mxu0 0
        %1336 = vmatprep.subr.bf16.mxu0 0
        %1337 = vmatpush1.bf16.msra.mxu0 0
        %1338 = vmatprep.subr.bf16.mxu0 0
        %1339 = vmatpush1.bf16.msra.mxu0 0
        %1340 = vmatprep.subr.bf16.mxu0 0
        %1341 = vmatpush1.bf16.msra.mxu0 0
        %1342 = vmatprep.subr.bf16.mxu0 0
        %1343 = vmatpush1.bf16.msra.mxu0 0
        %1344 = vmatprep.subr.bf16.mxu0 0
        %1345 = vmatpush1.bf16.msra.mxu0 0
        %1346 = vmatprep.subr.bf16.mxu0 0
        %1347 = vmatpush1.bf16.msra.mxu0 0
        %1348 = vmatprep.subr.bf16.mxu0 0
        %1349 = vmatpush1.bf16.msra.mxu0 0
        %1350 = vmatprep.mubr.bf16.mxu0 0
        %1351 = vmatmul.mubr.bf16.gmra.mrb[0].mxu0 %v1312
        %v1352 = vpop.f32.mrb[0].mxu0
        %v1353 = vadd.f32 0.0, %v1352
        %v1354 = vpop.f32.mrb[0].mxu0
        %v1355 = vpop.f32.mrb[0].mxu0
        %v1356 = vadd.f32 0.0, %v1355
        %v1357 = vpop.f32.mrb[0].mxu0
        %1358 = vdwg.mxu0
        %v1359 = vld [vmem:[%s10] sm:$0x1]
        %v1361 = vlaneseq
        %v1362 = vshrl.u32 %v1361, 7
        %v1363 = vsub.s32 0, %v1362
        %v1364 = vrot.slane %v1359, %v1363
        %v1366 = vmul.f32 %v1353, %v1364
        %v1367 = vmul.f32 %v1356, %v1364
        %v1368 = vld [vmem:[#allocation10] sm:$0x1]
        %v1370 = vlaneseq
        %v1371 = vshrl.u32 %v1370, 7
        %v1372 = vsub.s32 0, %v1371
        %v1373 = vrot.slane %v1368, %v1372
        %v1375 = vadd.f32 %v1366, %v1373
        %v1376 = vadd.f32 %v1367, %v1373
        %vm1377 = vcmp.gt.f32.partialorder %v1375, 0.0
        %vm1378 = vcmp.gt.f32.partialorder %v1376, 0.0
        %v1379 = vld [vmem:[%s12] sm:$0x1]
        %v1381 = vlaneseq
        %v1382 = vshrl.u32 %v1381, 7
        %v1383 = vsub.s32 0, %v1382
        %v1384 = vrot.slane %v1379, %v1383
        %v1386 = vmul.f32 %v1384, %v1375
        %v1387 = vmul.f32 %v1384, %v1376
        %v1388 = vsel %vm1377, %v1375, %v1386
        %v1389 = vsel %vm1378, %v1376, %v1387
        %v1390 = vpack.c.bf16 %v1043, %v1042
        %v1391 = vld [vmem:[%s13] sm:$0xf]
        %v1392 = vld [vmem:[%s13 + $0x4] sm:$0xf]
        %v1393 = vld [vmem:[#allocation12] sm:$0x1]
        %v1395 = vlaneseq
        %v1396 = vshrl.u32 %v1395, 7
        %v1397 = vsub.s32 0, %v1396
        %v1398 = vrot.slane %v1393, %v1397
        %v1402 = vunpack.c.l.b16 %v1391
        %v1403 = vunpack.c.l.b16 %v1392
        %v1404 = vpack.c.b16 %v1403, %v1402
        %v1407 = vsel %vm1039, %v1390, 0
        %1409 = vmatprep.subr.bf16.mxu0 0
        %1410 = vmatpush1.bf16.msra.mxu0 %v1404
        %1411 = vmatprep.subr.bf16.mxu0 0
        %1412 = vmatpush1.bf16.msra.mxu0 0
        %1413 = vmatprep.subr.bf16.mxu0 0
        %1414 = vmatpush1.bf16.msra.mxu0 0
        %1415 = vmatprep.subr.bf16.mxu0 0
        %1416 = vmatpush1.bf16.msra.mxu0 0
        %1417 = vmatprep.subr.bf16.mxu0 0
        %1418 = vmatpush1.bf16.msra.mxu0 0
        %1419 = vmatprep.subr.bf16.mxu0 0
        %1420 = vmatpush1.bf16.msra.mxu0 0
        %1421 = vmatprep.subr.bf16.mxu0 0
        %1422 = vmatpush1.bf16.msra.mxu0 0
        %1423 = vmatprep.subr.bf16.mxu0 0
        %1424 = vmatpush1.bf16.msra.mxu0 0
        %1425 = vmatprep.subr.bf16.mxu0 0
        %1426 = vmatpush1.bf16.msra.mxu0 0
        %1427 = vmatprep.subr.bf16.mxu0 0
        %1428 = vmatpush1.bf16.msra.mxu0 0
        %1429 = vmatprep.subr.bf16.mxu0 0
        %1430 = vmatpush1.bf16.msra.mxu0 0
        %1431 = vmatprep.subr.bf16.mxu0 0
        %1432 = vmatpush1.bf16.msra.mxu0 0
        %1433 = vmatprep.subr.bf16.mxu0 0
        %1434 = vmatpush1.bf16.msra.mxu0 0
        %1435 = vmatprep.subr.bf16.mxu0 0
        %1436 = vmatpush1.bf16.msra.mxu0 0
        %1437 = vmatprep.subr.bf16.mxu0 0
        %1438 = vmatpush1.bf16.msra.mxu0 0
        %1439 = vmatprep.subr.bf16.mxu0 0
        %1440 = vmatpush1.bf16.msra.mxu0 0
        %1441 = vmatprep.mubr.bf16.mxu0 0
        %1442 = vmatmul.mubr.bf16.gmra.mrb[0].mxu0 %v1407
        %v1443 = vpop.f32.mrb[0].mxu0
        %v1444 = vadd.f32 %v1398, %v1443
        %v1445 = vpop.f32.mrb[0].mxu0
        %v1446 = vpop.f32.mrb[0].mxu0
        %v1447 = vadd.f32 %v1398, %v1446
        %v1448 = vpop.f32.mrb[0].mxu0
        %1449 = vdwg.mxu0
        %v1450 = vadd.f32 %v1388, %v1444
        %v1451 = vadd.f32 %v1389, %v1447
        %vm1452 = vcmp.gt.f32.partialorder %v1450, 0.0
        %vm1453 = vcmp.gt.f32.partialorder %v1451, 0.0
        %v1454 = vld [vmem:[%s15] sm:$0x1]
        %v1456 = vlaneseq
        %v1457 = vshrl.u32 %v1456, 7
        %v1458 = vsub.s32 0, %v1457
        %v1459 = vrot.slane %v1454, %v1458
        %v1461 = vmul.f32 %v1459, %v1450
        %v1462 = vmul.f32 %v1459, %v1451
        %v1463 = vsel %vm1452, %v1450, %v1461
        %v1464 = vsel %vm1453, %v1451, %v1462
        %1467 = vrot.lane.b32.xlu0 %v1463, 16
        %v1468 = vpop.permute.xlu0 %1467
        %1469 = vrot.lane.b32.xlu0 %v1464, 16
        %v1470 = vpop.permute.xlu0 %1469
        %1473 = vst.msk [vmem:[#allocation2] sm:$0xff] %vm1258, %v1468
        %1474 = vst.msk [vmem:[#allocation2 + $0x8] sm:$0xff] %vm1258, %v1470
        %v1475 = vld [vmem:[#allocation2] sm:$0xff]
        %v1476 = vld [vmem:[#allocation2 + $0x8] sm:$0xff]
        %1477 = vst.msk [vmem:[#allocation3] sm:$0xff] %vm1044, 0.0
        %1478 = vst.msk [vmem:[#allocation3 + $0x8] sm:$0xff] %vm1044, 0.0
        %1479 = vst.msk [vmem:[#allocation3 + $0x10] sm:$0xff] %vm1044, 0.0
        %1480 = vst.msk [vmem:[#allocation3 + $0x4] sm:$0xff] %vm1044, %v1475
        %1481 = vst.msk [vmem:[#allocation3 + $0xc] sm:$0xff] %vm1044, %v1476
        %v1482 = vld [vmem:[#allocation3] sm:$0xff]
        %v1483 = vld [vmem:[#allocation3 + $0x8] sm:$0xff]
        %1484 = vst.msk [vmem:[#allocation4] sm:$0xff] %vm1044, %v1482
        %1485 = vst.msk [vmem:[#allocation4 + $0x8] sm:$0xff] %vm1044, %v1483
        %v1486 = vld [vmem:[#allocation3 + $0x2] sm:$0xff]
        %v1487 = vld [vmem:[#allocation3 + $0xa] sm:$0xff]
        %1490 = vrot.lane.b32.xlu0 %v1486, 24
        %v1491 = vpop.permute.xlu0 %1490
        %1492 = vrot.lane.b32.xlu0 %v1487, 24
        %v1493 = vpop.permute.xlu0 %1492
        %vm1496 = vcmask 392384
        %1497 = vst.msk [vmem:[#allocation4] sm:$0xff] %vm1496, %v1491
        %1498 = vst.msk [vmem:[#allocation4 + $0x8] sm:$0xff] %vm1496, %v1493
        %v1499 = vld [vmem:[#allocation3 + $0x4] sm:$0xff]
        %v1500 = vld [vmem:[#allocation3 + $0xc] sm:$0xff]
        %1503 = vrot.lane.b32.xlu0 %v1499, 48
        %v1504 = vpop.permute.xlu0 %1503
        %1505 = vrot.lane.b32.xlu0 %v1500, 48
        %v1506 = vpop.permute.xlu0 %1505
        %vm1509 = vcmask 589184
        %1510 = vst.msk [vmem:[#allocation4] sm:$0xff] %vm1509, %v1504
        %1511 = vst.msk [vmem:[#allocation4 + $0x8] sm:$0xff] %vm1509, %v1506
        %v1512 = vld [vmem:[#allocation3 + $0x6] sm:$0xff]
        %v1513 = vld [vmem:[#allocation3 + $0xe] sm:$0xff]
        %1516 = vrot.lane.b32.xlu0 %v1512, 72
        %v1517 = vpop.permute.xlu0 %1516
        %1518 = vrot.lane.b32.xlu0 %v1513, 72
        %v1519 = vpop.permute.xlu0 %1518
        %vm1522 = vcmask 785984
        %1523 = vst.msk [vmem:[#allocation4] sm:$0xff] %vm1522, %v1517
        %1524 = vst.msk [vmem:[#allocation4 + $0x8] sm:$0xff] %vm1522, %v1519
        %v1525 = vld [vmem:[#allocation3 + $0x8] sm:$0xff]
        %v1526 = vld [vmem:[#allocation3 + $0x10] sm:$0xff]
        %1529 = vrot.lane.b32.xlu0 %v1525, 96
        %v1530 = vpop.permute.xlu0 %1529
        %1531 = vrot.lane.b32.xlu0 %v1526, 96
        %v1532 = vpop.permute.xlu0 %1531
        %vm1535 = vcmask 982784
        %1536 = vst.msk [vmem:[#allocation4] sm:$0xff] %vm1535, %v1530
        %1537 = vst.msk [vmem:[#allocation4 + $0x8] sm:$0xff] %vm1535, %v1532
        %v1538 = vld [vmem:[#allocation4] sm:$0xff]
        %v1539 = vld [vmem:[#allocation4 + $0x8] sm:$0xff]
        %v1540 = vpack.c.bf16 %v1539, %v1538
        %v1541 = vld [vmem:[%s16] sm:$0xf]
        %v1542 = vld [vmem:[%s16 + $0x4] sm:$0xf]
        %v1543 = vld [vmem:[%s16 + $0x8] sm:$0xf]
        %v1544 = vld [vmem:[%s16 + $0xc] sm:$0xf]
        %v1545 = vld [vmem:[%s16 + $0x10] sm:$0xf]
        %v1546 = vld [vmem:[%s16 + $0x14] sm:$0xf]
        %v1547 = vld [vmem:[%s16 + $0x18] sm:$0xf]
        %v1548 = vld [vmem:[%s16 + $0x1c] sm:$0xf]
        %v1549 = vld [vmem:[%s16 + $0x20] sm:$0xf]
        %v1550 = vld [vmem:[%s16 + $0x24] sm:$0xf]
        %v1551 = vld [vmem:[%s16 + $0x28] sm:$0xf]
        %v1552 = vld [vmem:[%s16 + $0x2c] sm:$0xf]
        %v1553 = vld [vmem:[%s16 + $0x30] sm:$0xf]
        %v1554 = vld [vmem:[%s16 + $0x34] sm:$0xf]
        %v1555 = vld [vmem:[%s16 + $0x38] sm:$0xf]
        %v1571 = vunpack.c.l.b16 %v1541
        %v1572 = vunpack.c.l.b16 %v1542
        %v1573 = vunpack.c.l.b16 %v1543
        %v1574 = vunpack.c.l.b16 %v1544
        %v1575 = vunpack.c.l.b16 %v1545
        %v1576 = vunpack.c.l.b16 %v1546
        %v1577 = vunpack.c.l.b16 %v1547
        %v1578 = vunpack.c.l.b16 %v1548
        %v1579 = vunpack.c.l.b16 %v1549
        %v1580 = vunpack.c.l.b16 %v1550
        %v1581 = vunpack.c.l.b16 %v1551
        %v1582 = vunpack.c.l.b16 %v1552
        %v1583 = vunpack.c.l.b16 %v1553
        %v1584 = vunpack.c.l.b16 %v1554
        %v1585 = vunpack.c.l.b16 %v1555
        %v1586 = vpack.c.b16 %v1572, %v1571
        %v1587 = vpack.c.b16 %v1574, %v1573
        %v1588 = vpack.c.b16 %v1576, %v1575
        %v1589 = vpack.c.b16 %v1578, %v1577
        %v1590 = vpack.c.b16 %v1580, %v1579
        %v1591 = vpack.c.b16 %v1582, %v1581
        %v1592 = vpack.c.b16 %v1584, %v1583
        %v1593 = vpack.c.b16 %v1585, %v1585
        %vm1601 = vcmask 982016
        %v1603 = vsel %vm1601, %v1540, 0
        %v1606 = vsel %vm1314, %v1593, 0
        %1608 = vmatprep.subr.bf16.mxu0 0
        %1609 = vmatpush1.bf16.msra.mxu0 %v1586
        %1610 = vmatprep.subr.bf16.mxu0 0
        %1611 = vmatpush1.bf16.msra.mxu0 %v1587
        %1612 = vmatprep.subr.bf16.mxu0 0
        %1613 = vmatpush1.bf16.msra.mxu0 %v1588
        %1614 = vmatprep.subr.bf16.mxu0 0
        %1615 = vmatpush1.bf16.msra.mxu0 %v1589
        %1616 = vmatprep.subr.bf16.mxu0 0
        %1617 = vmatpush1.bf16.msra.mxu0 %v1590
        %1618 = vmatprep.subr.bf16.mxu0 0
        %1619 = vmatpush1.bf16.msra.mxu0 %v1591
        %1620 = vmatprep.subr.bf16.mxu0 0
        %1621 = vmatpush1.bf16.msra.mxu0 %v1592
        %1622 = vmatprep.subr.bf16.mxu0 0
        %1623 = vmatpush1.bf16.msra.mxu0 %v1606
        %1624 = vmatprep.subr.bf16.mxu0 0
        %1625 = vmatpush1.bf16.msra.mxu0 0
        %1626 = vmatprep.subr.bf16.mxu0 0
        %1627 = vmatpush1.bf16.msra.mxu0 0
        %1628 = vmatprep.subr.bf16.mxu0 0
        %1629 = vmatpush1.bf16.msra.mxu0 0
        %1630 = vmatprep.subr.bf16.mxu0 0
        %1631 = vmatpush1.bf16.msra.mxu0 0
        %1632 = vmatprep.subr.bf16.mxu0 0
        %1633 = vmatpush1.bf16.msra.mxu0 0
        %1634 = vmatprep.subr.bf16.mxu0 0
        %1635 = vmatpush1.bf16.msra.mxu0 0
        %1636 = vmatprep.subr.bf16.mxu0 0
        %1637 = vmatpush1.bf16.msra.mxu0 0
        %1638 = vmatprep.subr.bf16.mxu0 0
        %1639 = vmatpush1.bf16.msra.mxu0 0
        %1640 = vmatprep.mubr.bf16.mxu0 0
        %1641 = vmatmul.mubr.bf16.gmra.mrb[0].mxu0 %v1603
        %v1642 = vpop.f32.mrb[0].mxu0
        %v1643 = vadd.f32 0.0, %v1642
        %v1644 = vpop.f32.mrb[0].mxu0
        %v1645 = vpop.f32.mrb[0].mxu0
        %v1646 = vadd.f32 0.0, %v1645
        %v1647 = vpop.f32.mrb[0].mxu0
        %1648 = vdwg.mxu0
        %v1649 = vld [vmem:[%s17] sm:$0x1]
        %v1651 = vlaneseq
        %v1652 = vshrl.u32 %v1651, 7
        %v1653 = vsub.s32 0, %v1652
        %v1654 = vrot.slane %v1649, %v1653
        %v1656 = vmul.f32 %v1643, %v1654
        %v1657 = vmul.f32 %v1646, %v1654
        %v1658 = vld [vmem:[#allocation13] sm:$0x1]
        %v1660 = vlaneseq
        %v1661 = vshrl.u32 %v1660, 7
        %v1662 = vsub.s32 0, %v1661
        %v1663 = vrot.slane %v1658, %v1662
        %v1665 = vadd.f32 %v1656, %v1663
        %v1666 = vadd.f32 %v1657, %v1663
        %vm1667 = vcmp.gt.f32.partialorder %v1665, 0.0
        %vm1668 = vcmp.gt.f32.partialorder %v1666, 0.0
        %v1669 = vld [vmem:[%s19] sm:$0x1]
        %v1671 = vlaneseq
        %v1672 = vshrl.u32 %v1671, 7
        %v1673 = vsub.s32 0, %v1672
        %v1674 = vrot.slane %v1669, %v1673
        %v1676 = vmul.f32 %v1674, %v1665
        %v1677 = vmul.f32 %v1674, %v1666
        %v1678 = vsel %vm1667, %v1665, %v1676
        %v1679 = vsel %vm1668, %v1666, %v1677
        %1680 = vst.msk [vmem:[#allocation3] sm:$0xff] %vm1044, 0.0
        %1681 = vst.msk [vmem:[#allocation3 + $0x8] sm:$0xff] %vm1044, 0.0
        %1682 = vst.msk [vmem:[#allocation3 + $0x10] sm:$0xff] %vm1044, 0.0
        %1683 = vst.msk [vmem:[#allocation3 + $0x4] sm:$0xff] %vm1228, %v1678
        %1684 = vst.msk [vmem:[#allocation3 + $0xc] sm:$0xff] %vm1228, %v1679
        %v1685 = vld [vmem:[#allocation3] sm:$0xff]
        %v1686 = vld [vmem:[#allocation3 + $0x8] sm:$0xff]
        %1687 = vst.msk [vmem:[#allocation4] sm:$0xff] %vm1228, %v1685
        %1688 = vst.msk [vmem:[#allocation4 + $0x8] sm:$0xff] %vm1228, %v1686
        %v1689 = vld [vmem:[#allocation3 + $0x2] sm:$0xff]
        %v1690 = vld [vmem:[#allocation3 + $0xa] sm:$0xff]
        %1693 = vrot.lane.b32.xlu0 %v1689, 8
        %v1694 = vpop.permute.xlu0 %1693
        %1695 = vrot.lane.b32.xlu0 %v1690, 8
        %v1696 = vpop.permute.xlu0 %1695
        %1699 = vst.msk [vmem:[#allocation4] sm:$0xff] %vm1245, %v1694
        %1700 = vst.msk [vmem:[#allocation4 + $0x8] sm:$0xff] %vm1245, %v1696
        %v1701 = vld [vmem:[#allocation3 + $0x4] sm:$0xff]
        %v1702 = vld [vmem:[#allocation3 + $0xc] sm:$0xff]
        %1705 = vrot.lane.b32.xlu0 %v1701, 16
        %v1706 = vpop.permute.xlu0 %1705
        %1707 = vrot.lane.b32.xlu0 %v1702, 16
        %v1708 = vpop.permute.xlu0 %1707
        %1711 = vst.msk [vmem:[#allocation4] sm:$0xff] %vm1258, %v1706
        %1712 = vst.msk [vmem:[#allocation4 + $0x8] sm:$0xff] %vm1258, %v1708
        %v1713 = vld [vmem:[#allocation3 + $0x6] sm:$0xff]
        %v1714 = vld [vmem:[#allocation3 + $0xe] sm:$0xff]
        %1717 = vrot.lane.b32.xlu0 %v1713, 24
        %v1718 = vpop.permute.xlu0 %1717
        %1719 = vrot.lane.b32.xlu0 %v1714, 24
        %v1720 = vpop.permute.xlu0 %1719
        %1723 = vst.msk [vmem:[#allocation4] sm:$0xff] %vm1271, %v1718
        %1724 = vst.msk [vmem:[#allocation4 + $0x8] sm:$0xff] %vm1271, %v1720
        %v1725 = vld [vmem:[#allocation3 + $0x8] sm:$0xff]
        %v1726 = vld [vmem:[#allocation3 + $0x10] sm:$0xff]
        %1729 = vrot.lane.b32.xlu0 %v1725, 32
        %v1730 = vpop.permute.xlu0 %1729
        %1731 = vrot.lane.b32.xlu0 %v1726, 32
        %v1732 = vpop.permute.xlu0 %1731
        %1735 = vst.msk [vmem:[#allocation4] sm:$0xff] %vm1284, %v1730
        %1736 = vst.msk [vmem:[#allocation4 + $0x8] sm:$0xff] %vm1284, %v1732
        %v1737 = vld [vmem:[#allocation4] sm:$0xff]
        %v1738 = vld [vmem:[#allocation4 + $0x8] sm:$0xff]
        %v1739 = vpack.c.bf16 %v1738, %v1737
        %v1740 = vld [vmem:[%s20] sm:$0xf]
        %v1741 = vld [vmem:[%s20 + $0x4] sm:$0xf]
        %v1742 = vld [vmem:[%s20 + $0x8] sm:$0xf]
        %v1743 = vld [vmem:[%s20 + $0xc] sm:$0xf]
        %v1744 = vld [vmem:[%s20 + $0x10] sm:$0xf]
        %v1750 = vunpack.c.l.b16 %v1740
        %v1751 = vunpack.c.l.b16 %v1741
        %v1752 = vunpack.c.l.b16 %v1742
        %v1753 = vunpack.c.l.b16 %v1743
        %v1754 = vunpack.c.l.b16 %v1744
        %v1755 = vpack.c.b16 %v1751, %v1750
        %v1756 = vpack.c.b16 %v1753, %v1752
        %v1757 = vpack.c.b16 %v1754, %v1754
        %v1761 = vsel %vm1310, %v1739, 0
        %v1764 = vsel %vm1314, %v1757, 0
        %1766 = vmatprep.subr.bf16.mxu0 0
        %1767 = vmatpush1.bf16.msra.mxu0 %v1755
        %1768 = vmatprep.subr.bf16.mxu0 0
        %1769 = vmatpush1.bf16.msra.mxu0 %v1756
        %1770 = vmatprep.subr.bf16.mxu0 0
        %1771 = vmatpush1.bf16.msra.mxu0 %v1764
        %1772 = vmatprep.subr.bf16.mxu0 0
        %1773 = vmatpush1.bf16.msra.mxu0 0
        %1774 = vmatprep.subr.bf16.mxu0 0
        %1775 = vmatpush1.bf16.msra.mxu0 0
        %1776 = vmatprep.subr.bf16.mxu0 0
        %1777 = vmatpush1.bf16.msra.mxu0 0
        %1778 = vmatprep.subr.bf16.mxu0 0
        %1779 = vmatpush1.bf16.msra.mxu0 0
        %1780 = vmatprep.subr.bf16.mxu0 0
        %1781 = vmatpush1.bf16.msra.mxu0 0
        %1782 = vmatprep.subr.bf16.mxu0 0
        %1783 = vmatpush1.bf16.msra.mxu0 0
        %1784 = vmatprep.subr.bf16.mxu0 0
        %1785 = vmatpush1.bf16.msra.mxu0 0
        %1786 = vmatprep.subr.bf16.mxu0 0
        %1787 = vmatpush1.bf16.msra.mxu0 0
        %1788 = vmatprep.subr.bf16.mxu0 0
        %1789 = vmatpush1.bf16.msra.mxu0 0
        %1790 = vmatprep.subr.bf16.mxu0 0
        %1791 = vmatpush1.bf16.msra.mxu0 0
        %1792 = vmatprep.subr.bf16.mxu0 0
        %1793 = vmatpush1.bf16.msra.mxu0 0
        %1794 = vmatprep.subr.bf16.mxu0 0
        %1795 = vmatpush1.bf16.msra.mxu0 0
        %1796 = vmatprep.subr.bf16.mxu0 0
        %1797 = vmatpush1.bf16.msra.mxu0 0
        %1798 = vmatprep.mubr.bf16.mxu0 0
        %1799 = vmatmul.mubr.bf16.gmra.mrb[0].mxu0 %v1761
        %v1800 = vpop.f32.mrb[0].mxu0
        %v1801 = vadd.f32 0.0, %v1800
        %v1802 = vpop.f32.mrb[0].mxu0
        %v1803 = vpop.f32.mrb[0].mxu0
        %v1804 = vadd.f32 0.0, %v1803
        %v1805 = vpop.f32.mrb[0].mxu0
        %1806 = vdwg.mxu0
        %v1807 = vld [vmem:[%s21] sm:$0x1]
        %v1809 = vlaneseq
        %v1810 = vshrl.u32 %v1809, 7
        %v1811 = vsub.s32 0, %v1810
        %v1812 = vrot.slane %v1807, %v1811
        %v1814 = vmul.f32 %v1801, %v1812
        %v1815 = vmul.f32 %v1804, %v1812
        %v1816 = vld [vmem:[#allocation15] sm:$0x1]
        %v1818 = vlaneseq
        %v1819 = vshrl.u32 %v1818, 7
        %v1820 = vsub.s32 0, %v1819
        %v1821 = vrot.slane %v1816, %v1820
        %v1823 = vadd.f32 %v1814, %v1821
        %v1824 = vadd.f32 %v1815, %v1821
        %vm1825 = vcmp.gt.f32.partialorder %v1823, 0.0
        %vm1826 = vcmp.gt.f32.partialorder %v1824, 0.0
        %v1827 = vld [vmem:[%s23] sm:$0x1]
        %v1829 = vlaneseq
        %v1830 = vshrl.u32 %v1829, 7
        %v1831 = vsub.s32 0, %v1830
        %v1832 = vrot.slane %v1827, %v1831
        %v1834 = vmul.f32 %v1832, %v1823
        %v1835 = vmul.f32 %v1832, %v1824
        %v1836 = vsel %vm1825, %v1823, %v1834
        %v1837 = vsel %vm1826, %v1824, %v1835
        %v1838 = vpack.c.bf16 %v1476, %v1475
        %v1839 = vld [vmem:[#allocation16] sm:$0xf]
        %v1840 = vld [vmem:[#allocation16 + $0x4] sm:$0xf]
        %v1841 = vld [vmem:[#allocation16 + $0x8] sm:$0xf]
        %v1842 = vld [vmem:[#allocation18] sm:$0x1]
        %v1844 = vlaneseq
        %v1845 = vshrl.u32 %v1844, 7
        %v1846 = vsub.s32 0, %v1845
        %v1847 = vrot.slane %v1842, %v1846
        %v1852 = vunpack.c.l.b16 %v1839
        %v1853 = vunpack.c.l.b16 %v1840
        %v1854 = vunpack.c.l.b16 %v1841
        %v1855 = vpack.c.b16 %v1853, %v1852
        %v1856 = vpack.c.b16 %v1854, %v1854
        %v1859 = vsel %vm1044, %v1838, 0
        %v1862 = vsel %vm1314, %v1856, 0
        %1864 = vmatprep.subr.bf16.mxu0 0
        %1865 = vmatpush1.bf16.msra.mxu0 %v1855
        %1866 = vmatprep.subr.bf16.mxu0 0
        %1867 = vmatpush1.bf16.msra.mxu0 %v1862
        %1868 = vmatprep.subr.bf16.mxu0 0
        %1869 = vmatpush1.bf16.msra.mxu0 0
        %1870 = vmatprep.subr.bf16.mxu0 0
        %1871 = vmatpush1.bf16.msra.mxu0 0
        %1872 = vmatprep.subr.bf16.mxu0 0
        %1873 = vmatpush1.bf16.msra.mxu0 0
        %1874 = vmatprep.subr.bf16.mxu0 0
        %1875 = vmatpush1.bf16.msra.mxu0 0
        %1876 = vmatprep.subr.bf16.mxu0 0
        %1877 = vmatpush1.bf16.msra.mxu0 0
        %1878 = vmatprep.subr.bf16.mxu0 0
        %1879 = vmatpush1.bf16.msra.mxu0 0
        %1880 = vmatprep.subr.bf16.mxu0 0
        %1881 = vmatpush1.bf16.msra.mxu0 0
        %1882 = vmatprep.subr.bf16.mxu0 0
        %1883 = vmatpush1.bf16.msra.mxu0 0
        %1884 = vmatprep.subr.bf16.mxu0 0
        %1885 = vmatpush1.bf16.msra.mxu0 0
        %1886 = vmatprep.subr.bf16.mxu0 0
        %1887 = vmatpush1.bf16.msra.mxu0 0
        %1888 = vmatprep.subr.bf16.mxu0 0
        %1889 = vmatpush1.bf16.msra.mxu0 0
        %1890 = vmatprep.subr.bf16.mxu0 0
        %1891 = vmatpush1.bf16.msra.mxu0 0
        %1892 = vmatprep.subr.bf16.mxu0 0
        %1893 = vmatpush1.bf16.msra.mxu0 0
        %1894 = vmatprep.subr.bf16.mxu0 0
        %1895 = vmatpush1.bf16.msra.mxu0 0
        %1896 = vmatprep.mubr.bf16.mxu0 0
        %1897 = vmatmul.mubr.bf16.gmra.mrb[0].mxu0 %v1859
        %v1898 = vpop.f32.mrb[0].mxu0
        %v1899 = vadd.f32 %v1847, %v1898
        %v1900 = vpop.f32.mrb[0].mxu0
        %v1901 = vpop.f32.mrb[0].mxu0
        %v1902 = vadd.f32 %v1847, %v1901
        %v1903 = vpop.f32.mrb[0].mxu0
        %1904 = vdwg.mxu0
        %v1905 = vadd.f32 %v1836, %v1899
        %v1906 = vadd.f32 %v1837, %v1902
        %vm1907 = vcmp.gt.f32.partialorder %v1905, 0.0
        %vm1908 = vcmp.gt.f32.partialorder %v1906, 0.0
        %v1909 = vld [vmem:[%s26] sm:$0x1]
        %v1911 = vlaneseq
        %v1912 = vshrl.u32 %v1911, 7
        %v1913 = vsub.s32 0, %v1912
        %v1914 = vrot.slane %v1909, %v1913
        %v1916 = vmul.f32 %v1914, %v1905
        %v1917 = vmul.f32 %v1914, %v1906
        %v1918 = vsel %vm1907, %v1905, %v1916
        %v1919 = vsel %vm1908, %v1906, %v1917
        %1922 = vrot.lane.b32.xlu0 %v1918, 24
        %v1923 = vpop.permute.xlu0 %1922
        %1924 = vrot.lane.b32.xlu0 %v1919, 24
        %v1925 = vpop.permute.xlu0 %1924
        %1928 = vst.msk [vmem:[#allocation2] sm:$0xff] %vm1271, %v1923
        %1929 = vst.msk [vmem:[#allocation2 + $0x8] sm:$0xff] %vm1271, %v1925
        %v1930 = vld [vmem:[#allocation2] sm:$0xff]
        %v1931 = vld [vmem:[#allocation2 + $0x8] sm:$0xff]
        %1932 = vst.msk [vmem:[%s942] sm:$0xff] %vm963, %v1930
        %1933 = vst.msk [vmem:[%s942 + $0x8] sm:$0xff] %vm963, %v1931
        %p1934 = scmp.lt.s32.totalorder %s45, 1
        %s1935 = scalar_select %p1934, %s45, 1
        %s1936 = smul.addr %s1935, 2
        %s1937 = smul.addr %s1936, 8
        %s1938 = scalar_lea.vmem %s27, %s1937
        // Predicated region
        $region165: #{_lambda_.2} parent=127 // pred_check
          %p1939 = pneg %p635
        $region166: #{_lambda_.2} parent=127 // pred_check_branch
          %1941 = sbr.rel (%p1939) target = $region168
        $region167: #{_lambda_.2} parent=127 // pred_region
          _
        $region168: #{_lambda_.2} parent=127 // pred_fallthru
          _
      $region128: #{_lambda_.2} parent=5 // pred_fallthru
        _
      %p1942 = scmp.le.s32.totalorder 2, %s40
      // Predicated region
      $region169: #{_lambda_.2} parent=5 // pred_check
        %p1943 = pneg %p1942
      $region170: #{_lambda_.2} parent=5 // pred_check_branch
        %1945 = sbr.rel (%p1943) target = $region172
      $region171: #{_lambda_.2} parent=5 // pred_region
        %s1946 = ssub.s32 %s40, 2
        // Predicated region
        $region173: #{_lambda_.2} parent=171 // pred_check
          %p1947 = pneg %p641
        $region174: #{_lambda_.2} parent=171 // pred_check_branch
          %1949 = sbr.rel (%p1947) target = $region176
        $region175: #{_lambda_.2} parent=171 // pred_region
          %p1950 = scmp.lt.s32.totalorder %s46, 1
          %s1951 = scalar_select %p1950, %s46, 1
          %s1952 = smul.addr %s1951, 2
          %s1953 = smul.addr %s1952, 8
          %s1954 = scalar_lea.vmem %s27, %s1953
        $region176: #{_lambda_.2} parent=171 // pred_fallthru
          _
      $region172: #{_lambda_.2} parent=5 // pred_fallthru
        _
    $region6: #{_lambda_.2} parent=1 // loop_footer
      %s44 = sadd.s32 1, %s40
    $region7: #{_lambda_.2} parent=1 // loop_footer_branch
      %39 = sbr.rel target = $region3
    $region8: #{_lambda_.2} parent=1 // loop_exit
      _
    %1955 = vsyncpa [#allocation6], 1
    %s1956 = scalar_lea.sflag [#allocation6], 1
    %1957 = vsyncpa %s1956, 1
    %1958 = vsyncpa [#allocation8], 1
    %1959 = vsyncpa [#allocation11], 1
    %1960 = vsyncpa [#allocation14], 1
    %1961 = vsyncpa [#allocation17], 1

// kernel: _lambda_.3
$region0: #{_lambda_.3}
  #allocation0 [shape = 'u32[]', space=smem, size = 0x4, offset = 0x4, fixed_abs, tag = 'smem constant byte address 0x4 - core index']
  #allocation1 [shape = 'u32[144,128]{1,0:T(1,128)}', space=vmem, size = 0x12000, scoped, tag = 'internal scratch']
  #allocation2 [shape = 'f32[16,32]{1,0:T(8,128)}', space=vmem, size = 0x2000, scoped, tag = 'scratch operand']
  #allocation3 [shape = 'f32[24,24]{1,0:T(8,128)}', space=vmem, size = 0x3000, scoped, tag = 'scratch operand']
  #allocation4 [shape = 'f32[16,120]{1,0:T(8,128)}', space=vmem, size = 0x2000, scoped, tag = 'scratch operand']
  %s0 = inlined_call_operand.smem [shape: u32[30], index: -1, kind: input, shape index: {}]
  %s1 = sld [smem:[%s0]]
  %s2 = scalar_lea.smem %s0, 1
  %s3 = sld [smem:[%s2]]
  %s4 = scalar_lea.smem %s0, 2
  %s5 = sld [smem:[%s4]]
  %s6 = scalar_lea.smem %s0, 3
  %s7 = sld [smem:[%s6]]
  %s8 = scalar_lea.smem %s0, 4
  %s9 = sld [smem:[%s8]]
  %s10 = scalar_lea.smem %s0, 5
  %s11 = sld [smem:[%s10]]
  %s12 = scalar_lea.smem %s0, 6
  %s13 = sld [smem:[%s12]]
  %s14 = scalar_lea.smem %s0, 7
  %s15 = sld [smem:[%s14]]
  %s16 = scalar_lea.smem %s0, 8
  %s17 = sld [smem:[%s16]]
  %s18 = scalar_lea.smem %s0, 9
  %s19 = sld [smem:[%s18]]
  %s20 = scalar_lea.smem %s0, 10
  %s21 = sld [smem:[%s20]]
  %s22 = scalar_lea.smem %s0, 11
  %s23 = sld [smem:[%s22]]
  %s24 = scalar_lea.smem %s0, 12
  %s25 = sld [smem:[%s24]]
  %s26 = scalar_lea.smem %s0, 13
  %s27 = sld [smem:[%s26]]
  %s28 = scalar_lea.smem %s0, 14
  %s29 = sld [smem:[%s28]]
  %s30 = scalar_lea.smem %s0, 15
  %s31 = sld [smem:[%s30]]
  %s32 = scalar_lea.smem %s0, 16
  %s33 = sld [smem:[%s32]]
  %s34 = scalar_lea.smem %s0, 17
  %s35 = sld [smem:[%s34]]
  %s36 = scalar_lea.smem %s0, 18
  %s37 = sld [smem:[%s36]]
  %s38 = scalar_lea.smem %s0, 19
  %s39 = sld [smem:[%s38]]
  %s40 = scalar_lea.smem %s0, 20
  %s41 = sld [smem:[%s40]]
  %s42 = scalar_lea.smem %s0, 21
  %s43 = sld [smem:[%s42]]
  %s44 = scalar_lea.smem %s0, 22
  %s45 = sld [smem:[%s44]]
  %s46 = scalar_lea.smem %s0, 23
  %s47 = sld [smem:[%s46]]
  %s48 = scalar_lea.smem %s0, 24
  %s49 = sld [smem:[%s48]]
  %s50 = scalar_lea.smem %s0, 25
  %s51 = sld [smem:[%s50]]
  %s52 = scalar_lea.smem %s0, 26
  %s53 = sld [smem:[%s52]]
  %s54 = scalar_lea.smem %s0, 27
  %s55 = sld [smem:[%s54]]
  %s56 = scalar_lea.smem %s0, 28
  %s57 = sld [smem:[%s56]]
  %s58 = scalar_lea.smem %s0, 29
  %s59 = sld [smem:[%s58]]
  %s60 = sld [smem:[#allocation0]]
  $region149: #{_lambda_.3} parent=0
    _
  %s62 = ssub.s32 1, %s60
  %s63 = scalar_select 0, %s62, %s60
  $region1: #{_lambda_.3} parent=0
    #allocation5 [shape = 'u8[16384]{0}', space=vmem, size = 0x4000, scoped, tag = 'output window, operand 0']
    #allocation6 [shape = 's32[2]{0}', space=sflag, size = 0x8, scoped, tag = 'scoped memory for _lambda_.3']
    %64 = vsyncpa [#allocation6], 0
    %s65 = scalar_lea.sflag [#allocation6], 1
    %66 = vsyncpa %s65, 0
    loop: start=0, step=1, limit=4
    $region2: #{_lambda_.3} parent=1 // loop_pre_header
      _
    $region3: #{_lambda_.3} parent=1 // loop_header
      %s68 = sphi 0, %s72
      %p69 = scmp.ge.s32.totalorder %s68, 4
      %s78 = sphi 0, %s80
      %s81 = sphi 0, %s78
      %s82 = sphi 0, %s81
      %s98 = sphi 0, %s82
      %s102 = sphi 0, %s102
      %s104 = sphi 0, %s102
      %s105 = sphi 0, %s104
      %s119 = sphi 0, %s105
      %s123 = sphi 0, %s123
      %s125 = sphi 0, %s123
      %s126 = sphi 0, %s125
      %s140 = sphi 0, %s126
      %s144 = sphi 0, %s144
      %s146 = sphi 0, %s144
      %s147 = sphi 0, %s146
      %s161 = sphi 0, %s147
      %s165 = sphi 0, %s165
      %s167 = sphi 0, %s165
      %s168 = sphi 0, %s167
      %s182 = sphi 0, %s168
      %s186 = sphi 0, %s186
      %s188 = sphi 0, %s186
      %s189 = sphi 0, %s188
      %s203 = sphi 0, %s189
      %s207 = sphi 0, %s207
      %s209 = sphi 0, %s207
      %s210 = sphi 0, %s209
      %s224 = sphi 0, %s210
      %s228 = sphi 0, %s228
      %s230 = sphi 0, %s228
      %s231 = sphi 0, %s230
      %s245 = sphi 0, %s231
      %s249 = sphi 0, %s249
      %s251 = sphi 0, %s249
      %s252 = sphi 0, %s251
      %s266 = sphi 0, %s252
      %s270 = sphi 0, %s270
      %s272 = sphi 0, %s270
      %s273 = sphi 0, %s272
      %s287 = sphi 0, %s273
      %s291 = sphi 0, %s291
      %s293 = sphi 0, %s291
      %s294 = sphi 0, %s293
      %s308 = sphi 0, %s294
      %s312 = sphi 0, %s312
      %s314 = sphi 0, %s312
      %s315 = sphi 0, %s314
      %s329 = sphi 0, %s315
      %s333 = sphi 0, %s333
      %s335 = sphi 0, %s333
      %s336 = sphi 0, %s335
      %s350 = sphi 0, %s336
      %s354 = sphi 0, %s354
      %s356 = sphi 0, %s354
      %s357 = sphi 0, %s356
      %s371 = sphi 0, %s357
      %s375 = sphi 0, %s375
      %s377 = sphi 0, %s375
      %s378 = sphi 0, %s377
      %s392 = sphi 0, %s378
      %s396 = sphi 0, %s396
      %s398 = sphi 0, %s396
      %s399 = sphi 0, %s398
      %s413 = sphi 0, %s399
      %s417 = sphi 0, %s417
      %s419 = sphi 0, %s417
      %s420 = sphi 0, %s419
      %s434 = sphi 0, %s420
      %s438 = sphi 0, %s438
      %s440 = sphi 0, %s438
      %s441 = sphi 0, %s440
      %s455 = sphi 0, %s441
      %s459 = sphi 0, %s459
      %s461 = sphi 0, %s459
      %s462 = sphi 0, %s461
      %s476 = sphi 0, %s462
      %s480 = sphi 0, %s480
      %s482 = sphi 0, %s480
      %s483 = sphi 0, %s482
      %s497 = sphi 0, %s483
      %s501 = sphi 0, %s501
      %s503 = sphi 0, %s501
      %s504 = sphi 0, %s503
      %s518 = sphi 0, %s504
      %s522 = sphi 0, %s522
      %s524 = sphi 0, %s522
      %s525 = sphi 0, %s524
      %s539 = sphi 0, %s525
      %s543 = sphi 0, %s543
      %s545 = sphi 0, %s543
      %s546 = sphi 0, %s545
      %s560 = sphi 0, %s546
      %s564 = sphi 0, %s564
      %s566 = sphi 0, %s564
      %s567 = sphi 0, %s566
      %s581 = sphi 0, %s567
      %s585 = sphi 0, %s585
      %s587 = sphi 0, %s585
      %s588 = sphi 0, %s587
      %s602 = sphi 0, %s588
      %s606 = sphi 0, %s606
      %s608 = sphi 0, %s606
      %s609 = sphi 0, %s608
      %s623 = sphi 0, %s609
      %s627 = sphi 0, %s627
      %s629 = sphi 0, %s627
      %s630 = sphi 0, %s629
      %s644 = sphi 0, %s630
      %s648 = sphi 0, %s648
      %s650 = sphi 0, %s648
      %s651 = sphi 0, %s650
      %s665 = sphi 0, %s651
      %s669 = sphi 0, %s669
      %s671 = sphi 0, %s669
      %s672 = sphi 0, %s671
      %s686 = sphi 0, %s672
      %s692 = sphi 0, %s694
      %s695 = sphi 0, %s692
      %s696 = sphi 0, %s695
      %s712 = sphi 0, %s696
    $region4: #{_lambda_.3} parent=1 // loop_header_branch
      %71 = sbr.rel (%p69) target = $region8
    $region5: #{_lambda_.3} parent=1 // loop_body
      %s73 = ssub.s32 %s68, 1
      %s74 = ssub.s32 %s68, 2
      %s75 = sadd.s32 %s68, 1
      %s76 = ssub.s32 %s68, %s75
      %p77 = scmp.eq.s32.totalorder %s76, 0
      %s79 = sadd.s32 %s78, 1
      %s80 = scalar_select %p77, %s78, %s79
      %p83 = pneg %p77
      %p84 = scmp.eq.s32.totalorder %s68, 1
      %p85 = por %p83, %p84
      %p86 = scmp.ne.s32.totalorder %s78, %s81
      %p87 = scmp.eq.s32.totalorder %s68, 0
      %p88 = por %p86, %p87
      %p89 = scmp.ne.s32.totalorder %s78, %s81
      %p90 = scmp.eq.s32.totalorder %s73, 1
      %p91 = por %p89, %p90
      %p92 = scmp.ne.s32.totalorder %s81, %s82
      %p93 = scmp.eq.s32.totalorder %s73, 0
      %p94 = por %p92, %p93
      %p95 = scmp.ne.s32.totalorder %s81, %s82
      %p96 = scmp.eq.s32.totalorder %s74, 1
      %p97 = por %p95, %p96
      %p99 = scmp.ne.s32.totalorder %s82, %s98
      %p100 = scmp.eq.s32.totalorder %s74, 0
      %p101 = por %p99, %p100
      %s103 = sadd.s32 %s102, 1
      %p106 = scmp.eq.s32.totalorder %s68, 1
      %p107 = scmp.ne.s32.totalorder %s102, %s104
      %p108 = scmp.eq.s32.totalorder %s68, 0
      %p109 = por %p107, %p108
      %p110 = scmp.ne.s32.totalorder %s102, %s104
      %p111 = scmp.eq.s32.totalorder %s73, 1
      %p112 = por %p110, %p111
      %p113 = scmp.ne.s32.totalorder %s104, %s105
      %p114 = scmp.eq.s32.totalorder %s73, 0
      %p115 = por %p113, %p114
      %p116 = scmp.ne.s32.totalorder %s104, %s105
      %p117 = scmp.eq.s32.totalorder %s74, 1
      %p118 = por %p116, %p117
      %p120 = scmp.ne.s32.totalorder %s105, %s119
      %p121 = scmp.eq.s32.totalorder %s74, 0
      %p122 = por %p120, %p121
      %s124 = sadd.s32 %s123, 1
      %p127 = scmp.eq.s32.totalorder %s68, 1
      %p128 = scmp.ne.s32.totalorder %s123, %s125
      %p129 = scmp.eq.s32.totalorder %s68, 0
      %p130 = por %p128, %p129
      %p131 = scmp.ne.s32.totalorder %s123, %s125
      %p132 = scmp.eq.s32.totalorder %s73, 1
      %p133 = por %p131, %p132
      %p134 = scmp.ne.s32.totalorder %s125, %s126
      %p135 = scmp.eq.s32.totalorder %s73, 0
      %p136 = por %p134, %p135
      %p137 = scmp.ne.s32.totalorder %s125, %s126
      %p138 = scmp.eq.s32.totalorder %s74, 1
      %p139 = por %p137, %p138
      %p141 = scmp.ne.s32.totalorder %s126, %s140
      %p142 = scmp.eq.s32.totalorder %s74, 0
      %p143 = por %p141, %p142
      %s145 = sadd.s32 %s144, 1
      %p148 = scmp.eq.s32.totalorder %s68, 1
      %p149 = scmp.ne.s32.totalorder %s144, %s146
      %p150 = scmp.eq.s32.totalorder %s68, 0
      %p151 = por %p149, %p150
      %p152 = scmp.ne.s32.totalorder %s144, %s146
      %p153 = scmp.eq.s32.totalorder %s73, 1
      %p154 = por %p152, %p153
      %p155 = scmp.ne.s32.totalorder %s146, %s147
      %p156 = scmp.eq.s32.totalorder %s73, 0
      %p157 = por %p155, %p156
      %p158 = scmp.ne.s32.totalorder %s146, %s147
      %p159 = scmp.eq.s32.totalorder %s74, 1
      %p160 = por %p158, %p159
      %p162 = scmp.ne.s32.totalorder %s147, %s161
      %p163 = scmp.eq.s32.totalorder %s74, 0
      %p164 = por %p162, %p163
      %s166 = sadd.s32 %s165, 1
      %p169 = scmp.eq.s32.totalorder %s68, 1
      %p170 = scmp.ne.s32.totalorder %s165, %s167
      %p171 = scmp.eq.s32.totalorder %s68, 0
      %p172 = por %p170, %p171
      %p173 = scmp.ne.s32.totalorder %s165, %s167
      %p174 = scmp.eq.s32.totalorder %s73, 1
      %p175 = por %p173, %p174
      %p176 = scmp.ne.s32.totalorder %s167, %s168
      %p177 = scmp.eq.s32.totalorder %s73, 0
      %p178 = por %p176, %p177
      %p179 = scmp.ne.s32.totalorder %s167, %s168
      %p180 = scmp.eq.s32.totalorder %s74, 1
      %p181 = por %p179, %p180
      %p183 = scmp.ne.s32.totalorder %s168, %s182
      %p184 = scmp.eq.s32.totalorder %s74, 0
      %p185 = por %p183, %p184
      %s187 = sadd.s32 %s186, 1
      %p190 = scmp.eq.s32.totalorder %s68, 1
      %p191 = scmp.ne.s32.totalorder %s186, %s188
      %p192 = scmp.eq.s32.totalorder %s68, 0
      %p193 = por %p191, %p192
      %p194 = scmp.ne.s32.totalorder %s186, %s188
      %p195 = scmp.eq.s32.totalorder %s73, 1
      %p196 = por %p194, %p195
      %p197 = scmp.ne.s32.totalorder %s188, %s189
      %p198 = scmp.eq.s32.totalorder %s73, 0
      %p199 = por %p197, %p198
      %p200 = scmp.ne.s32.totalorder %s188, %s189
      %p201 = scmp.eq.s32.totalorder %s74, 1
      %p202 = por %p200, %p201
      %p204 = scmp.ne.s32.totalorder %s189, %s203
      %p205 = scmp.eq.s32.totalorder %s74, 0
      %p206 = por %p204, %p205
      %s208 = sadd.s32 %s207, 1
      %p211 = scmp.eq.s32.totalorder %s68, 1
      %p212 = scmp.ne.s32.totalorder %s207, %s209
      %p213 = scmp.eq.s32.totalorder %s68, 0
      %p214 = por %p212, %p213
      %p215 = scmp.ne.s32.totalorder %s207, %s209
      %p216 = scmp.eq.s32.totalorder %s73, 1
      %p217 = por %p215, %p216
      %p218 = scmp.ne.s32.totalorder %s209, %s210
      %p219 = scmp.eq.s32.totalorder %s73, 0
      %p220 = por %p218, %p219
      %p221 = scmp.ne.s32.totalorder %s209, %s210
      %p222 = scmp.eq.s32.totalorder %s74, 1
      %p223 = por %p221, %p222
      %p225 = scmp.ne.s32.totalorder %s210, %s224
      %p226 = scmp.eq.s32.totalorder %s74, 0
      %p227 = por %p225, %p226
      %s229 = sadd.s32 %s228, 1
      %p232 = scmp.eq.s32.totalorder %s68, 1
      %p233 = scmp.ne.s32.totalorder %s228, %s230
      %p234 = scmp.eq.s32.totalorder %s68, 0
      %p235 = por %p233, %p234
      %p236 = scmp.ne.s32.totalorder %s228, %s230
      %p237 = scmp.eq.s32.totalorder %s73, 1
      %p238 = por %p236, %p237
      %p239 = scmp.ne.s32.totalorder %s230, %s231
      %p240 = scmp.eq.s32.totalorder %s73, 0
      %p241 = por %p239, %p240
      %p242 = scmp.ne.s32.totalorder %s230, %s231
      %p243 = scmp.eq.s32.totalorder %s74, 1
      %p244 = por %p242, %p243
      %p246 = scmp.ne.s32.totalorder %s231, %s245
      %p247 = scmp.eq.s32.totalorder %s74, 0
      %p248 = por %p246, %p247
      %s250 = sadd.s32 %s249, 1
      %p253 = scmp.eq.s32.totalorder %s68, 1
      %p254 = scmp.ne.s32.totalorder %s249, %s251
      %p255 = scmp.eq.s32.totalorder %s68, 0
      %p256 = por %p254, %p255
      %p257 = scmp.ne.s32.totalorder %s249, %s251
      %p258 = scmp.eq.s32.totalorder %s73, 1
      %p259 = por %p257, %p258
      %p260 = scmp.ne.s32.totalorder %s251, %s252
      %p261 = scmp.eq.s32.totalorder %s73, 0
      %p262 = por %p260, %p261
      %p263 = scmp.ne.s32.totalorder %s251, %s252
      %p264 = scmp.eq.s32.totalorder %s74, 1
      %p265 = por %p263, %p264
      %p267 = scmp.ne.s32.totalorder %s252, %s266
      %p268 = scmp.eq.s32.totalorder %s74, 0
      %p269 = por %p267, %p268
      %s271 = sadd.s32 %s270, 1
      %p274 = scmp.eq.s32.totalorder %s68, 1
      %p275 = scmp.ne.s32.totalorder %s270, %s272
      %p276 = scmp.eq.s32.totalorder %s68, 0
      %p277 = por %p275, %p276
      %p278 = scmp.ne.s32.totalorder %s270, %s272
      %p279 = scmp.eq.s32.totalorder %s73, 1
      %p280 = por %p278, %p279
      %p281 = scmp.ne.s32.totalorder %s272, %s273
      %p282 = scmp.eq.s32.totalorder %s73, 0
      %p283 = por %p281, %p282
      %p284 = scmp.ne.s32.totalorder %s272, %s273
      %p285 = scmp.eq.s32.totalorder %s74, 1
      %p286 = por %p284, %p285
      %p288 = scmp.ne.s32.totalorder %s273, %s287
      %p289 = scmp.eq.s32.totalorder %s74, 0
      %p290 = por %p288, %p289
      %s292 = sadd.s32 %s291, 1
      %p295 = scmp.eq.s32.totalorder %s68, 1
      %p296 = scmp.ne.s32.totalorder %s291, %s293
      %p297 = scmp.eq.s32.totalorder %s68, 0
      %p298 = por %p296, %p297
      %p299 = scmp.ne.s32.totalorder %s291, %s293
      %p300 = scmp.eq.s32.totalorder %s73, 1
      %p301 = por %p299, %p300
      %p302 = scmp.ne.s32.totalorder %s293, %s294
      %p303 = scmp.eq.s32.totalorder %s73, 0
      %p304 = por %p302, %p303
      %p305 = scmp.ne.s32.totalorder %s293, %s294
      %p306 = scmp.eq.s32.totalorder %s74, 1
      %p307 = por %p305, %p306
      %p309 = scmp.ne.s32.totalorder %s294, %s308
      %p310 = scmp.eq.s32.totalorder %s74, 0
      %p311 = por %p309, %p310
      %s313 = sadd.s32 %s312, 1
      %p316 = scmp.eq.s32.totalorder %s68, 1
      %p317 = scmp.ne.s32.totalorder %s312, %s314
      %p318 = scmp.eq.s32.totalorder %s68, 0
      %p319 = por %p317, %p318
      %p320 = scmp.ne.s32.totalorder %s312, %s314
      %p321 = scmp.eq.s32.totalorder %s73, 1
      %p322 = por %p320, %p321
      %p323 = scmp.ne.s32.totalorder %s314, %s315
      %p324 = scmp.eq.s32.totalorder %s73, 0
      %p325 = por %p323, %p324
      %p326 = scmp.ne.s32.totalorder %s314, %s315
      %p327 = scmp.eq.s32.totalorder %s74, 1
      %p328 = por %p326, %p327
      %p330 = scmp.ne.s32.totalorder %s315, %s329
      %p331 = scmp.eq.s32.totalorder %s74, 0
      %p332 = por %p330, %p331
      %s334 = sadd.s32 %s333, 1
      %p337 = scmp.eq.s32.totalorder %s68, 1
      %p338 = scmp.ne.s32.totalorder %s333, %s335
      %p339 = scmp.eq.s32.totalorder %s68, 0
      %p340 = por %p338, %p339
      %p341 = scmp.ne.s32.totalorder %s333, %s335
      %p342 = scmp.eq.s32.totalorder %s73, 1
      %p343 = por %p341, %p342
      %p344 = scmp.ne.s32.totalorder %s335, %s336
      %p345 = scmp.eq.s32.totalorder %s73, 0
      %p346 = por %p344, %p345
      %p347 = scmp.ne.s32.totalorder %s335, %s336
      %p348 = scmp.eq.s32.totalorder %s74, 1
      %p349 = por %p347, %p348
      %p351 = scmp.ne.s32.totalorder %s336, %s350
      %p352 = scmp.eq.s32.totalorder %s74, 0
      %p353 = por %p351, %p352
      %s355 = sadd.s32 %s354, 1
      %p358 = scmp.eq.s32.totalorder %s68, 1
      %p359 = scmp.ne.s32.totalorder %s354, %s356
      %p360 = scmp.eq.s32.totalorder %s68, 0
      %p361 = por %p359, %p360
      %p362 = scmp.ne.s32.totalorder %s354, %s356
      %p363 = scmp.eq.s32.totalorder %s73, 1
      %p364 = por %p362, %p363
      %p365 = scmp.ne.s32.totalorder %s356, %s357
      %p366 = scmp.eq.s32.totalorder %s73, 0
      %p367 = por %p365, %p366
      %p368 = scmp.ne.s32.totalorder %s356, %s357
      %p369 = scmp.eq.s32.totalorder %s74, 1
      %p370 = por %p368, %p369
      %p372 = scmp.ne.s32.totalorder %s357, %s371
      %p373 = scmp.eq.s32.totalorder %s74, 0
      %p374 = por %p372, %p373
      %s376 = sadd.s32 %s375, 1
      %p379 = scmp.eq.s32.totalorder %s68, 1
      %p380 = scmp.ne.s32.totalorder %s375, %s377
      %p381 = scmp.eq.s32.totalorder %s68, 0
      %p382 = por %p380, %p381
      %p383 = scmp.ne.s32.totalorder %s375, %s377
      %p384 = scmp.eq.s32.totalorder %s73, 1
      %p385 = por %p383, %p384
      %p386 = scmp.ne.s32.totalorder %s377, %s378
      %p387 = scmp.eq.s32.totalorder %s73, 0
      %p388 = por %p386, %p387
      %p389 = scmp.ne.s32.totalorder %s377, %s378
      %p390 = scmp.eq.s32.totalorder %s74, 1
      %p391 = por %p389, %p390
      %p393 = scmp.ne.s32.totalorder %s378, %s392
      %p394 = scmp.eq.s32.totalorder %s74, 0
      %p395 = por %p393, %p394
      %s397 = sadd.s32 %s396, 1
      %p400 = scmp.eq.s32.totalorder %s68, 1
      %p401 = scmp.ne.s32.totalorder %s396, %s398
      %p402 = scmp.eq.s32.totalorder %s68, 0
      %p403 = por %p401, %p402
      %p404 = scmp.ne.s32.totalorder %s396, %s398
      %p405 = scmp.eq.s32.totalorder %s73, 1
      %p406 = por %p404, %p405
      %p407 = scmp.ne.s32.totalorder %s398, %s399
      %p408 = scmp.eq.s32.totalorder %s73, 0
      %p409 = por %p407, %p408
      %p410 = scmp.ne.s32.totalorder %s398, %s399
      %p411 = scmp.eq.s32.totalorder %s74, 1
      %p412 = por %p410, %p411
      %p414 = scmp.ne.s32.totalorder %s399, %s413
      %p415 = scmp.eq.s32.totalorder %s74, 0
      %p416 = por %p414, %p415
      %s418 = sadd.s32 %s417, 1
      %p421 = scmp.eq.s32.totalorder %s68, 1
      %p422 = scmp.ne.s32.totalorder %s417, %s419
      %p423 = scmp.eq.s32.totalorder %s68, 0
      %p424 = por %p422, %p423
      %p425 = scmp.ne.s32.totalorder %s417, %s419
      %p426 = scmp.eq.s32.totalorder %s73, 1
      %p427 = por %p425, %p426
      %p428 = scmp.ne.s32.totalorder %s419, %s420
      %p429 = scmp.eq.s32.totalorder %s73, 0
      %p430 = por %p428, %p429
      %p431 = scmp.ne.s32.totalorder %s419, %s420
      %p432 = scmp.eq.s32.totalorder %s74, 1
      %p433 = por %p431, %p432
      %p435 = scmp.ne.s32.totalorder %s420, %s434
      %p436 = scmp.eq.s32.totalorder %s74, 0
      %p437 = por %p435, %p436
      %s439 = sadd.s32 %s438, 1
      %p442 = scmp.eq.s32.totalorder %s68, 1
      %p443 = scmp.ne.s32.totalorder %s438, %s440
      %p444 = scmp.eq.s32.totalorder %s68, 0
      %p445 = por %p443, %p444
      %p446 = scmp.ne.s32.totalorder %s438, %s440
      %p447 = scmp.eq.s32.totalorder %s73, 1
      %p448 = por %p446, %p447
      %p449 = scmp.ne.s32.totalorder %s440, %s441
      %p450 = scmp.eq.s32.totalorder %s73, 0
      %p451 = por %p449, %p450
      %p452 = scmp.ne.s32.totalorder %s440, %s441
      %p453 = scmp.eq.s32.totalorder %s74, 1
      %p454 = por %p452, %p453
      %p456 = scmp.ne.s32.totalorder %s441, %s455
      %p457 = scmp.eq.s32.totalorder %s74, 0
      %p458 = por %p456, %p457
      %s460 = sadd.s32 %s459, 1
      %p463 = scmp.eq.s32.totalorder %s68, 1
      %p464 = scmp.ne.s32.totalorder %s459, %s461
      %p465 = scmp.eq.s32.totalorder %s68, 0
      %p466 = por %p464, %p465
      %p467 = scmp.ne.s32.totalorder %s459, %s461
      %p468 = scmp.eq.s32.totalorder %s73, 1
      %p469 = por %p467, %p468
      %p470 = scmp.ne.s32.totalorder %s461, %s462
      %p471 = scmp.eq.s32.totalorder %s73, 0
      %p472 = por %p470, %p471
      %p473 = scmp.ne.s32.totalorder %s461, %s462
      %p474 = scmp.eq.s32.totalorder %s74, 1
      %p475 = por %p473, %p474
      %p477 = scmp.ne.s32.totalorder %s462, %s476
      %p478 = scmp.eq.s32.totalorder %s74, 0
      %p479 = por %p477, %p478
      %s481 = sadd.s32 %s480, 1
      %p484 = scmp.eq.s32.totalorder %s68, 1
      %p485 = scmp.ne.s32.totalorder %s480, %s482
      %p486 = scmp.eq.s32.totalorder %s68, 0
      %p487 = por %p485, %p486
      %p488 = scmp.ne.s32.totalorder %s480, %s482
      %p489 = scmp.eq.s32.totalorder %s73, 1
      %p490 = por %p488, %p489
      %p491 = scmp.ne.s32.totalorder %s482, %s483
      %p492 = scmp.eq.s32.totalorder %s73, 0
      %p493 = por %p491, %p492
      %p494 = scmp.ne.s32.totalorder %s482, %s483
      %p495 = scmp.eq.s32.totalorder %s74, 1
      %p496 = por %p494, %p495
      %p498 = scmp.ne.s32.totalorder %s483, %s497
      %p499 = scmp.eq.s32.totalorder %s74, 0
      %p500 = por %p498, %p499
      %s502 = sadd.s32 %s501, 1
      %p505 = scmp.eq.s32.totalorder %s68, 1
      %p506 = scmp.ne.s32.totalorder %s501, %s503
      %p507 = scmp.eq.s32.totalorder %s68, 0
      %p508 = por %p506, %p507
      %p509 = scmp.ne.s32.totalorder %s501, %s503
      %p510 = scmp.eq.s32.totalorder %s73, 1
      %p511 = por %p509, %p510
      %p512 = scmp.ne.s32.totalorder %s503, %s504
      %p513 = scmp.eq.s32.totalorder %s73, 0
      %p514 = por %p512, %p513
      %p515 = scmp.ne.s32.totalorder %s503, %s504
      %p516 = scmp.eq.s32.totalorder %s74, 1
      %p517 = por %p515, %p516
      %p519 = scmp.ne.s32.totalorder %s504, %s518
      %p520 = scmp.eq.s32.totalorder %s74, 0
      %p521 = por %p519, %p520
      %s523 = sadd.s32 %s522, 1
      %p526 = scmp.eq.s32.totalorder %s68, 1
      %p527 = scmp.ne.s32.totalorder %s522, %s524
      %p528 = scmp.eq.s32.totalorder %s68, 0
      %p529 = por %p527, %p528
      %p530 = scmp.ne.s32.totalorder %s522, %s524
      %p531 = scmp.eq.s32.totalorder %s73, 1
      %p532 = por %p530, %p531
      %p533 = scmp.ne.s32.totalorder %s524, %s525
      %p534 = scmp.eq.s32.totalorder %s73, 0
      %p535 = por %p533, %p534
      %p536 = scmp.ne.s32.totalorder %s524, %s525
      %p537 = scmp.eq.s32.totalorder %s74, 1
      %p538 = por %p536, %p537
      %p540 = scmp.ne.s32.totalorder %s525, %s539
      %p541 = scmp.eq.s32.totalorder %s74, 0
      %p542 = por %p540, %p541
      %s544 = sadd.s32 %s543, 1
      %p547 = scmp.eq.s32.totalorder %s68, 1
      %p548 = scmp.ne.s32.totalorder %s543, %s545
      %p549 = scmp.eq.s32.totalorder %s68, 0
      %p550 = por %p548, %p549
      %p551 = scmp.ne.s32.totalorder %s543, %s545
      %p552 = scmp.eq.s32.totalorder %s73, 1
      %p553 = por %p551, %p552
      %p554 = scmp.ne.s32.totalorder %s545, %s546
      %p555 = scmp.eq.s32.totalorder %s73, 0
      %p556 = por %p554, %p555
      %p557 = scmp.ne.s32.totalorder %s545, %s546
      %p558 = scmp.eq.s32.totalorder %s74, 1
      %p559 = por %p557, %p558
      %p561 = scmp.ne.s32.totalorder %s546, %s560
      %p562 = scmp.eq.s32.totalorder %s74, 0
      %p563 = por %p561, %p562
      %s565 = sadd.s32 %s564, 1
      %p568 = scmp.eq.s32.totalorder %s68, 1
      %p569 = scmp.ne.s32.totalorder %s564, %s566
      %p570 = scmp.eq.s32.totalorder %s68, 0
      %p571 = por %p569, %p570
      %p572 = scmp.ne.s32.totalorder %s564, %s566
      %p573 = scmp.eq.s32.totalorder %s73, 1
      %p574 = por %p572, %p573
      %p575 = scmp.ne.s32.totalorder %s566, %s567
      %p576 = scmp.eq.s32.totalorder %s73, 0
      %p577 = por %p575, %p576
      %p578 = scmp.ne.s32.totalorder %s566, %s567
      %p579 = scmp.eq.s32.totalorder %s74, 1
      %p580 = por %p578, %p579
      %p582 = scmp.ne.s32.totalorder %s567, %s581
      %p583 = scmp.eq.s32.totalorder %s74, 0
      %p584 = por %p582, %p583
      %s586 = sadd.s32 %s585, 1
      %p589 = scmp.eq.s32.totalorder %s68, 1
      %p590 = scmp.ne.s32.totalorder %s585, %s587
      %p591 = scmp.eq.s32.totalorder %s68, 0
      %p592 = por %p590, %p591
      %p593 = scmp.ne.s32.totalorder %s585, %s587
      %p594 = scmp.eq.s32.totalorder %s73, 1
      %p595 = por %p593, %p594
      %p596 = scmp.ne.s32.totalorder %s587, %s588
      %p597 = scmp.eq.s32.totalorder %s73, 0
      %p598 = por %p596, %p597
      %p599 = scmp.ne.s32.totalorder %s587, %s588
      %p600 = scmp.eq.s32.totalorder %s74, 1
      %p601 = por %p599, %p600
      %p603 = scmp.ne.s32.totalorder %s588, %s602
      %p604 = scmp.eq.s32.totalorder %s74, 0
      %p605 = por %p603, %p604
      %s607 = sadd.s32 %s606, 1
      %p610 = scmp.eq.s32.totalorder %s68, 1
      %p611 = scmp.ne.s32.totalorder %s606, %s608
      %p612 = scmp.eq.s32.totalorder %s68, 0
      %p613 = por %p611, %p612
      %p614 = scmp.ne.s32.totalorder %s606, %s608
      %p615 = scmp.eq.s32.totalorder %s73, 1
      %p616 = por %p614, %p615
      %p617 = scmp.ne.s32.totalorder %s608, %s609
      %p618 = scmp.eq.s32.totalorder %s73, 0
      %p619 = por %p617, %p618
      %p620 = scmp.ne.s32.totalorder %s608, %s609
      %p621 = scmp.eq.s32.totalorder %s74, 1
      %p622 = por %p620, %p621
      %p624 = scmp.ne.s32.totalorder %s609, %s623
      %p625 = scmp.eq.s32.totalorder %s74, 0
      %p626 = por %p624, %p625
      %s628 = sadd.s32 %s627, 1
      %p631 = scmp.eq.s32.totalorder %s68, 1
      %p632 = scmp.ne.s32.totalorder %s627, %s629
      %p633 = scmp.eq.s32.totalorder %s68, 0
      %p634 = por %p632, %p633
      %p635 = scmp.ne.s32.totalorder %s627, %s629
      %p636 = scmp.eq.s32.totalorder %s73, 1
      %p637 = por %p635, %p636
      %p638 = scmp.ne.s32.totalorder %s629, %s630
      %p639 = scmp.eq.s32.totalorder %s73, 0
      %p640 = por %p638, %p639
      %p641 = scmp.ne.s32.totalorder %s629, %s630
      %p642 = scmp.eq.s32.totalorder %s74, 1
      %p643 = por %p641, %p642
      %p645 = scmp.ne.s32.totalorder %s630, %s644
      %p646 = scmp.eq.s32.totalorder %s74, 0
      %p647 = por %p645, %p646
      %s649 = sadd.s32 %s648, 1
      %p652 = scmp.eq.s32.totalorder %s68, 1
      %p653 = scmp.ne.s32.totalorder %s648, %s650
      %p654 = scmp.eq.s32.totalorder %s68, 0
      %p655 = por %p653, %p654
      %p656 = scmp.ne.s32.totalorder %s648, %s650
      %p657 = scmp.eq.s32.totalorder %s73, 1
      %p658 = por %p656, %p657
      %p659 = scmp.ne.s32.totalorder %s650, %s651
      %p660 = scmp.eq.s32.totalorder %s73, 0
      %p661 = por %p659, %p660
      %p662 = scmp.ne.s32.totalorder %s650, %s651
      %p663 = scmp.eq.s32.totalorder %s74, 1
      %p664 = por %p662, %p663
      %p666 = scmp.ne.s32.totalorder %s651, %s665
      %p667 = scmp.eq.s32.totalorder %s74, 0
      %p668 = por %p666, %p667
      %s670 = sadd.s32 %s669, 1
      %p673 = scmp.eq.s32.totalorder %s68, 1
      %p674 = scmp.ne.s32.totalorder %s669, %s671
      %p675 = scmp.eq.s32.totalorder %s68, 0
      %p676 = por %p674, %p675
      %p677 = scmp.ne.s32.totalorder %s669, %s671
      %p678 = scmp.eq.s32.totalorder %s73, 1
      %p679 = por %p677, %p678
      %p680 = scmp.ne.s32.totalorder %s671, %s672
      %p681 = scmp.eq.s32.totalorder %s73, 0
      %p682 = por %p680, %p681
      %p683 = scmp.ne.s32.totalorder %s671, %s672
      %p684 = scmp.eq.s32.totalorder %s74, 1
      %p685 = por %p683, %p684
      %p687 = scmp.ne.s32.totalorder %s672, %s686
      %p688 = scmp.eq.s32.totalorder %s74, 0
      %p689 = por %p687, %p688
      %s690 = ssub.s32 %s68, %s75
      %p691 = scmp.eq.s32.totalorder %s690, 0
      %s693 = sadd.s32 %s692, 1
      %s694 = scalar_select %p691, %s692, %s693
      %p697 = pneg %p691
      %p698 = scmp.eq.s32.totalorder %s68, 1
      %p699 = por %p697, %p698
      %p700 = scmp.ne.s32.totalorder %s692, %s695
      %p701 = scmp.eq.s32.totalorder %s68, 0
      %p702 = por %p700, %p701
      %p703 = scmp.ne.s32.totalorder %s692, %s695
      %p704 = scmp.eq.s32.totalorder %s73, 1
      %p705 = por %p703, %p704
      %p706 = scmp.ne.s32.totalorder %s695, %s696
      %p707 = scmp.eq.s32.totalorder %s73, 0
      %p708 = por %p706, %p707
      %p709 = scmp.ne.s32.totalorder %s695, %s696
      %p710 = scmp.eq.s32.totalorder %s74, 1
      %p711 = por %p709, %p710
      %p713 = scmp.ne.s32.totalorder %s696, %s712
      %p714 = scmp.eq.s32.totalorder %s74, 0
      %p715 = por %p713, %p714
      %p716 = scmp.le.s32.totalorder 1, %s68
      %p717 = scmp.lt.s32.totalorder %s68, 3
      %p718 = pnand %p716, %p717
      %p719 = pneg %p718
      // Predicated region
      $region9: #{_lambda_.3} parent=5 // pred_check
        _
      $region10: #{_lambda_.3} parent=5 // pred_check_branch
        %721 = sbr.rel (%p718) target = $region12
      $region11: #{_lambda_.3} parent=5 // pred_region
        %s722 = ssub.s32 %s68, 1
        // Predicated region
        $region13: #{_lambda_.3} parent=11 // pred_check
          %p723 = pneg %p115
        $region14: #{_lambda_.3} parent=11 // pred_check_branch
          %725 = sbr.rel (%p723) target = $region16
        $region15: #{_lambda_.3} parent=11 // pred_region
          _
        $region16: #{_lambda_.3} parent=11 // pred_fallthru
          _
        // Predicated region
        $region17: #{_lambda_.3} parent=11 // pred_check
          %p726 = pneg %p136
        $region18: #{_lambda_.3} parent=11 // pred_check_branch
          %728 = sbr.rel (%p726) target = $region20
        $region19: #{_lambda_.3} parent=11 // pred_region
          _
        $region20: #{_lambda_.3} parent=11 // pred_fallthru
          _
        // Predicated region
        $region21: #{_lambda_.3} parent=11 // pred_check
          %p729 = pneg %p157
        $region22: #{_lambda_.3} parent=11 // pred_check_branch
          %731 = sbr.rel (%p729) target = $region24
        $region23: #{_lambda_.3} parent=11 // pred_region
          _
        $region24: #{_lambda_.3} parent=11 // pred_fallthru
          _
        // Predicated region
        $region25: #{_lambda_.3} parent=11 // pred_check
          %p732 = pneg %p178
        $region26: #{_lambda_.3} parent=11 // pred_check_branch
          %734 = sbr.rel (%p732) target = $region28
        $region27: #{_lambda_.3} parent=11 // pred_region
          _
        $region28: #{_lambda_.3} parent=11 // pred_fallthru
          _
        // Predicated region
        $region29: #{_lambda_.3} parent=11 // pred_check
          %p735 = pneg %p199
        $region30: #{_lambda_.3} parent=11 // pred_check_branch
          %737 = sbr.rel (%p735) target = $region32
        $region31: #{_lambda_.3} parent=11 // pred_region
          _
        $region32: #{_lambda_.3} parent=11 // pred_fallthru
          _
        // Predicated region
        $region33: #{_lambda_.3} parent=11 // pred_check
          %p738 = pneg %p220
        $region34: #{_lambda_.3} parent=11 // pred_check_branch
          %740 = sbr.rel (%p738) target = $region36
        $region35: #{_lambda_.3} parent=11 // pred_region
          _
        $region36: #{_lambda_.3} parent=11 // pred_fallthru
          _
        // Predicated region
        $region37: #{_lambda_.3} parent=11 // pred_check
          %p741 = pneg %p241
        $region38: #{_lambda_.3} parent=11 // pred_check_branch
          %743 = sbr.rel (%p741) target = $region40
        $region39: #{_lambda_.3} parent=11 // pred_region
          _
        $region40: #{_lambda_.3} parent=11 // pred_fallthru
          _
        // Predicated region
        $region41: #{_lambda_.3} parent=11 // pred_check
          %p744 = pneg %p262
        $region42: #{_lambda_.3} parent=11 // pred_check_branch
          %746 = sbr.rel (%p744) target = $region44
        $region43: #{_lambda_.3} parent=11 // pred_region
          _
        $region44: #{_lambda_.3} parent=11 // pred_fallthru
          _
        // Predicated region
        $region45: #{_lambda_.3} parent=11 // pred_check
          %p747 = pneg %p283
        $region46: #{_lambda_.3} parent=11 // pred_check_branch
          %749 = sbr.rel (%p747) target = $region48
        $region47: #{_lambda_.3} parent=11 // pred_region
          _
        $region48: #{_lambda_.3} parent=11 // pred_fallthru
          _
        // Predicated region
        $region49: #{_lambda_.3} parent=11 // pred_check
          %p750 = pneg %p304
        $region50: #{_lambda_.3} parent=11 // pred_check_branch
          %752 = sbr.rel (%p750) target = $region52
        $region51: #{_lambda_.3} parent=11 // pred_region
          _
        $region52: #{_lambda_.3} parent=11 // pred_fallthru
          _
        // Predicated region
        $region53: #{_lambda_.3} parent=11 // pred_check
          %p753 = pneg %p325
        $region54: #{_lambda_.3} parent=11 // pred_check_branch
          %755 = sbr.rel (%p753) target = $region56
        $region55: #{_lambda_.3} parent=11 // pred_region
          _
        $region56: #{_lambda_.3} parent=11 // pred_fallthru
          _
        // Predicated region
        $region57: #{_lambda_.3} parent=11 // pred_check
          %p756 = pneg %p346
        $region58: #{_lambda_.3} parent=11 // pred_check_branch
          %758 = sbr.rel (%p756) target = $region60
        $region59: #{_lambda_.3} parent=11 // pred_region
          _
        $region60: #{_lambda_.3} parent=11 // pred_fallthru
          _
        // Predicated region
        $region61: #{_lambda_.3} parent=11 // pred_check
          %p759 = pneg %p367
        $region62: #{_lambda_.3} parent=11 // pred_check_branch
          %761 = sbr.rel (%p759) target = $region64
        $region63: #{_lambda_.3} parent=11 // pred_region
          _
        $region64: #{_lambda_.3} parent=11 // pred_fallthru
          _
        // Predicated region
        $region65: #{_lambda_.3} parent=11 // pred_check
          %p762 = pneg %p388
        $region66: #{_lambda_.3} parent=11 // pred_check_branch
          %764 = sbr.rel (%p762) target = $region68
        $region67: #{_lambda_.3} parent=11 // pred_region
          _
        $region68: #{_lambda_.3} parent=11 // pred_fallthru
          _
        // Predicated region
        $region69: #{_lambda_.3} parent=11 // pred_check
          %p765 = pneg %p409
        $region70: #{_lambda_.3} parent=11 // pred_check_branch
          %767 = sbr.rel (%p765) target = $region72
        $region71: #{_lambda_.3} parent=11 // pred_region
          _
        $region72: #{_lambda_.3} parent=11 // pred_fallthru
          _
        // Predicated region
        $region73: #{_lambda_.3} parent=11 // pred_check
          %p768 = pneg %p430
        $region74: #{_lambda_.3} parent=11 // pred_check_branch
          %770 = sbr.rel (%p768) target = $region76
        $region75: #{_lambda_.3} parent=11 // pred_region
          _
        $region76: #{_lambda_.3} parent=11 // pred_fallthru
          _
        // Predicated region
        $region77: #{_lambda_.3} parent=11 // pred_check
          %p771 = pneg %p451
        $region78: #{_lambda_.3} parent=11 // pred_check_branch
          %773 = sbr.rel (%p771) target = $region80
        $region79: #{_lambda_.3} parent=11 // pred_region
          _
        $region80: #{_lambda_.3} parent=11 // pred_fallthru
          _
        // Predicated region
        $region81: #{_lambda_.3} parent=11 // pred_check
          %p774 = pneg %p472
        $region82: #{_lambda_.3} parent=11 // pred_check_branch
          %776 = sbr.rel (%p774) target = $region84
        $region83: #{_lambda_.3} parent=11 // pred_region
          _
        $region84: #{_lambda_.3} parent=11 // pred_fallthru
          _
        // Predicated region
        $region85: #{_lambda_.3} parent=11 // pred_check
          %p777 = pneg %p493
        $region86: #{_lambda_.3} parent=11 // pred_check_branch
          %779 = sbr.rel (%p777) target = $region88
        $region87: #{_lambda_.3} parent=11 // pred_region
          _
        $region88: #{_lambda_.3} parent=11 // pred_fallthru
          _
        // Predicated region
        $region89: #{_lambda_.3} parent=11 // pred_check
          %p780 = pneg %p514
        $region90: #{_lambda_.3} parent=11 // pred_check_branch
          %782 = sbr.rel (%p780) target = $region92
        $region91: #{_lambda_.3} parent=11 // pred_region
          _
        $region92: #{_lambda_.3} parent=11 // pred_fallthru
          _
        // Predicated region
        $region93: #{_lambda_.3} parent=11 // pred_check
          %p783 = pneg %p535
        $region94: #{_lambda_.3} parent=11 // pred_check_branch
          %785 = sbr.rel (%p783) target = $region96
        $region95: #{_lambda_.3} parent=11 // pred_region
          _
        $region96: #{_lambda_.3} parent=11 // pred_fallthru
          _
        // Predicated region
        $region97: #{_lambda_.3} parent=11 // pred_check
          %p786 = pneg %p556
        $region98: #{_lambda_.3} parent=11 // pred_check_branch
          %788 = sbr.rel (%p786) target = $region100
        $region99: #{_lambda_.3} parent=11 // pred_region
          _
        $region100: #{_lambda_.3} parent=11 // pred_fallthru
          _
        // Predicated region
        $region101: #{_lambda_.3} parent=11 // pred_check
          %p789 = pneg %p577
        $region102: #{_lambda_.3} parent=11 // pred_check_branch
          %791 = sbr.rel (%p789) target = $region104
        $region103: #{_lambda_.3} parent=11 // pred_region
          _
        $region104: #{_lambda_.3} parent=11 // pred_fallthru
          _
        // Predicated region
        $region105: #{_lambda_.3} parent=11 // pred_check
          %p792 = pneg %p598
        $region106: #{_lambda_.3} parent=11 // pred_check_branch
          %794 = sbr.rel (%p792) target = $region108
        $region107: #{_lambda_.3} parent=11 // pred_region
          _
        $region108: #{_lambda_.3} parent=11 // pred_fallthru
          _
        // Predicated region
        $region109: #{_lambda_.3} parent=11 // pred_check
          %p795 = pneg %p619
        $region110: #{_lambda_.3} parent=11 // pred_check_branch
          %797 = sbr.rel (%p795) target = $region112
        $region111: #{_lambda_.3} parent=11 // pred_region
          _
        $region112: #{_lambda_.3} parent=11 // pred_fallthru
          _
        // Predicated region
        $region113: #{_lambda_.3} parent=11 // pred_check
          %p798 = pneg %p640
        $region114: #{_lambda_.3} parent=11 // pred_check_branch
          %800 = sbr.rel (%p798) target = $region116
        $region115: #{_lambda_.3} parent=11 // pred_region
          _
        $region116: #{_lambda_.3} parent=11 // pred_fallthru
          _
        // Predicated region
        $region117: #{_lambda_.3} parent=11 // pred_check
          %p801 = pneg %p661
        $region118: #{_lambda_.3} parent=11 // pred_check_branch
          %803 = sbr.rel (%p801) target = $region120
        $region119: #{_lambda_.3} parent=11 // pred_region
          _
        $region120: #{_lambda_.3} parent=11 // pred_fallthru
          _
        // Predicated region
        $region121: #{_lambda_.3} parent=11 // pred_check
          %p804 = pneg %p682
        $region122: #{_lambda_.3} parent=11 // pred_check_branch
          %806 = sbr.rel (%p804) target = $region124
        $region123: #{_lambda_.3} parent=11 // pred_region
          _
        $region124: #{_lambda_.3} parent=11 // pred_fallthru
          _
      $region12: #{_lambda_.3} parent=5 // pred_fallthru
        _
      %p807 = scmp.lt.s32.totalorder %s68, 2
      // Predicated region
      $region125: #{_lambda_.3} parent=5 // pred_check
        %p808 = pneg %p807
      $region126: #{_lambda_.3} parent=5 // pred_check_branch
        %810 = sbr.rel (%p808) target = $region128
      $region127: #{_lambda_.3} parent=5 // pred_region
        // Predicated region
        $region129: #{_lambda_.3} parent=127 // pred_check
          %p811 = pneg %p88
        $region130: #{_lambda_.3} parent=127 // pred_check_branch
          %813 = sbr.rel (%p811) target = $region132
        $region131: #{_lambda_.3} parent=127 // pred_region
          %p814 = scmp.lt.s32.totalorder %s68, 1
          %s815 = scalar_select %p814, %s68, 1
          %s816 = smul.addr %s815, 2
          %s817 = smul.addr %s816, 8
          %s818 = scalar_lea.vmem %s1, %s817
        $region132: #{_lambda_.3} parent=127 // pred_fallthru
          _
      $region128: #{_lambda_.3} parent=5 // pred_fallthru
        _
      %p819 = scmp.le.s32.totalorder 1, %s68
      %p820 = scmp.lt.s32.totalorder %s68, 3
      %p821 = pnand %p819, %p820
      %p822 = pneg %p821
      // Predicated region
      $region133: #{_lambda_.3} parent=5 // pred_check
        _
      $region134: #{_lambda_.3} parent=5 // pred_check_branch
        %824 = sbr.rel (%p821) target = $region136
      $region135: #{_lambda_.3} parent=5 // pred_region
        %s825 = ssub.s32 %s68, 1
        %p826 = scmp.lt.s32.totalorder %s73, 1
        %s827 = scalar_select %p826, %s73, 1
        %s828 = smul.addr %s827, 2
        %s829 = smul.addr %s828, 8
        %s830 = scalar_lea.vmem %s1, %s829
        %p831 = pneg %p94
        %p832 = pneg %p91
        %p833 = pneg %p115
        %p834 = pneg %p112
        %p835 = pneg %p136
        %p836 = pneg %p133
        %p837 = pneg %p157
        %p838 = pneg %p154
        %p839 = pneg %p178
        %p840 = pneg %p175
        %p841 = pneg %p199
        %p842 = pneg %p196
        %p843 = pneg %p220
        %p844 = pneg %p217
        %p845 = pneg %p241
        %p846 = pneg %p238
        %p847 = pneg %p262
        %p848 = pneg %p259
        %p849 = pneg %p283
        %p850 = pneg %p280
        %p851 = pneg %p304
        %p852 = pneg %p301
        %p853 = pneg %p325
        %p854 = pneg %p322
        %p855 = pneg %p346
        %p856 = pneg %p343
        %p857 = pneg %p367
        %p858 = pneg %p364
        %p859 = pneg %p388
        %p860 = pneg %p385
        %p861 = pneg %p409
        %p862 = pneg %p406
        %p863 = pneg %p430
        %p864 = pneg %p427
        %p865 = pneg %p451
        %p866 = pneg %p448
        %p867 = pneg %p472
        %p868 = pneg %p469
        %p869 = pneg %p493
        %p870 = pneg %p490
        %p871 = pneg %p514
        %p872 = pneg %p511
        %p873 = pneg %p535
        %p874 = pneg %p532
        %p875 = pneg %p556
        %p876 = pneg %p553
        %p877 = pneg %p577
        %p878 = pneg %p574
        %p879 = pneg %p598
        %p880 = pneg %p595
        %p881 = pneg %p619
        %p882 = pneg %p616
        %p883 = pneg %p640
        %p884 = pneg %p637
        %p885 = pneg %p661
        %p886 = pneg %p658
        %p887 = pneg %p682
        %p888 = pneg %p679
        %p889 = pneg %p708
        %p890 = pneg %p705
        %s891 = sand.u32 %s695, 1
        %s892 = scalar_lea.sflag [#allocation6], %s891
        %s893 = sand.u32 %s695, 1
        %s894 = smul.addr %s893, 16
        %s895 = scalar_lea.vmem [#allocation5], %s894
        %p896 = scmp.lt.s32.totalorder %s73, 1
        %s897 = scalar_select %p896, %s73, 1
        %s898 = smul.addr %s897, 2
        %s899 = smul.addr %s898, 8
        %s900 = scalar_lea.vmem %s1, %s899
        %v902 = vld [vmem:[%s900] sm:$0xff]
        %v903 = vld [vmem:[%s900 + $0x8] sm:$0xff]
        %v904 = vpack.c.bf16 %v903, %v902
        %v905 = vld [vmem:[%s3] sm:$0xf]
        %v906 = vld [vmem:[%s3 + $0x4] sm:$0xf]
        %v907 = vld [vmem:[%s3 + $0x8] sm:$0xf]
        %v908 = vld [vmem:[%s3 + $0xc] sm:$0xf]
        %v913 = vunpack.c.l.b16 %v905
        %v914 = vunpack.c.l.b16 %v906
        %v915 = vunpack.c.l.b16 %v907
        %v916 = vunpack.c.l.b16 %v908
        %v917 = vpack.c.b16 %v914, %v913
        %v918 = vpack.c.b16 %v916, %v915
        %vm921 = vcmask 261120
        %v923 = vsel %vm921, %v904, 0
        %925 = vmatprep.subr.bf16.mxu0 0
        %926 = vmatpush1.bf16.msra.mxu0 %v917
        %927 = vmatprep.subr.bf16.mxu0 0
        %928 = vmatpush1.bf16.msra.mxu0 %v918
        %929 = vmatprep.subr.bf16.mxu0 0
        %930 = vmatpush1.bf16.msra.mxu0 0
        %931 = vmatprep.subr.bf16.mxu0 0
        %932 = vmatpush1.bf16.msra.mxu0 0
        %933 = vmatprep.subr.bf16.mxu0 0
        %934 = vmatpush1.bf16.msra.mxu0 0
        %935 = vmatprep.subr.bf16.mxu0 0
        %936 = vmatpush1.bf16.msra.mxu0 0
        %937 = vmatprep.subr.bf16.mxu0 0
        %938 = vmatpush1.bf16.msra.mxu0 0
        %939 = vmatprep.subr.bf16.mxu0 0
        %940 = vmatpush1.bf16.msra.mxu0 0
        %941 = vmatprep.subr.bf16.mxu0 0
        %942 = vmatpush1.bf16.msra.mxu0 0
        %943 = vmatprep.subr.bf16.mxu0 0
        %944 = vmatpush1.bf16.msra.mxu0 0
        %945 = vmatprep.subr.bf16.mxu0 0
        %946 = vmatpush1.bf16.msra.mxu0 0
        %947 = vmatprep.subr.bf16.mxu0 0
        %948 = vmatpush1.bf16.msra.mxu0 0
        %949 = vmatprep.subr.bf16.mxu0 0
        %950 = vmatpush1.bf16.msra.mxu0 0
        %951 = vmatprep.subr.bf16.mxu0 0
        %952 = vmatpush1.bf16.msra.mxu0 0
        %953 = vmatprep.subr.bf16.mxu0 0
        %954 = vmatpush1.bf16.msra.mxu0 0
        %955 = vmatprep.subr.bf16.mxu0 0
        %956 = vmatpush1.bf16.msra.mxu0 0
        %957 = vmatprep.mubr.bf16.mxu0 0
        %958 = vmatmul.mubr.bf16.gmra.mrb[0].mxu0 %v923
        %v959 = vpop.f32.mrb[0].mxu0
        %v960 = vadd.f32 0.0, %v959
        %v961 = vpop.f32.mrb[0].mxu0
        %v962 = vpop.f32.mrb[0].mxu0
        %v963 = vadd.f32 0.0, %v962
        %v964 = vpop.f32.mrb[0].mxu0
        %965 = vdwg.mxu0
        %v966 = vld [vmem:[%s5] sm:$0x1]
        %v968 = vlaneseq
        %v969 = vshrl.u32 %v968, 7
        %v970 = vsub.s32 0, %v969
        %v971 = vrot.slane %v966, %v970
        %v973 = vmul.f32 %v960, %v971
        %v974 = vmul.f32 %v963, %v971
        %v975 = vld [vmem:[%s7] sm:$0x1]
        %v977 = vlaneseq
        %v978 = vshrl.u32 %v977, 7
        %v979 = vsub.s32 0, %v978
        %v980 = vrot.slane %v975, %v979
        %v982 = vadd.f32 %v973, %v980
        %v983 = vadd.f32 %v974, %v980
        %vm984 = vcmp.gt.f32.partialorder %v982, 0.0
        %vm985 = vcmp.gt.f32.partialorder %v983, 0.0
        %v986 = vld [vmem:[%s9] sm:$0x1]
        %v988 = vlaneseq
        %v989 = vshrl.u32 %v988, 7
        %v990 = vsub.s32 0, %v989
        %v991 = vrot.slane %v986, %v990
        %v993 = vmul.f32 %v991, %v982
        %v994 = vmul.f32 %v991, %v983
        %v995 = vsel %vm984, %v982, %v993
        %v996 = vsel %vm985, %v983, %v994
        %vm997 = vcmask 130048
        %998 = vst.msk [vmem:[#allocation2] sm:$0xff] %vm997, %v995
        %999 = vst.msk [vmem:[#allocation2 + $0x8] sm:$0xff] %vm997, %v996
        %v1000 = vld [vmem:[#allocation2] sm:$0xff]
        %v1001 = vld [vmem:[#allocation2 + $0x8] sm:$0xff]
        %vm1002 = vcmask 195584
        %1003 = vst.msk [vmem:[#allocation3] sm:$0xff] %vm1002, 0.0
        %1004 = vst.msk [vmem:[#allocation3 + $0x8] sm:$0xff] %vm1002, 0.0
        %1005 = vst.msk [vmem:[#allocation3 + $0x10] sm:$0xff] %vm1002, 0.0
        %1006 = vst.msk [vmem:[#allocation3 + $0x2] sm:$0xff] %vm997, %v1000
        %1007 = vst.msk [vmem:[#allocation3 + $0xa] sm:$0xff] %vm997, %v1001
        %v1008 = vld [vmem:[#allocation3] sm:$0xff]
        %v1009 = vld [vmem:[#allocation3 + $0x8] sm:$0xff]
        %1010 = vst.msk [vmem:[#allocation4] sm:$0xff] %vm997, %v1008
        %1011 = vst.msk [vmem:[#allocation4 + $0x8] sm:$0xff] %vm997, %v1009
        %v1012 = vld [vmem:[#allocation3 + $0x1] sm:$0xff]
        %v1013 = vld [vmem:[#allocation3 + $0x9] sm:$0xff]
        %1016 = vrot.lane.b32.xlu0 %v1012, 16
        %v1017 = vpop.permute.xlu0 %1016
        %1018 = vrot.lane.b32.xlu0 %v1013, 16
        %v1019 = vpop.permute.xlu0 %1018
        %vm1022 = vcmask 261248
        %1023 = vst.msk [vmem:[#allocation4] sm:$0xff] %vm1022, %v1017
        %1024 = vst.msk [vmem:[#allocation4 + $0x8] sm:$0xff] %vm1022, %v1019
        %v1025 = vld [vmem:[#allocation3 + $0x2] sm:$0xff]
        %v1026 = vld [vmem:[#allocation3 + $0xa] sm:$0xff]
        %1029 = vrot.lane.b32.xlu0 %v1025, 32
        %v1030 = vpop.permute.xlu0 %1029
        %1031 = vrot.lane.b32.xlu0 %v1026, 32
        %v1032 = vpop.permute.xlu0 %1031
        %vm1035 = vcmask 392448
        %1036 = vst.msk [vmem:[#allocation4] sm:$0xff] %vm1035, %v1030
        %1037 = vst.msk [vmem:[#allocation4 + $0x8] sm:$0xff] %vm1035, %v1032
        %v1038 = vld [vmem:[#allocation3 + $0x3] sm:$0xff]
        %v1039 = vld [vmem:[#allocation3 + $0xb] sm:$0xff]
        %1042 = vrot.lane.b32.xlu0 %v1038, 48
        %v1043 = vpop.permute.xlu0 %1042
        %1044 = vrot.lane.b32.xlu0 %v1039, 48
        %v1045 = vpop.permute.xlu0 %1044
        %vm1048 = vcmask 523648
        %1049 = vst.msk [vmem:[#allocation4] sm:$0xff] %vm1048, %v1043
        %1050 = vst.msk [vmem:[#allocation4 + $0x8] sm:$0xff] %vm1048, %v1045
        %v1051 = vld [vmem:[#allocation3 + $0x4] sm:$0xff]
        %v1052 = vld [vmem:[#allocation3 + $0xc] sm:$0xff]
        %1055 = vrot.lane.b32.xlu0 %v1051, 64
        %v1056 = vpop.permute.xlu0 %1055
        %1057 = vrot.lane.b32.xlu0 %v1052, 64
        %v1058 = vpop.permute.xlu0 %1057
        %vm1061 = vcmask 654848
        %1062 = vst.msk [vmem:[#allocation4] sm:$0xff] %vm1061, %v1056
        %1063 = vst.msk [vmem:[#allocation4 + $0x8] sm:$0xff] %vm1061, %v1058
        %v1064 = vld [vmem:[#allocation4] sm:$0xff]
        %v1065 = vld [vmem:[#allocation4 + $0x8] sm:$0xff]
        %v1066 = vpack.c.bf16 %v1065, %v1064
        %v1067 = vld [vmem:[%s11] sm:$0xf]
        %v1068 = vld [vmem:[%s11 + $0x4] sm:$0xf]
        %v1069 = vld [vmem:[%s11 + $0x8] sm:$0xf]
        %v1070 = vld [vmem:[%s11 + $0xc] sm:$0xf]
        %v1071 = vld [vmem:[%s11 + $0x10] sm:$0xf]
        %v1072 = vld [vmem:[%s11 + $0x14] sm:$0xf]
        %v1073 = vld [vmem:[%s11 + $0x18] sm:$0xf]
        %v1074 = vld [vmem:[%s11 + $0x1c] sm:$0xf]
        %v1075 = vld [vmem:[%s11 + $0x20] sm:$0xf]
        %v1076 = vld [vmem:[%s11 + $0x24] sm:$0xf]
        %v1087 = vunpack.c.l.b16 %v1067
        %v1088 = vunpack.c.l.b16 %v1068
        %v1089 = vunpack.c.l.b16 %v1069
        %v1090 = vunpack.c.l.b16 %v1070
        %v1091 = vunpack.c.l.b16 %v1071
        %v1092 = vunpack.c.l.b16 %v1072
        %v1093 = vunpack.c.l.b16 %v1073
        %v1094 = vunpack.c.l.b16 %v1074
        %v1095 = vunpack.c.l.b16 %v1075
        %v1096 = vunpack.c.l.b16 %v1076
        %v1097 = vpack.c.b16 %v1088, %v1087
        %v1098 = vpack.c.b16 %v1090, %v1089
        %v1099 = vpack.c.b16 %v1092, %v1091
        %v1100 = vpack.c.b16 %v1094, %v1093
        %v1101 = vpack.c.b16 %v1096, %v1095
        %vm1107 = vcmask 654336
        %v1109 = vsel %vm1107, %v1066, 0
        %1111 = vmatprep.subr.bf16.mxu0 0
        %1112 = vmatpush1.bf16.msra.mxu0 %v1097
        %1113 = vmatprep.subr.bf16.mxu0 0
        %1114 = vmatpush1.bf16.msra.mxu0 %v1098
        %1115 = vmatprep.subr.bf16.mxu0 0
        %1116 = vmatpush1.bf16.msra.mxu0 %v1099
        %1117 = vmatprep.subr.bf16.mxu0 0
        %1118 = vmatpush1.bf16.msra.mxu0 %v1100
        %1119 = vmatprep.subr.bf16.mxu0 0
        %1120 = vmatpush1.bf16.msra.mxu0 %v1101
        %1121 = vmatprep.subr.bf16.mxu0 0
        %1122 = vmatpush1.bf16.msra.mxu0 0
        %1123 = vmatprep.subr.bf16.mxu0 0
        %1124 = vmatpush1.bf16.msra.mxu0 0
        %1125 = vmatprep.subr.bf16.mxu0 0
        %1126 = vmatpush1.bf16.msra.mxu0 0
        %1127 = vmatprep.subr.bf16.mxu0 0
        %1128 = vmatpush1.bf16.msra.mxu0 0
        %1129 = vmatprep.subr.bf16.mxu0 0
        %1130 = vmatpush1.bf16.msra.mxu0 0
        %1131 = vmatprep.subr.bf16.mxu0 0
        %1132 = vmatpush1.bf16.msra.mxu0 0
        %1133 = vmatprep.subr.bf16.mxu0 0
        %1134 = vmatpush1.bf16.msra.mxu0 0
        %1135 = vmatprep.subr.bf16.mxu0 0
        %1136 = vmatpush1.bf16.msra.mxu0 0
        %1137 = vmatprep.subr.bf16.mxu0 0
        %1138 = vmatpush1.bf16.msra.mxu0 0
        %1139 = vmatprep.subr.bf16.mxu0 0
        %1140 = vmatpush1.bf16.msra.mxu0 0
        %1141 = vmatprep.subr.bf16.mxu0 0
        %1142 = vmatpush1.bf16.msra.mxu0 0
        %1143 = vmatprep.mubr.bf16.mxu0 0
        %1144 = vmatmul.mubr.bf16.gmra.mrb[0].mxu0 %v1109
        %v1145 = vpop.f32.mrb[0].mxu0
        %v1146 = vadd.f32 0.0, %v1145
        %v1147 = vpop.f32.mrb[0].mxu0
        %v1148 = vpop.f32.mrb[0].mxu0
        %v1149 = vadd.f32 0.0, %v1148
        %v1150 = vpop.f32.mrb[0].mxu0
        %1151 = vdwg.mxu0
        %v1152 = vld [vmem:[%s13] sm:$0x1]
        %v1154 = vlaneseq
        %v1155 = vshrl.u32 %v1154, 7
        %v1156 = vsub.s32 0, %v1155
        %v1157 = vrot.slane %v1152, %v1156
        %v1159 = vmul.f32 %v1146, %v1157
        %v1160 = vmul.f32 %v1149, %v1157
        %v1161 = vld [vmem:[%s15] sm:$0x1]
        %v1163 = vlaneseq
        %v1164 = vshrl.u32 %v1163, 7
        %v1165 = vsub.s32 0, %v1164
        %v1166 = vrot.slane %v1161, %v1165
        %v1168 = vadd.f32 %v1159, %v1166
        %v1169 = vadd.f32 %v1160, %v1166
        %vm1170 = vcmp.gt.f32.partialorder %v1168, 0.0
        %vm1171 = vcmp.gt.f32.partialorder %v1169, 0.0
        %v1172 = vld [vmem:[%s17] sm:$0x1]
        %v1174 = vlaneseq
        %v1175 = vshrl.u32 %v1174, 7
        %v1176 = vsub.s32 0, %v1175
        %v1177 = vrot.slane %v1172, %v1176
        %v1179 = vmul.f32 %v1177, %v1168
        %v1180 = vmul.f32 %v1177, %v1169
        %v1181 = vsel %vm1170, %v1168, %v1179
        %v1182 = vsel %vm1171, %v1169, %v1180
        %1183 = vst.msk [vmem:[#allocation3] sm:$0xff] %vm1002, 0.0
        %1184 = vst.msk [vmem:[#allocation3 + $0x8] sm:$0xff] %vm1002, 0.0
        %1185 = vst.msk [vmem:[#allocation3 + $0x10] sm:$0xff] %vm1002, 0.0
        %vm1186 = vcmask 64512
        %1187 = vst.msk [vmem:[#allocation3 + $0x2] sm:$0xff] %vm1186, %v1181
        %1188 = vst.msk [vmem:[#allocation3 + $0xa] sm:$0xff] %vm1186, %v1182
        %v1189 = vld [vmem:[#allocation3] sm:$0xff]
        %v1190 = vld [vmem:[#allocation3 + $0x8] sm:$0xff]
        %1191 = vst.msk [vmem:[#allocation4] sm:$0xff] %vm1186, %v1189
        %1192 = vst.msk [vmem:[#allocation4 + $0x8] sm:$0xff] %vm1186, %v1190
        %v1193 = vld [vmem:[#allocation3 + $0x1] sm:$0xff]
        %v1194 = vld [vmem:[#allocation3 + $0x9] sm:$0xff]
        %1197 = vrot.lane.b32.xlu0 %v1193, 8
        %v1198 = vpop.permute.xlu0 %1197
        %1199 = vrot.lane.b32.xlu0 %v1194, 8
        %v1200 = vpop.permute.xlu0 %1199
        %vm1203 = vcmask 130112
        %1204 = vst.msk [vmem:[#allocation4] sm:$0xff] %vm1203, %v1198
        %1205 = vst.msk [vmem:[#allocation4 + $0x8] sm:$0xff] %vm1203, %v1200
        %v1206 = vld [vmem:[#allocation3 + $0x2] sm:$0xff]
        %v1207 = vld [vmem:[#allocation3 + $0xa] sm:$0xff]
        %1210 = vrot.lane.b32.xlu0 %v1206, 16
        %v1211 = vpop.permute.xlu0 %1210
        %1212 = vrot.lane.b32.xlu0 %v1207, 16
        %v1213 = vpop.permute.xlu0 %1212
        %vm1216 = vcmask 195712
        %1217 = vst.msk [vmem:[#allocation4] sm:$0xff] %vm1216, %v1211
        %1218 = vst.msk [vmem:[#allocation4 + $0x8] sm:$0xff] %vm1216, %v1213
        %v1219 = vld [vmem:[#allocation3 + $0x3] sm:$0xff]
        %v1220 = vld [vmem:[#allocation3 + $0xb] sm:$0xff]
        %1223 = vrot.lane.b32.xlu0 %v1219, 24
        %v1224 = vpop.permute.xlu0 %1223
        %1225 = vrot.lane.b32.xlu0 %v1220, 24
        %v1226 = vpop.permute.xlu0 %1225
        %vm1229 = vcmask 261312
        %1230 = vst.msk [vmem:[#allocation4] sm:$0xff] %vm1229, %v1224
        %1231 = vst.msk [vmem:[#allocation4 + $0x8] sm:$0xff] %vm1229, %v1226
        %v1232 = vld [vmem:[#allocation3 + $0x4] sm:$0xff]
        %v1233 = vld [vmem:[#allocation3 + $0xc] sm:$0xff]
        %1236 = vrot.lane.b32.xlu0 %v1232, 32
        %v1237 = vpop.permute.xlu0 %1236
        %1238 = vrot.lane.b32.xlu0 %v1233, 32
        %v1239 = vpop.permute.xlu0 %1238
        %vm1242 = vcmask 326912
        %1243 = vst.msk [vmem:[#allocation4] sm:$0xff] %vm1242, %v1237
        %1244 = vst.msk [vmem:[#allocation4 + $0x8] sm:$0xff] %vm1242, %v1239
        %v1245 = vld [vmem:[#allocation4] sm:$0xff]
        %v1246 = vld [vmem:[#allocation4 + $0x8] sm:$0xff]
        %v1247 = vpack.c.bf16 %v1246, %v1245
        %v1248 = vld [vmem:[%s19] sm:$0xf]
        %v1249 = vld [vmem:[%s19 + $0x4] sm:$0xf]
        %v1250 = vld [vmem:[%s19 + $0x8] sm:$0xf]
        %v1251 = vld [vmem:[%s19 + $0xc] sm:$0xf]
        %v1252 = vld [vmem:[%s19 + $0x10] sm:$0xf]
        %v1258 = vunpack.c.l.b16 %v1248
        %v1259 = vunpack.c.l.b16 %v1249
        %v1260 = vunpack.c.l.b16 %v1250
        %v1261 = vunpack.c.l.b16 %v1251
        %v1262 = vunpack.c.l.b16 %v1252
        %v1263 = vpack.c.b16 %v1259, %v1258
        %v1264 = vpack.c.b16 %v1261, %v1260
        %v1265 = vpack.c.b16 %v1262, %v1262
        %vm1268 = vcmask 326656
        %v1270 = vsel %vm1268, %v1247, 0
        %vm1272 = vcmask 1043456
        %v1274 = vsel %vm1272, %v1265, 0
        %1276 = vmatprep.subr.bf16.mxu0 0
        %1277 = vmatpush1.bf16.msra.mxu0 %v1263
        %1278 = vmatprep.subr.bf16.mxu0 0
        %1279 = vmatpush1.bf16.msra.mxu0 %v1264
        %1280 = vmatprep.subr.bf16.mxu0 0
        %1281 = vmatpush1.bf16.msra.mxu0 %v1274
        %1282 = vmatprep.subr.bf16.mxu0 0
        %1283 = vmatpush1.bf16.msra.mxu0 0
        %1284 = vmatprep.subr.bf16.mxu0 0
        %1285 = vmatpush1.bf16.msra.mxu0 0
        %1286 = vmatprep.subr.bf16.mxu0 0
        %1287 = vmatpush1.bf16.msra.mxu0 0
        %1288 = vmatprep.subr.bf16.mxu0 0
        %1289 = vmatpush1.bf16.msra.mxu0 0
        %1290 = vmatprep.subr.bf16.mxu0 0
        %1291 = vmatpush1.bf16.msra.mxu0 0
        %1292 = vmatprep.subr.bf16.mxu0 0
        %1293 = vmatpush1.bf16.msra.mxu0 0
        %1294 = vmatprep.subr.bf16.mxu0 0
        %1295 = vmatpush1.bf16.msra.mxu0 0
        %1296 = vmatprep.subr.bf16.mxu0 0
        %1297 = vmatpush1.bf16.msra.mxu0 0
        %1298 = vmatprep.subr.bf16.mxu0 0
        %1299 = vmatpush1.bf16.msra.mxu0 0
        %1300 = vmatprep.subr.bf16.mxu0 0
        %1301 = vmatpush1.bf16.msra.mxu0 0
        %1302 = vmatprep.subr.bf16.mxu0 0
        %1303 = vmatpush1.bf16.msra.mxu0 0
        %1304 = vmatprep.subr.bf16.mxu0 0
        %1305 = vmatpush1.bf16.msra.mxu0 0
        %1306 = vmatprep.subr.bf16.mxu0 0
        %1307 = vmatpush1.bf16.msra.mxu0 0
        %1308 = vmatprep.mubr.bf16.mxu0 0
        %1309 = vmatmul.mubr.bf16.gmra.mrb[0].mxu0 %v1270
        %v1310 = vpop.f32.mrb[0].mxu0
        %v1311 = vadd.f32 0.0, %v1310
        %v1312 = vpop.f32.mrb[0].mxu0
        %v1313 = vpop.f32.mrb[0].mxu0
        %v1314 = vadd.f32 0.0, %v1313
        %v1315 = vpop.f32.mrb[0].mxu0
        %1316 = vdwg.mxu0
        %v1317 = vld [vmem:[%s21] sm:$0x1]
        %v1319 = vlaneseq
        %v1320 = vshrl.u32 %v1319, 7
        %v1321 = vsub.s32 0, %v1320
        %v1322 = vrot.slane %v1317, %v1321
        %v1324 = vmul.f32 %v1311, %v1322
        %v1325 = vmul.f32 %v1314, %v1322
        %v1326 = vld [vmem:[%s23] sm:$0x1]
        %v1328 = vlaneseq
        %v1329 = vshrl.u32 %v1328, 7
        %v1330 = vsub.s32 0, %v1329
        %v1331 = vrot.slane %v1326, %v1330
        %v1333 = vadd.f32 %v1324, %v1331
        %v1334 = vadd.f32 %v1325, %v1331
        %vm1335 = vcmp.gt.f32.partialorder %v1333, 0.0
        %vm1336 = vcmp.gt.f32.partialorder %v1334, 0.0
        %v1337 = vld [vmem:[%s25] sm:$0x1]
        %v1339 = vlaneseq
        %v1340 = vshrl.u32 %v1339, 7
        %v1341 = vsub.s32 0, %v1340
        %v1342 = vrot.slane %v1337, %v1341
        %v1344 = vmul.f32 %v1342, %v1333
        %v1345 = vmul.f32 %v1342, %v1334
        %v1346 = vsel %vm1335, %v1333, %v1344
        %v1347 = vsel %vm1336, %v1334, %v1345
        %v1348 = vpack.c.bf16 %v1001, %v1000
        %v1349 = vld [vmem:[%s27] sm:$0xf]
        %v1350 = vld [vmem:[%s27 + $0x4] sm:$0xf]
        %v1351 = vld [vmem:[%s29] sm:$0x1]
        %v1353 = vlaneseq
        %v1354 = vshrl.u32 %v1353, 7
        %v1355 = vsub.s32 0, %v1354
        %v1356 = vrot.slane %v1351, %v1355
        %v1360 = vunpack.c.l.b16 %v1349
        %v1361 = vunpack.c.l.b16 %v1350
        %v1362 = vpack.c.b16 %v1361, %v1360
        %v1365 = vsel %vm997, %v1348, 0
        %1367 = vmatprep.subr.bf16.mxu0 0
        %1368 = vmatpush1.bf16.msra.mxu0 %v1362
        %1369 = vmatprep.subr.bf16.mxu0 0
        %1370 = vmatpush1.bf16.msra.mxu0 0
        %1371 = vmatprep.subr.bf16.mxu0 0
        %1372 = vmatpush1.bf16.msra.mxu0 0
        %1373 = vmatprep.subr.bf16.mxu0 0
        %1374 = vmatpush1.bf16.msra.mxu0 0
        %1375 = vmatprep.subr.bf16.mxu0 0
        %1376 = vmatpush1.bf16.msra.mxu0 0
        %1377 = vmatprep.subr.bf16.mxu0 0
        %1378 = vmatpush1.bf16.msra.mxu0 0
        %1379 = vmatprep.subr.bf16.mxu0 0
        %1380 = vmatpush1.bf16.msra.mxu0 0
        %1381 = vmatprep.subr.bf16.mxu0 0
        %1382 = vmatpush1.bf16.msra.mxu0 0
        %1383 = vmatprep.subr.bf16.mxu0 0
        %1384 = vmatpush1.bf16.msra.mxu0 0
        %1385 = vmatprep.subr.bf16.mxu0 0
        %1386 = vmatpush1.bf16.msra.mxu0 0
        %1387 = vmatprep.subr.bf16.mxu0 0
        %1388 = vmatpush1.bf16.msra.mxu0 0
        %1389 = vmatprep.subr.bf16.mxu0 0
        %1390 = vmatpush1.bf16.msra.mxu0 0
        %1391 = vmatprep.subr.bf16.mxu0 0
        %1392 = vmatpush1.bf16.msra.mxu0 0
        %1393 = vmatprep.subr.bf16.mxu0 0
        %1394 = vmatpush1.bf16.msra.mxu0 0
        %1395 = vmatprep.subr.bf16.mxu0 0
        %1396 = vmatpush1.bf16.msra.mxu0 0
        %1397 = vmatprep.subr.bf16.mxu0 0
        %1398 = vmatpush1.bf16.msra.mxu0 0
        %1399 = vmatprep.mubr.bf16.mxu0 0
        %1400 = vmatmul.mubr.bf16.gmra.mrb[0].mxu0 %v1365
        %v1401 = vpop.f32.mrb[0].mxu0
        %v1402 = vadd.f32 %v1356, %v1401
        %v1403 = vpop.f32.mrb[0].mxu0
        %v1404 = vpop.f32.mrb[0].mxu0
        %v1405 = vadd.f32 %v1356, %v1404
        %v1406 = vpop.f32.mrb[0].mxu0
        %1407 = vdwg.mxu0
        %v1408 = vadd.f32 %v1346, %v1402
        %v1409 = vadd.f32 %v1347, %v1405
        %vm1410 = vcmp.gt.f32.partialorder %v1408, 0.0
        %vm1411 = vcmp.gt.f32.partialorder %v1409, 0.0
        %v1412 = vld [vmem:[%s31] sm:$0x1]
        %v1414 = vlaneseq
        %v1415 = vshrl.u32 %v1414, 7
        %v1416 = vsub.s32 0, %v1415
        %v1417 = vrot.slane %v1412, %v1416
        %v1419 = vmul.f32 %v1417, %v1408
        %v1420 = vmul.f32 %v1417, %v1409
        %v1421 = vsel %vm1410, %v1408, %v1419
        %v1422 = vsel %vm1411, %v1409, %v1420
        %1425 = vrot.lane.b32.xlu0 %v1421, 16
        %v1426 = vpop.permute.xlu0 %1425
        %1427 = vrot.lane.b32.xlu0 %v1422, 16
        %v1428 = vpop.permute.xlu0 %1427
        %1431 = vst.msk [vmem:[#allocation2] sm:$0xff] %vm1216, %v1426
        %1432 = vst.msk [vmem:[#allocation2 + $0x8] sm:$0xff] %vm1216, %v1428
        %v1433 = vld [vmem:[#allocation2] sm:$0xff]
        %v1434 = vld [vmem:[#allocation2 + $0x8] sm:$0xff]
        %1435 = vst.msk [vmem:[#allocation3] sm:$0xff] %vm1002, 0.0
        %1436 = vst.msk [vmem:[#allocation3 + $0x8] sm:$0xff] %vm1002, 0.0
        %1437 = vst.msk [vmem:[#allocation3 + $0x10] sm:$0xff] %vm1002, 0.0
        %1438 = vst.msk [vmem:[#allocation3 + $0x4] sm:$0xff] %vm1002, %v1433
        %1439 = vst.msk [vmem:[#allocation3 + $0xc] sm:$0xff] %vm1002, %v1434
        %v1440 = vld [vmem:[#allocation3] sm:$0xff]
        %v1441 = vld [vmem:[#allocation3 + $0x8] sm:$0xff]
        %1442 = vst.msk [vmem:[#allocation4] sm:$0xff] %vm1002, %v1440
        %1443 = vst.msk [vmem:[#allocation4 + $0x8] sm:$0xff] %vm1002, %v1441
        %v1444 = vld [vmem:[#allocation3 + $0x2] sm:$0xff]
        %v1445 = vld [vmem:[#allocation3 + $0xa] sm:$0xff]
        %1448 = vrot.lane.b32.xlu0 %v1444, 24
        %v1449 = vpop.permute.xlu0 %1448
        %1450 = vrot.lane.b32.xlu0 %v1445, 24
        %v1451 = vpop.permute.xlu0 %1450
        %vm1454 = vcmask 392384
        %1455 = vst.msk [vmem:[#allocation4] sm:$0xff] %vm1454, %v1449
        %1456 = vst.msk [vmem:[#allocation4 + $0x8] sm:$0xff] %vm1454, %v1451
        %v1457 = vld [vmem:[#allocation3 + $0x4] sm:$0xff]
        %v1458 = vld [vmem:[#allocation3 + $0xc] sm:$0xff]
        %1461 = vrot.lane.b32.xlu0 %v1457, 48
        %v1462 = vpop.permute.xlu0 %1461
        %1463 = vrot.lane.b32.xlu0 %v1458, 48
        %v1464 = vpop.permute.xlu0 %1463
        %vm1467 = vcmask 589184
        %1468 = vst.msk [vmem:[#allocation4] sm:$0xff] %vm1467, %v1462
        %1469 = vst.msk [vmem:[#allocation4 + $0x8] sm:$0xff] %vm1467, %v1464
        %v1470 = vld [vmem:[#allocation3 + $0x6] sm:$0xff]
        %v1471 = vld [vmem:[#allocation3 + $0xe] sm:$0xff]
        %1474 = vrot.lane.b32.xlu0 %v1470, 72
        %v1475 = vpop.permute.xlu0 %1474
        %1476 = vrot.lane.b32.xlu0 %v1471, 72
        %v1477 = vpop.permute.xlu0 %1476
        %vm1480 = vcmask 785984
        %1481 = vst.msk [vmem:[#allocation4] sm:$0xff] %vm1480, %v1475
        %1482 = vst.msk [vmem:[#allocation4 + $0x8] sm:$0xff] %vm1480, %v1477
        %v1483 = vld [vmem:[#allocation3 + $0x8] sm:$0xff]
        %v1484 = vld [vmem:[#allocation3 + $0x10] sm:$0xff]
        %1487 = vrot.lane.b32.xlu0 %v1483, 96
        %v1488 = vpop.permute.xlu0 %1487
        %1489 = vrot.lane.b32.xlu0 %v1484, 96
        %v1490 = vpop.permute.xlu0 %1489
        %vm1493 = vcmask 982784
        %1494 = vst.msk [vmem:[#allocation4] sm:$0xff] %vm1493, %v1488
        %1495 = vst.msk [vmem:[#allocation4 + $0x8] sm:$0xff] %vm1493, %v1490
        %v1496 = vld [vmem:[#allocation4] sm:$0xff]
        %v1497 = vld [vmem:[#allocation4 + $0x8] sm:$0xff]
        %v1498 = vpack.c.bf16 %v1497, %v1496
        %v1499 = vld [vmem:[%s33] sm:$0xf]
        %v1500 = vld [vmem:[%s33 + $0x4] sm:$0xf]
        %v1501 = vld [vmem:[%s33 + $0x8] sm:$0xf]
        %v1502 = vld [vmem:[%s33 + $0xc] sm:$0xf]
        %v1503 = vld [vmem:[%s33 + $0x10] sm:$0xf]
        %v1504 = vld [vmem:[%s33 + $0x14] sm:$0xf]
        %v1505 = vld [vmem:[%s33 + $0x18] sm:$0xf]
        %v1506 = vld [vmem:[%s33 + $0x1c] sm:$0xf]
        %v1507 = vld [vmem:[%s33 + $0x20] sm:$0xf]
        %v1508 = vld [vmem:[%s33 + $0x24] sm:$0xf]
        %v1509 = vld [vmem:[%s33 + $0x28] sm:$0xf]
        %v1510 = vld [vmem:[%s33 + $0x2c] sm:$0xf]
        %v1511 = vld [vmem:[%s33 + $0x30] sm:$0xf]
        %v1512 = vld [vmem:[%s33 + $0x34] sm:$0xf]
        %v1513 = vld [vmem:[%s33 + $0x38] sm:$0xf]
        %v1529 = vunpack.c.l.b16 %v1499
        %v1530 = vunpack.c.l.b16 %v1500
        %v1531 = vunpack.c.l.b16 %v1501
        %v1532 = vunpack.c.l.b16 %v1502
        %v1533 = vunpack.c.l.b16 %v1503
        %v1534 = vunpack.c.l.b16 %v1504
        %v1535 = vunpack.c.l.b16 %v1505
        %v1536 = vunpack.c.l.b16 %v1506
        %v1537 = vunpack.c.l.b16 %v1507
        %v1538 = vunpack.c.l.b16 %v1508
        %v1539 = vunpack.c.l.b16 %v1509
        %v1540 = vunpack.c.l.b16 %v1510
        %v1541 = vunpack.c.l.b16 %v1511
        %v1542 = vunpack.c.l.b16 %v1512
        %v1543 = vunpack.c.l.b16 %v1513
        %v1544 = vpack.c.b16 %v1530, %v1529
        %v1545 = vpack.c.b16 %v1532, %v1531
        %v1546 = vpack.c.b16 %v1534, %v1533
        %v1547 = vpack.c.b16 %v1536, %v1535
        %v1548 = vpack.c.b16 %v1538, %v1537
        %v1549 = vpack.c.b16 %v1540, %v1539
        %v1550 = vpack.c.b16 %v1542, %v1541
        %v1551 = vpack.c.b16 %v1543, %v1543
        %vm1559 = vcmask 982016
        %v1561 = vsel %vm1559, %v1498, 0
        %v1564 = vsel %vm1272, %v1551, 0
        %1566 = vmatprep.subr.bf16.mxu0 0
        %1567 = vmatpush1.bf16.msra.mxu0 %v1544
        %1568 = vmatprep.subr.bf16.mxu0 0
        %1569 = vmatpush1.bf16.msra.mxu0 %v1545
        %1570 = vmatprep.subr.bf16.mxu0 0
        %1571 = vmatpush1.bf16.msra.mxu0 %v1546
        %1572 = vmatprep.subr.bf16.mxu0 0
        %1573 = vmatpush1.bf16.msra.mxu0 %v1547
        %1574 = vmatprep.subr.bf16.mxu0 0
        %1575 = vmatpush1.bf16.msra.mxu0 %v1548
        %1576 = vmatprep.subr.bf16.mxu0 0
        %1577 = vmatpush1.bf16.msra.mxu0 %v1549
        %1578 = vmatprep.subr.bf16.mxu0 0
        %1579 = vmatpush1.bf16.msra.mxu0 %v1550
        %1580 = vmatprep.subr.bf16.mxu0 0
        %1581 = vmatpush1.bf16.msra.mxu0 %v1564
        %1582 = vmatprep.subr.bf16.mxu0 0
        %1583 = vmatpush1.bf16.msra.mxu0 0
        %1584 = vmatprep.subr.bf16.mxu0 0
        %1585 = vmatpush1.bf16.msra.mxu0 0
        %1586 = vmatprep.subr.bf16.mxu0 0
        %1587 = vmatpush1.bf16.msra.mxu0 0
        %1588 = vmatprep.subr.bf16.mxu0 0
        %1589 = vmatpush1.bf16.msra.mxu0 0
        %1590 = vmatprep.subr.bf16.mxu0 0
        %1591 = vmatpush1.bf16.msra.mxu0 0
        %1592 = vmatprep.subr.bf16.mxu0 0
        %1593 = vmatpush1.bf16.msra.mxu0 0
        %1594 = vmatprep.subr.bf16.mxu0 0
        %1595 = vmatpush1.bf16.msra.mxu0 0
        %1596 = vmatprep.subr.bf16.mxu0 0
        %1597 = vmatpush1.bf16.msra.mxu0 0
        %1598 = vmatprep.mubr.bf16.mxu0 0
        %1599 = vmatmul.mubr.bf16.gmra.mrb[0].mxu0 %v1561
        %v1600 = vpop.f32.mrb[0].mxu0
        %v1601 = vadd.f32 0.0, %v1600
        %v1602 = vpop.f32.mrb[0].mxu0
        %v1603 = vpop.f32.mrb[0].mxu0
        %v1604 = vadd.f32 0.0, %v1603
        %v1605 = vpop.f32.mrb[0].mxu0
        %1606 = vdwg.mxu0
        %v1607 = vld [vmem:[%s35] sm:$0x1]
        %v1609 = vlaneseq
        %v1610 = vshrl.u32 %v1609, 7
        %v1611 = vsub.s32 0, %v1610
        %v1612 = vrot.slane %v1607, %v1611
        %v1614 = vmul.f32 %v1601, %v1612
        %v1615 = vmul.f32 %v1604, %v1612
        %v1616 = vld [vmem:[%s37] sm:$0x1]
        %v1618 = vlaneseq
        %v1619 = vshrl.u32 %v1618, 7
        %v1620 = vsub.s32 0, %v1619
        %v1621 = vrot.slane %v1616, %v1620
        %v1623 = vadd.f32 %v1614, %v1621
        %v1624 = vadd.f32 %v1615, %v1621
        %vm1625 = vcmp.gt.f32.partialorder %v1623, 0.0
        %vm1626 = vcmp.gt.f32.partialorder %v1624, 0.0
        %v1627 = vld [vmem:[%s39] sm:$0x1]
        %v1629 = vlaneseq
        %v1630 = vshrl.u32 %v1629, 7
        %v1631 = vsub.s32 0, %v1630
        %v1632 = vrot.slane %v1627, %v1631
        %v1634 = vmul.f32 %v1632, %v1623
        %v1635 = vmul.f32 %v1632, %v1624
        %v1636 = vsel %vm1625, %v1623, %v1634
        %v1637 = vsel %vm1626, %v1624, %v1635
        %1638 = vst.msk [vmem:[#allocation3] sm:$0xff] %vm1002, 0.0
        %1639 = vst.msk [vmem:[#allocation3 + $0x8] sm:$0xff] %vm1002, 0.0
        %1640 = vst.msk [vmem:[#allocation3 + $0x10] sm:$0xff] %vm1002, 0.0
        %1641 = vst.msk [vmem:[#allocation3 + $0x4] sm:$0xff] %vm1186, %v1636
        %1642 = vst.msk [vmem:[#allocation3 + $0xc] sm:$0xff] %vm1186, %v1637
        %v1643 = vld [vmem:[#allocation3] sm:$0xff]
        %v1644 = vld [vmem:[#allocation3 + $0x8] sm:$0xff]
        %1645 = vst.msk [vmem:[#allocation4] sm:$0xff] %vm1186, %v1643
        %1646 = vst.msk [vmem:[#allocation4 + $0x8] sm:$0xff] %vm1186, %v1644
        %v1647 = vld [vmem:[#allocation3 + $0x2] sm:$0xff]
        %v1648 = vld [vmem:[#allocation3 + $0xa] sm:$0xff]
        %1651 = vrot.lane.b32.xlu0 %v1647, 8
        %v1652 = vpop.permute.xlu0 %1651
        %1653 = vrot.lane.b32.xlu0 %v1648, 8
        %v1654 = vpop.permute.xlu0 %1653
        %1657 = vst.msk [vmem:[#allocation4] sm:$0xff] %vm1203, %v1652
        %1658 = vst.msk [vmem:[#allocation4 + $0x8] sm:$0xff] %vm1203, %v1654
        %v1659 = vld [vmem:[#allocation3 + $0x4] sm:$0xff]
        %v1660 = vld [vmem:[#allocation3 + $0xc] sm:$0xff]
        %1663 = vrot.lane.b32.xlu0 %v1659, 16
        %v1664 = vpop.permute.xlu0 %1663
        %1665 = vrot.lane.b32.xlu0 %v1660, 16
        %v1666 = vpop.permute.xlu0 %1665
        %1669 = vst.msk [vmem:[#allocation4] sm:$0xff] %vm1216, %v1664
        %1670 = vst.msk [vmem:[#allocation4 + $0x8] sm:$0xff] %vm1216, %v1666
        %v1671 = vld [vmem:[#allocation3 + $0x6] sm:$0xff]
        %v1672 = vld [vmem:[#allocation3 + $0xe] sm:$0xff]
        %1675 = vrot.lane.b32.xlu0 %v1671, 24
        %v1676 = vpop.permute.xlu0 %1675
        %1677 = vrot.lane.b32.xlu0 %v1672, 24
        %v1678 = vpop.permute.xlu0 %1677
        %1681 = vst.msk [vmem:[#allocation4] sm:$0xff] %vm1229, %v1676
        %1682 = vst.msk [vmem:[#allocation4 + $0x8] sm:$0xff] %vm1229, %v1678
        %v1683 = vld [vmem:[#allocation3 + $0x8] sm:$0xff]
        %v1684 = vld [vmem:[#allocation3 + $0x10] sm:$0xff]
        %1687 = vrot.lane.b32.xlu0 %v1683, 32
        %v1688 = vpop.permute.xlu0 %1687
        %1689 = vrot.lane.b32.xlu0 %v1684, 32
        %v1690 = vpop.permute.xlu0 %1689
        %1693 = vst.msk [vmem:[#allocation4] sm:$0xff] %vm1242, %v1688
        %1694 = vst.msk [vmem:[#allocation4 + $0x8] sm:$0xff] %vm1242, %v1690
        %v1695 = vld [vmem:[#allocation4] sm:$0xff]
        %v1696 = vld [vmem:[#allocation4 + $0x8] sm:$0xff]
        %v1697 = vpack.c.bf16 %v1696, %v1695
        %v1698 = vld [vmem:[%s41] sm:$0xf]
        %v1699 = vld [vmem:[%s41 + $0x4] sm:$0xf]
        %v1700 = vld [vmem:[%s41 + $0x8] sm:$0xf]
        %v1701 = vld [vmem:[%s41 + $0xc] sm:$0xf]
        %v1702 = vld [vmem:[%s41 + $0x10] sm:$0xf]
        %v1708 = vunpack.c.l.b16 %v1698
        %v1709 = vunpack.c.l.b16 %v1699
        %v1710 = vunpack.c.l.b16 %v1700
        %v1711 = vunpack.c.l.b16 %v1701
        %v1712 = vunpack.c.l.b16 %v1702
        %v1713 = vpack.c.b16 %v1709, %v1708
        %v1714 = vpack.c.b16 %v1711, %v1710
        %v1715 = vpack.c.b16 %v1712, %v1712
        %v1719 = vsel %vm1268, %v1697, 0
        %v1722 = vsel %vm1272, %v1715, 0
        %1724 = vmatprep.subr.bf16.mxu0 0
        %1725 = vmatpush1.bf16.msra.mxu0 %v1713
        %1726 = vmatprep.subr.bf16.mxu0 0
        %1727 = vmatpush1.bf16.msra.mxu0 %v1714
        %1728 = vmatprep.subr.bf16.mxu0 0
        %1729 = vmatpush1.bf16.msra.mxu0 %v1722
        %1730 = vmatprep.subr.bf16.mxu0 0
        %1731 = vmatpush1.bf16.msra.mxu0 0
        %1732 = vmatprep.subr.bf16.mxu0 0
        %1733 = vmatpush1.bf16.msra.mxu0 0
        %1734 = vmatprep.subr.bf16.mxu0 0
        %1735 = vmatpush1.bf16.msra.mxu0 0
        %1736 = vmatprep.subr.bf16.mxu0 0
        %1737 = vmatpush1.bf16.msra.mxu0 0
        %1738 = vmatprep.subr.bf16.mxu0 0
        %1739 = vmatpush1.bf16.msra.mxu0 0
        %1740 = vmatprep.subr.bf16.mxu0 0
        %1741 = vmatpush1.bf16.msra.mxu0 0
        %1742 = vmatprep.subr.bf16.mxu0 0
        %1743 = vmatpush1.bf16.msra.mxu0 0
        %1744 = vmatprep.subr.bf16.mxu0 0
        %1745 = vmatpush1.bf16.msra.mxu0 0
        %1746 = vmatprep.subr.bf16.mxu0 0
        %1747 = vmatpush1.bf16.msra.mxu0 0
        %1748 = vmatprep.subr.bf16.mxu0 0
        %1749 = vmatpush1.bf16.msra.mxu0 0
        %1750 = vmatprep.subr.bf16.mxu0 0
        %1751 = vmatpush1.bf16.msra.mxu0 0
        %1752 = vmatprep.subr.bf16.mxu0 0
        %1753 = vmatpush1.bf16.msra.mxu0 0
        %1754 = vmatprep.subr.bf16.mxu0 0
        %1755 = vmatpush1.bf16.msra.mxu0 0
        %1756 = vmatprep.mubr.bf16.mxu0 0
        %1757 = vmatmul.mubr.bf16.gmra.mrb[0].mxu0 %v1719
        %v1758 = vpop.f32.mrb[0].mxu0
        %v1759 = vadd.f32 0.0, %v1758
        %v1760 = vpop.f32.mrb[0].mxu0
        %v1761 = vpop.f32.mrb[0].mxu0
        %v1762 = vadd.f32 0.0, %v1761
        %v1763 = vpop.f32.mrb[0].mxu0
        %1764 = vdwg.mxu0
        %v1765 = vld [vmem:[%s43] sm:$0x1]
        %v1767 = vlaneseq
        %v1768 = vshrl.u32 %v1767, 7
        %v1769 = vsub.s32 0, %v1768
        %v1770 = vrot.slane %v1765, %v1769
        %v1772 = vmul.f32 %v1759, %v1770
        %v1773 = vmul.f32 %v1762, %v1770
        %v1774 = vld [vmem:[%s45] sm:$0x1]
        %v1776 = vlaneseq
        %v1777 = vshrl.u32 %v1776, 7
        %v1778 = vsub.s32 0, %v1777
        %v1779 = vrot.slane %v1774, %v1778
        %v1781 = vadd.f32 %v1772, %v1779
        %v1782 = vadd.f32 %v1773, %v1779
        %vm1783 = vcmp.gt.f32.partialorder %v1781, 0.0
        %vm1784 = vcmp.gt.f32.partialorder %v1782, 0.0
        %v1785 = vld [vmem:[%s47] sm:$0x1]
        %v1787 = vlaneseq
        %v1788 = vshrl.u32 %v1787, 7
        %v1789 = vsub.s32 0, %v1788
        %v1790 = vrot.slane %v1785, %v1789
        %v1792 = vmul.f32 %v1790, %v1781
        %v1793 = vmul.f32 %v1790, %v1782
        %v1794 = vsel %vm1783, %v1781, %v1792
        %v1795 = vsel %vm1784, %v1782, %v1793
        %v1796 = vpack.c.bf16 %v1434, %v1433
        %v1797 = vld [vmem:[%s49] sm:$0xf]
        %v1798 = vld [vmem:[%s49 + $0x4] sm:$0xf]
        %v1799 = vld [vmem:[%s49 + $0x8] sm:$0xf]
        %v1800 = vld [vmem:[%s51] sm:$0x1]
        %v1802 = vlaneseq
        %v1803 = vshrl.u32 %v1802, 7
        %v1804 = vsub.s32 0, %v1803
        %v1805 = vrot.slane %v1800, %v1804
        %v1810 = vunpack.c.l.b16 %v1797
        %v1811 = vunpack.c.l.b16 %v1798
        %v1812 = vunpack.c.l.b16 %v1799
        %v1813 = vpack.c.b16 %v1811, %v1810
        %v1814 = vpack.c.b16 %v1812, %v1812
        %v1817 = vsel %vm1002, %v1796, 0
        %v1820 = vsel %vm1272, %v1814, 0
        %1822 = vmatprep.subr.bf16.mxu0 0
        %1823 = vmatpush1.bf16.msra.mxu0 %v1813
        %1824 = vmatprep.subr.bf16.mxu0 0
        %1825 = vmatpush1.bf16.msra.mxu0 %v1820
        %1826 = vmatprep.subr.bf16.mxu0 0
        %1827 = vmatpush1.bf16.msra.mxu0 0
        %1828 = vmatprep.subr.bf16.mxu0 0
        %1829 = vmatpush1.bf16.msra.mxu0 0
        %1830 = vmatprep.subr.bf16.mxu0 0
        %1831 = vmatpush1.bf16.msra.mxu0 0
        %1832 = vmatprep.subr.bf16.mxu0 0
        %1833 = vmatpush1.bf16.msra.mxu0 0
        %1834 = vmatprep.subr.bf16.mxu0 0
        %1835 = vmatpush1.bf16.msra.mxu0 0
        %1836 = vmatprep.subr.bf16.mxu0 0
        %1837 = vmatpush1.bf16.msra.mxu0 0
        %1838 = vmatprep.subr.bf16.mxu0 0
        %1839 = vmatpush1.bf16.msra.mxu0 0
        %1840 = vmatprep.subr.bf16.mxu0 0
        %1841 = vmatpush1.bf16.msra.mxu0 0
        %1842 = vmatprep.subr.bf16.mxu0 0
        %1843 = vmatpush1.bf16.msra.mxu0 0
        %1844 = vmatprep.subr.bf16.mxu0 0
        %1845 = vmatpush1.bf16.msra.mxu0 0
        %1846 = vmatprep.subr.bf16.mxu0 0
        %1847 = vmatpush1.bf16.msra.mxu0 0
        %1848 = vmatprep.subr.bf16.mxu0 0
        %1849 = vmatpush1.bf16.msra.mxu0 0
        %1850 = vmatprep.subr.bf16.mxu0 0
        %1851 = vmatpush1.bf16.msra.mxu0 0
        %1852 = vmatprep.subr.bf16.mxu0 0
        %1853 = vmatpush1.bf16.msra.mxu0 0
        %1854 = vmatprep.mubr.bf16.mxu0 0
        %1855 = vmatmul.mubr.bf16.gmra.mrb[0].mxu0 %v1817
        %v1856 = vpop.f32.mrb[0].mxu0
        %v1857 = vadd.f32 %v1805, %v1856
        %v1858 = vpop.f32.mrb[0].mxu0
        %v1859 = vpop.f32.mrb[0].mxu0
        %v1860 = vadd.f32 %v1805, %v1859
        %v1861 = vpop.f32.mrb[0].mxu0
        %1862 = vdwg.mxu0
        %v1863 = vadd.f32 %v1794, %v1857
        %v1864 = vadd.f32 %v1795, %v1860
        %vm1865 = vcmp.gt.f32.partialorder %v1863, 0.0
        %vm1866 = vcmp.gt.f32.partialorder %v1864, 0.0
        %v1867 = vld [vmem:[%s53] sm:$0x1]
        %v1869 = vlaneseq
        %v1870 = vshrl.u32 %v1869, 7
        %v1871 = vsub.s32 0, %v1870
        %v1872 = vrot.slane %v1867, %v1871
        %v1874 = vmul.f32 %v1872, %v1863
        %v1875 = vmul.f32 %v1872, %v1864
        %v1876 = vsel %vm1865, %v1863, %v1874
        %v1877 = vsel %vm1866, %v1864, %v1875
        %1880 = vrot.lane.b32.xlu0 %v1876, 24
        %v1881 = vpop.permute.xlu0 %1880
        %1882 = vrot.lane.b32.xlu0 %v1877, 24
        %v1883 = vpop.permute.xlu0 %1882
        %1886 = vst.msk [vmem:[#allocation2] sm:$0xff] %vm1229, %v1881
        %1887 = vst.msk [vmem:[#allocation2 + $0x8] sm:$0xff] %vm1229, %v1883
        %v1888 = vld [vmem:[#allocation2] sm:$0xff]
        %v1889 = vld [vmem:[#allocation2 + $0x8] sm:$0xff]
        %v1890 = vpack.c.bf16 %v1889, %v1888
        %v1891 = vld [vmem:[%s55] sm:$0xf]
        %v1892 = vld [vmem:[%s55 + $0x4] sm:$0xf]
        %v1893 = vld [vmem:[%s55 + $0x8] sm:$0xf]
        %v1894 = vld [vmem:[%s55 + $0xc] sm:$0xf]
        %v1895 = vld [vmem:[%s57] sm:$0x1]
        %v1897 = vlaneseq
        %v1898 = vshrl.u32 %v1897, 7
        %v1899 = vsub.s32 0, %v1898
        %v1900 = vrot.slane %v1895, %v1899
        %v1906 = vunpack.c.l.b16 %v1891
        %v1907 = vunpack.c.l.b16 %v1892
        %v1908 = vunpack.c.l.b16 %v1893
        %v1909 = vunpack.c.l.b16 %v1894
        %v1910 = vpack.c.b16 %v1907, %v1906
        %v1911 = vpack.c.b16 %v1909, %v1908
        %v1915 = vsel %vm921, %v1890, 0
        %1917 = vmatprep.subr.bf16.mxu0 0
        %1918 = vmatpush1.bf16.msra.mxu0 %v1910
        %1919 = vmatprep.subr.bf16.mxu0 0
        %1920 = vmatpush1.bf16.msra.mxu0 %v1911
        %1921 = vmatprep.subr.bf16.mxu0 0
        %1922 = vmatpush1.bf16.msra.mxu0 0
        %1923 = vmatprep.subr.bf16.mxu0 0
        %1924 = vmatpush1.bf16.msra.mxu0 0
        %1925 = vmatprep.subr.bf16.mxu0 0
        %1926 = vmatpush1.bf16.msra.mxu0 0
        %1927 = vmatprep.subr.bf16.mxu0 0
        %1928 = vmatpush1.bf16.msra.mxu0 0
        %1929 = vmatprep.subr.bf16.mxu0 0
        %1930 = vmatpush1.bf16.msra.mxu0 0
        %1931 = vmatprep.subr.bf16.mxu0 0
        %1932 = vmatpush1.bf16.msra.mxu0 0
        %1933 = vmatprep.subr.bf16.mxu0 0
        %1934 = vmatpush1.bf16.msra.mxu0 0
        %1935 = vmatprep.subr.bf16.mxu0 0
        %1936 = vmatpush1.bf16.msra.mxu0 0
        %1937 = vmatprep.subr.bf16.mxu0 0
        %1938 = vmatpush1.bf16.msra.mxu0 0
        %1939 = vmatprep.subr.bf16.mxu0 0
        %1940 = vmatpush1.bf16.msra.mxu0 0
        %1941 = vmatprep.subr.bf16.mxu0 0
        %1942 = vmatpush1.bf16.msra.mxu0 0
        %1943 = vmatprep.subr.bf16.mxu0 0
        %1944 = vmatpush1.bf16.msra.mxu0 0
        %1945 = vmatprep.subr.bf16.mxu0 0
        %1946 = vmatpush1.bf16.msra.mxu0 0
        %1947 = vmatprep.subr.bf16.mxu0 0
        %1948 = vmatpush1.bf16.msra.mxu0 0
        %1949 = vmatprep.mubr.bf16.mxu0 0
        %1950 = vmatmul.mubr.bf16.gmra.mrb[0].mxu0 %v1915
        %v1951 = vpop.f32.mrb[0].mxu0
        %v1952 = vadd.f32 %v1900, %v1951
        %v1953 = vpop.f32.mrb[0].mxu0
        %v1954 = vpop.f32.mrb[0].mxu0
        %v1955 = vadd.f32 %v1900, %v1954
        %v1956 = vpop.f32.mrb[0].mxu0
        %1957 = vdwg.mxu0
        %1958 = vst.msk [vmem:[%s895] sm:$0xff] %vm921, %v1952
        %1959 = vst.msk [vmem:[%s895 + $0x8] sm:$0xff] %vm921, %v1955
        %s1960 = sand.u32 %s695, 1
        %s1961 = scalar_lea.sflag [#allocation6], %s1960
        %s1962 = sand.u32 %s695, 1
        %s1963 = smul.addr %s1962, 16
        %s1964 = scalar_lea.vmem [#allocation5], %s1963
        // Predicated region
        $region137: #{_lambda_.3} parent=135 // pred_check
          %p1965 = pneg %p705
        $region138: #{_lambda_.3} parent=135 // pred_check_branch
          %1967 = sbr.rel (%p1965) target = $region140
        $region139: #{_lambda_.3} parent=135 // pred_region
          %s1969 = ssub.s32 256, 256
          %1970 = vsyncadd %s1961, %s1969
          %s1971 = smul.addr %s73, 2
          %s1972 = smul.addr %s1971, 128
          %s1973 = scalar_lea.hbm %s59, %s1972
          %s1974 = sshll.u32 %s1964, 4
          %s1975 = int_to_ptr.vmem [resolvable:$true] %s1974
          %1980 = dma.vmem_to_hbm [thread:$0]  %s1975, 256, %s1973, %s1961, 128, 128, 8
        $region140: #{_lambda_.3} parent=135 // pred_fallthru
          _
      $region136: #{_lambda_.3} parent=5 // pred_fallthru
        _
      %p1981 = scmp.le.s32.totalorder 2, %s68
      // Predicated region
      $region141: #{_lambda_.3} parent=5 // pred_check
        %p1982 = pneg %p1981
      $region142: #{_lambda_.3} parent=5 // pred_check_branch
        %1984 = sbr.rel (%p1982) target = $region144
      $region143: #{_lambda_.3} parent=5 // pred_region
        %s1985 = ssub.s32 %s68, 2
        // Predicated region
        $region145: #{_lambda_.3} parent=143 // pred_check
          %p1986 = pneg %p711
        $region146: #{_lambda_.3} parent=143 // pred_check_branch
          %1988 = sbr.rel (%p1986) target = $region148
        $region147: #{_lambda_.3} parent=143 // pred_region
          %s1989 = sand.u32 %s696, 1
          %s1990 = scalar_lea.sflag [#allocation6], %s1989
          %s1991 = sand.u32 %s696, 1
          %s1992 = smul.addr %s1991, 16
          %s1993 = scalar_lea.vmem [#allocation5], %s1992
          %1994 = dma.done %s1990, 256
        $region148: #{_lambda_.3} parent=143 // pred_fallthru
          _
      $region144: #{_lambda_.3} parent=5 // pred_fallthru
        _
    $region6: #{_lambda_.3} parent=1 // loop_footer
      %s72 = sadd.s32 1, %s68
    $region7: #{_lambda_.3} parent=1 // loop_footer_branch
      %67 = sbr.rel target = $region3
    $region8: #{_lambda_.3} parent=1 // loop_exit
      _
    %1995 = vsyncpa [#allocation6], 1
    %s1996 = scalar_lea.sflag [#allocation6], 1
    %1997 = vsyncpa %s1996, 1

</llo_original>
